<compile_context>
chip_gen: v7x
topology: tpu7x:2x2x1
jax: 0.10.0
libtpu: 0.0.40
codegen_flags: <defaults>
</compile_context>

<pallas_src>
import functools
import math

import jax
import jax.numpy as jnp
from jax.experimental import pallas as pl
from jax.experimental.pallas import tpu as pltpu

LANE = 128
SUBLANE = 8


def _round_up(x, m):
    return ((x + m - 1) // m) * m


def _vmem_limit_bytes(footprint_bytes):
    # Generous headroom for double-buffering / internal scratch, capped safely
    # below every generation's physical VMEM (v7x: 64 MiB per TensorCore).
    return int(min(max(4 * footprint_bytes, 16 * 1024 * 1024), 48 * 1024 * 1024))


def _masked_log_softmax(h, nclass):
    """Numerically-stable log_softmax over the first `nclass` lanes only."""
    lane = jax.lax.broadcasted_iota(jnp.int32, h.shape, 1)
    valid = lane < nclass
    logits = jnp.where(valid, h, -jnp.inf)
    m = jnp.max(logits, axis=-1, keepdims=True)
    z = logits - m
    lse = jnp.log(jnp.sum(jnp.exp(z), axis=-1, keepdims=True))
    return jnp.where(valid, z - lse, jnp.float32(0.0))


# -----------------------------------------------------------------------------
# Fully-fused kernel: all layers in one pallas_call, everything VMEM-resident.
# -----------------------------------------------------------------------------
def _gnn_fused_kernel(x_ref, adj_ref, w_ref, b_ref, o_ref, *, agg_first, nclass):
    adj = adj_ref[...]
    h = x_ref[...]
    num_layers = len(agg_first)
    for l in range(num_layers):
        w = w_ref[l]                     # (Fmax, Fmax), zero-padded
        b = b_ref[l]                     # (1, Fmax), broadcast over nodes
        if agg_first[l]:
            # Fin < Fout: run the N x N aggregation at the narrow width first.
            agg = jnp.dot(adj, h, preferred_element_type=jnp.float32)
            h = jnp.dot(agg, w, preferred_element_type=jnp.float32) + b
        else:
            support = jnp.dot(h, w, preferred_element_type=jnp.float32)
            h = jnp.dot(adj, support, preferred_element_type=jnp.float32) + b
        if l < num_layers - 1:
            h = jnp.maximum(h, jnp.float32(0.0))
    o_ref[...] = _masked_log_softmax(h, nclass).astype(o_ref.dtype)


@functools.partial(jax.jit, static_argnames=("layer_dims", "fmax"))
def gnn_forward_fused(x, adj, w_stack, b_stack, *, layer_dims, fmax=LANE):
    """GNN.forward (eval mode) as a single fused Pallas call."""
    n, nfeat = x.shape
    n_pad = _round_up(n, SUBLANE)
    nclass = layer_dims[-1][1]
    num_layers = len(layer_dims)
    agg_first = tuple(fi < fo for fi, fo in layer_dims)

    xp = jnp.zeros((n_pad, fmax), jnp.float32).at[:n, :nfeat].set(x)
    ap = jnp.zeros((n_pad, n_pad), jnp.float32).at[:n, :n].set(adj)

    flops = num_layers * (2 * n_pad * n_pad * fmax + 2 * n_pad * fmax * fmax)
    bytes_accessed = 4 * (xp.size + ap.size + w_stack.size + b_stack.size
                          + n_pad * fmax)
    footprint = 4 * (xp.size + ap.size + w_stack.size + b_stack.size
                     + 3 * n_pad * fmax)

    kernel = functools.partial(_gnn_fused_kernel, agg_first=agg_first,
                               nclass=nclass)
    out = pl.pallas_call(
        kernel,
        out_shape=jax.ShapeDtypeStruct((n_pad, fmax), jnp.float32),
        in_specs=[
            pl.BlockSpec((n_pad, fmax), lambda: (0, 0)),
            pl.BlockSpec((n_pad, n_pad), lambda: (0, 0)),
            pl.BlockSpec((num_layers, fmax, fmax), lambda: (0, 0, 0)),
            pl.BlockSpec((num_layers, 1, fmax), lambda: (0, 0, 0)),
        ],
        out_specs=pl.BlockSpec((n_pad, fmax), lambda: (0, 0)),
        compiler_params=pltpu.CompilerParams(
            vmem_limit_bytes=_vmem_limit_bytes(footprint)),
        cost_estimate=pl.CostEstimate(flops=flops,
                                      transcendentals=n_pad * fmax,
                                      bytes_accessed=bytes_accessed),
    )(xp, ap, w_stack, b_stack)
    return out[:n, :nclass]


# -----------------------------------------------------------------------------
# Tiled per-layer kernel (for graphs where adj does not fit one VMEM block).
# Grid = (row tiles [parallel], K reduction [arbitrary]); f32 accumulator.
# -----------------------------------------------------------------------------
def _gcn_layer_tiled_kernel(x_ref, adj_ref, w_ref, b_ref, o_ref, acc_ref, *,
                            agg_first, apply_relu, apply_log_softmax, nclass):
    k = pl.program_id(1)
    nk = pl.num_programs(1)

    @pl.when(k == 0)
    def _():
        acc_ref[...] = jnp.zeros_like(acc_ref)

    if agg_first:
        # Accumulate adj @ x over K tiles at the narrow input width; apply W
        # once in the epilogue.
        acc_ref[...] += jnp.dot(adj_ref[...], x_ref[...],
                                preferred_element_type=jnp.float32)
    else:
        support = jnp.dot(x_ref[...], w_ref[...],
                          preferred_element_type=jnp.float32)
        acc_ref[...] += jnp.dot(adj_ref[...], support,
                                preferred_element_type=jnp.float32)

    @pl.when(k == nk - 1)
    def _():
        if agg_first:
            out = jnp.dot(acc_ref[...], w_ref[...],
                          preferred_element_type=jnp.float32) + b_ref[...]
        else:
            out = acc_ref[...] + b_ref[...]
        if apply_relu:
            out = jnp.maximum(out, jnp.float32(0.0))
        if apply_log_softmax:
            out = _masked_log_softmax(out, nclass)
        o_ref[...] = out.astype(o_ref.dtype)


def _gcn_layer_tiled(h, adj, w, b, *, fin, fout, relu, log_softmax, nclass,
                     tile_m, tile_k):
    n_pad, fmax = h.shape
    agg_first = fin < fout
    grid = (n_pad // tile_m, n_pad // tile_k)

    flops = 2 * n_pad * n_pad * fmax + 2 * n_pad * fmax * fmax
    bytes_accessed = 4 * (h.size + adj.size + w.size + b.size + n_pad * fmax)
    footprint = 4 * (2 * tile_k * fmax + 2 * tile_m * tile_k + 2 * fmax * fmax
                     + 2 * tile_m * fmax + tile_m * fmax + fmax)

    kernel = functools.partial(
        _gcn_layer_tiled_kernel, agg_first=agg_first, apply_relu=relu,
        apply_log_softmax=log_softmax, nclass=nclass)

    return pl.pallas_call(
        kernel,
        out_shape=jax.ShapeDtypeStruct((n_pad, fmax), jnp.float32),
        grid_spec=pltpu.PrefetchScalarGridSpec(
            num_scalar_prefetch=0,
            grid=grid,
            in_specs=[
                pl.BlockSpec((tile_k, fmax), lambda i, k: (k, 0)),
                pl.BlockSpec((tile_m, tile_k), lambda i, k: (i, k)),
                pl.BlockSpec((fmax, fmax), lambda i, k: (0, 0)),
                pl.BlockSpec((1, fmax), lambda i, k: (0, 0)),
            ],
            out_specs=pl.BlockSpec((tile_m, fmax), lambda i, k: (i, 0)),
            scratch_shapes=[pltpu.VMEM((tile_m, fmax), jnp.float32)],
        ),
        compiler_params=pltpu.CompilerParams(
            dimension_semantics=("parallel", "arbitrary"),
            vmem_limit_bytes=_vmem_limit_bytes(footprint)),
        cost_estimate=pl.CostEstimate(flops=flops,
                                      transcendentals=n_pad * fmax,
                                      bytes_accessed=bytes_accessed),
    )(h, adj, w, b)


@functools.partial(jax.jit, static_argnames=("layer_dims", "fmax", "tile_n"))
def gnn_forward_tiled(x, adj, w_stack, b_stack, *, layer_dims, fmax=LANE,
                      tile_n=128):
    """GNN.forward (eval mode) with tiled, K-accumulating per-layer kernels."""
    n, nfeat = x.shape
    n_pad = _round_up(n, tile_n)
    nclass = layer_dims[-1][1]
    num_layers = len(layer_dims)

    h = jnp.zeros((n_pad, fmax), jnp.float32).at[:n, :nfeat].set(x)
    a = jnp.zeros((n_pad, n_pad), jnp.float32).at[:n, :n].set(adj)

    for l, (fin, fout) in enumerate(layer_dims):
        last = (l == num_layers - 1)
        h = _gcn_layer_tiled(h, a, w_stack[l], b_stack[l],
                             fin=fin, fout=fout, relu=not last,
                             log_softmax=last, nclass=nclass,
                             tile_m=tile_n, tile_k=tile_n)
    return h[:n, :nclass]


# -----------------------------------------------------------------------------
# Parameters (matching PyTorch reset_parameters) and packing to padded stacks.
# -----------------------------------------------------------------------------
def init_gcn_params(key, fin, fout):
    """uniform(-stdv, stdv), stdv = 1/sqrt(fout)."""
    kw, kb = jax.random.split(key)
    stdv = 1.0 / math.sqrt(fout)
    w = jax.random.uniform(kw, (fin, fout), jnp.float32, -stdv, stdv)
    b = jax.random.uniform(kb, (fout,), jnp.float32, -stdv, stdv)
    return w, b


def init_gnn_params(key, nfeat, nhid, nclass):
    names_dims = [("gc1", nfeat, nhid)] + \
                 [(n, nhid, nhid) for n in ("gc3", "gc4", "gc5", "gc6", "gc7", "gc8")] + \
                 [("gc2", nhid, nclass)]
    keys = jax.random.split(key, len(names_dims))
    return {name: init_gcn_params(k, fi, fo)
            for k, (name, fi, fo) in zip(keys, names_dims)}


def pack_gnn_params(params, layer_names, layer_dims, fmax=LANE):
    """Zero-pad every (W, b) to (fmax, fmax)/(1, fmax) and stack over layers."""
    ws, bs = [], []
    for name, (fin, fout) in zip(layer_names, layer_dims):
        w, b = params[name]
        ws.append(jnp.zeros((fmax, fmax), jnp.float32).at[:fin, :fout].set(w))
        bs.append(jnp.zeros((1, fmax), jnp.float32).at[0, :fout].set(b))
    return jnp.stack(ws), jnp.stack(bs)


def gnn_forward_reference(x, adj, params, layer_names):
    """Pure-JAX reference (eval-mode forward of the PyTorch module)."""
    hp = jax.lax.Precision.HIGHEST
    h = x
    for i, name in enumerate(layer_names):
        w, b = params[name]
        h = jnp.dot(adj, jnp.dot(h, w, precision=hp), precision=hp) + b
        if i < len(layer_names) - 1:
            h = jnp.maximum(h, 0.0)
    return jax.nn.log_softmax(h, axis=-1)


if __name__ == "__main__":
    key = jax.random.PRNGKey(0)
    k_x, k_adj, k_params = jax.random.split(key, 3)

    # Small Cora-like graph: 200 nodes, 16 input features, 32 hidden, 7 classes.
    N, NFEAT, NHID, NCLASS = 200, 16, 32, 7
    FMAX = 128
    DROPOUT = 0.5  # unused at eval time

    x = jax.random.normal(k_x, (N, NFEAT), jnp.float32)

    # Symmetric row-normalized adjacency with self-loops (typical GCN input).
    a = (jax.random.uniform(k_adj, (N, N)) < 0.05).astype(jnp.float32)
    a = jnp.maximum(a, a.T)
    a = a + jnp.eye(N, dtype=jnp.float32)
    adj = a / jnp.sum(a, axis=-1, keepdims=True)

    layer_names = ("gc1", "gc3", "gc4", "gc5", "gc6", "gc7", "gc8", "gc2")
    layer_dims = ((NFEAT, NHID),) + ((NHID, NHID),) * 6 + ((NHID, NCLASS),)

    params = init_gnn_params(k_params, NFEAT, NHID, NCLASS)
    w_stack, b_stack = pack_gnn_params(params, layer_names, layer_dims, FMAX)

    # Fused single-kernel path (primary).
    out_fused = gnn_forward_fused(x, adj, w_stack, b_stack,
                                  layer_dims=layer_dims, fmax=FMAX)
    out_fused = jax.block_until_ready(out_fused)

    # Tiled path (large-graph structure), exercised here with a 2x2 grid.
    out_tiled = gnn_forward_tiled(x, adj, w_stack, b_stack,
                                  layer_dims=layer_dims, fmax=FMAX, tile_n=128)
    out_tiled = jax.block_until_ready(out_tiled)

    ref = gnn_forward_reference(x, adj, params, layer_names)

    assert out_fused.shape == (N, NCLASS)
    assert out_tiled.shape == (N, NCLASS)
    # log_softmax rows should sum (in prob space) to ~1.
    assert jnp.allclose(jnp.sum(jnp.exp(out_fused), axis=-1), 1.0, atol=1e-4)
    assert jnp.allclose(out_fused, out_tiled, atol=1e-3, rtol=1e-3)
    assert jnp.allclose(out_fused, ref, atol=5e-3, rtol=5e-3)

    print("KERNEL_OK")
</pallas_src>

<mosaic_0001>
module attributes {stable_mosaic.version = 11 : i64} {
  func.func @_gnn_fused_kernel(%arg0: memref<200x128xf32, #tpu.memory_space<vmem>>, %arg1: memref<200x200xf32, #tpu.memory_space<vmem>>, %arg2: memref<8x128x128xf32, #tpu.memory_space<vmem>>, %arg3: memref<8x1x128xf32, #tpu.memory_space<vmem>>, %arg4: memref<200x128xf32, #tpu.memory_space<vmem>>) attributes {dimension_semantics = [], scalar_prefetch = 0 : i64, scratch_operands = 0 : i64, tpu.core_type = #tpu.core_type<tc>} {
    %c0 = arith.constant 0 : index
    %c0_0 = arith.constant 0 : index
    %0 = vector.load %arg1[%c0, %c0_0] : memref<200x200xf32, #tpu.memory_space<vmem>>, vector<200x200xf32>
    %c0_1 = arith.constant 0 : index
    %c0_2 = arith.constant 0 : index
    %1 = vector.load %arg0[%c0_1, %c0_2] : memref<200x128xf32, #tpu.memory_space<vmem>>, vector<200x128xf32>
    %c0_3 = arith.constant 0 : index
    %c0_4 = arith.constant 0 : index
    %c0_5 = arith.constant 0 : index
    %2 = vector.load %arg2[%c0_3, %c0_4, %c0_5] : memref<8x128x128xf32, #tpu.memory_space<vmem>>, vector<1x128x128xf32>
    %3 = vector.shape_cast %2 : vector<1x128x128xf32> to vector<128x128xf32>
    %c0_6 = arith.constant 0 : index
    %c0_7 = arith.constant 0 : index
    %c0_8 = arith.constant 0 : index
    %4 = vector.load %arg3[%c0_6, %c0_7, %c0_8] : memref<8x1x128xf32, #tpu.memory_space<vmem>>, vector<1x1x128xf32>
    %5 = vector.shape_cast %4 : vector<1x1x128xf32> to vector<1x128xf32>
    %cst = arith.constant dense<0.000000e+00> : vector<200x128xf32>
    %6 = tpu.matmul %0, %1, %cst {dimension_numbers = #tpu.dot_dimension_numbers<[1], [0], [0], [1], [0, 0, 1, 1], [], []>} : vector<200x200xf32>, vector<200x128xf32>, vector<200x128xf32> -> vector<200x128xf32>
    %cst_9 = arith.constant dense<0.000000e+00> : vector<200x128xf32>
    %7 = tpu.matmul %6, %3, %cst_9 {dimension_numbers = #tpu.dot_dimension_numbers<[1], [0], [0], [1], [0, 0, 1, 1], [], []>} : vector<200x128xf32>, vector<128x128xf32>, vector<200x128xf32> -> vector<200x128xf32>
    %8 = vector.broadcast %5 : vector<1x128xf32> to vector<200x128xf32>
    %9 = arith.addf %7, %8 : vector<200x128xf32>
    %cst_10 = arith.constant 0.000000e+00 : f32
    %10 = vector.broadcast %cst_10 : f32 to vector<200x128xf32>
    %11 = arith.maximumf %9, %10 : vector<200x128xf32>
    %c1 = arith.constant 1 : index
    %c0_11 = arith.constant 0 : index
    %c0_12 = arith.constant 0 : index
    %12 = vector.load %arg2[%c1, %c0_11, %c0_12] : memref<8x128x128xf32, #tpu.memory_space<vmem>>, vector<1x128x128xf32>
    %13 = vector.shape_cast %12 : vector<1x128x128xf32> to vector<128x128xf32>
    %c1_13 = arith.constant 1 : index
    %c0_14 = arith.constant 0 : index
    %c0_15 = arith.constant 0 : index
    %14 = vector.load %arg3[%c1_13, %c0_14, %c0_15] : memref<8x1x128xf32, #tpu.memory_space<vmem>>, vector<1x1x128xf32>
    %15 = vector.shape_cast %14 : vector<1x1x128xf32> to vector<1x128xf32>
    %cst_16 = arith.constant dense<0.000000e+00> : vector<200x128xf32>
    %16 = tpu.matmul %11, %13, %cst_16 {dimension_numbers = #tpu.dot_dimension_numbers<[1], [0], [0], [1], [0, 0, 1, 1], [], []>} : vector<200x128xf32>, vector<128x128xf32>, vector<200x128xf32> -> vector<200x128xf32>
    %cst_17 = arith.constant dense<0.000000e+00> : vector<200x128xf32>
    %17 = tpu.matmul %0, %16, %cst_17 {dimension_numbers = #tpu.dot_dimension_numbers<[1], [0], [0], [1], [0, 0, 1, 1], [], []>} : vector<200x200xf32>, vector<200x128xf32>, vector<200x128xf32> -> vector<200x128xf32>
    %18 = vector.broadcast %15 : vector<1x128xf32> to vector<200x128xf32>
    %19 = arith.addf %17, %18 : vector<200x128xf32>
    %cst_18 = arith.constant 0.000000e+00 : f32
    %20 = vector.broadcast %cst_18 : f32 to vector<200x128xf32>
    %21 = arith.maximumf %19, %20 : vector<200x128xf32>
    %c2 = arith.constant 2 : index
    %c0_19 = arith.constant 0 : index
    %c0_20 = arith.constant 0 : index
    %22 = vector.load %arg2[%c2, %c0_19, %c0_20] : memref<8x128x128xf32, #tpu.memory_space<vmem>>, vector<1x128x128xf32>
    %23 = vector.shape_cast %22 : vector<1x128x128xf32> to vector<128x128xf32>
    %c2_21 = arith.constant 2 : index
    %c0_22 = arith.constant 0 : index
    %c0_23 = arith.constant 0 : index
    %24 = vector.load %arg3[%c2_21, %c0_22, %c0_23] : memref<8x1x128xf32, #tpu.memory_space<vmem>>, vector<1x1x128xf32>
    %25 = vector.shape_cast %24 : vector<1x1x128xf32> to vector<1x128xf32>
    %cst_24 = arith.constant dense<0.000000e+00> : vector<200x128xf32>
    %26 = tpu.matmul %21, %23, %cst_24 {dimension_numbers = #tpu.dot_dimension_numbers<[1], [0], [0], [1], [0, 0, 1, 1], [], []>} : vector<200x128xf32>, vector<128x128xf32>, vector<200x128xf32> -> vector<200x128xf32>
    %cst_25 = arith.constant dense<0.000000e+00> : vector<200x128xf32>
    %27 = tpu.matmul %0, %26, %cst_25 {dimension_numbers = #tpu.dot_dimension_numbers<[1], [0], [0], [1], [0, 0, 1, 1], [], []>} : vector<200x200xf32>, vector<200x128xf32>, vector<200x128xf32> -> vector<200x128xf32>
    %28 = vector.broadcast %25 : vector<1x128xf32> to vector<200x128xf32>
    %29 = arith.addf %27, %28 : vector<200x128xf32>
    %cst_26 = arith.constant 0.000000e+00 : f32
    %30 = vector.broadcast %cst_26 : f32 to vector<200x128xf32>
    %31 = arith.maximumf %29, %30 : vector<200x128xf32>
    %c3 = arith.constant 3 : index
    %c0_27 = arith.constant 0 : index
    %c0_28 = arith.constant 0 : index
    %32 = vector.load %arg2[%c3, %c0_27, %c0_28] : memref<8x128x128xf32, #tpu.memory_space<vmem>>, vector<1x128x128xf32>
    %33 = vector.shape_cast %32 : vector<1x128x128xf32> to vector<128x128xf32>
    %c3_29 = arith.constant 3 : index
    %c0_30 = arith.constant 0 : index
    %c0_31 = arith.constant 0 : index
    %34 = vector.load %arg3[%c3_29, %c0_30, %c0_31] : memref<8x1x128xf32, #tpu.memory_space<vmem>>, vector<1x1x128xf32>
    %35 = vector.shape_cast %34 : vector<1x1x128xf32> to vector<1x128xf32>
    %cst_32 = arith.constant dense<0.000000e+00> : vector<200x128xf32>
    %36 = tpu.matmul %31, %33, %cst_32 {dimension_numbers = #tpu.dot_dimension_numbers<[1], [0], [0], [1], [0, 0, 1, 1], [], []>} : vector<200x128xf32>, vector<128x128xf32>, vector<200x128xf32> -> vector<200x128xf32>
    %cst_33 = arith.constant dense<0.000000e+00> : vector<200x128xf32>
    %37 = tpu.matmul %0, %36, %cst_33 {dimension_numbers = #tpu.dot_dimension_numbers<[1], [0], [0], [1], [0, 0, 1, 1], [], []>} : vector<200x200xf32>, vector<200x128xf32>, vector<200x128xf32> -> vector<200x128xf32>
    %38 = vector.broadcast %35 : vector<1x128xf32> to vector<200x128xf32>
    %39 = arith.addf %37, %38 : vector<200x128xf32>
    %cst_34 = arith.constant 0.000000e+00 : f32
    %40 = vector.broadcast %cst_34 : f32 to vector<200x128xf32>
    %41 = arith.maximumf %39, %40 : vector<200x128xf32>
    %c4 = arith.constant 4 : index
    %c0_35 = arith.constant 0 : index
    %c0_36 = arith.constant 0 : index
    %42 = vector.load %arg2[%c4, %c0_35, %c0_36] : memref<8x128x128xf32, #tpu.memory_space<vmem>>, vector<1x128x128xf32>
    %43 = vector.shape_cast %42 : vector<1x128x128xf32> to vector<128x128xf32>
    %c4_37 = arith.constant 4 : index
    %c0_38 = arith.constant 0 : index
    %c0_39 = arith.constant 0 : index
    %44 = vector.load %arg3[%c4_37, %c0_38, %c0_39] : memref<8x1x128xf32, #tpu.memory_space<vmem>>, vector<1x1x128xf32>
    %45 = vector.shape_cast %44 : vector<1x1x128xf32> to vector<1x128xf32>
    %cst_40 = arith.constant dense<0.000000e+00> : vector<200x128xf32>
    %46 = tpu.matmul %41, %43, %cst_40 {dimension_numbers = #tpu.dot_dimension_numbers<[1], [0], [0], [1], [0, 0, 1, 1], [], []>} : vector<200x128xf32>, vector<128x128xf32>, vector<200x128xf32> -> vector<200x128xf32>
    %cst_41 = arith.constant dense<0.000000e+00> : vector<200x128xf32>
    %47 = tpu.matmul %0, %46, %cst_41 {dimension_numbers = #tpu.dot_dimension_numbers<[1], [0], [0], [1], [0, 0, 1, 1], [], []>} : vector<200x200xf32>, vector<200x128xf32>, vector<200x128xf32> -> vector<200x128xf32>
    %48 = vector.broadcast %45 : vector<1x128xf32> to vector<200x128xf32>
    %49 = arith.addf %47, %48 : vector<200x128xf32>
    %cst_42 = arith.constant 0.000000e+00 : f32
    %50 = vector.broadcast %cst_42 : f32 to vector<200x128xf32>
    %51 = arith.maximumf %49, %50 : vector<200x128xf32>
    %c5 = arith.constant 5 : index
    %c0_43 = arith.constant 0 : index
    %c0_44 = arith.constant 0 : index
    %52 = vector.load %arg2[%c5, %c0_43, %c0_44] : memref<8x128x128xf32, #tpu.memory_space<vmem>>, vector<1x128x128xf32>
    %53 = vector.shape_cast %52 : vector<1x128x128xf32> to vector<128x128xf32>
    %c5_45 = arith.constant 5 : index
    %c0_46 = arith.constant 0 : index
    %c0_47 = arith.constant 0 : index
    %54 = vector.load %arg3[%c5_45, %c0_46, %c0_47] : memref<8x1x128xf32, #tpu.memory_space<vmem>>, vector<1x1x128xf32>
    %55 = vector.shape_cast %54 : vector<1x1x128xf32> to vector<1x128xf32>
    %cst_48 = arith.constant dense<0.000000e+00> : vector<200x128xf32>
    %56 = tpu.matmul %51, %53, %cst_48 {dimension_numbers = #tpu.dot_dimension_numbers<[1], [0], [0], [1], [0, 0, 1, 1], [], []>} : vector<200x128xf32>, vector<128x128xf32>, vector<200x128xf32> -> vector<200x128xf32>
    %cst_49 = arith.constant dense<0.000000e+00> : vector<200x128xf32>
    %57 = tpu.matmul %0, %56, %cst_49 {dimension_numbers = #tpu.dot_dimension_numbers<[1], [0], [0], [1], [0, 0, 1, 1], [], []>} : vector<200x200xf32>, vector<200x128xf32>, vector<200x128xf32> -> vector<200x128xf32>
    %58 = vector.broadcast %55 : vector<1x128xf32> to vector<200x128xf32>
    %59 = arith.addf %57, %58 : vector<200x128xf32>
    %cst_50 = arith.constant 0.000000e+00 : f32
    %60 = vector.broadcast %cst_50 : f32 to vector<200x128xf32>
    %61 = arith.maximumf %59, %60 : vector<200x128xf32>
    %c6 = arith.constant 6 : index
    %c0_51 = arith.constant 0 : index
    %c0_52 = arith.constant 0 : index
    %62 = vector.load %arg2[%c6, %c0_51, %c0_52] : memref<8x128x128xf32, #tpu.memory_space<vmem>>, vector<1x128x128xf32>
    %63 = vector.shape_cast %62 : vector<1x128x128xf32> to vector<128x128xf32>
    %c6_53 = arith.constant 6 : index
    %c0_54 = arith.constant 0 : index
    %c0_55 = arith.constant 0 : index
    %64 = vector.load %arg3[%c6_53, %c0_54, %c0_55] : memref<8x1x128xf32, #tpu.memory_space<vmem>>, vector<1x1x128xf32>
    %65 = vector.shape_cast %64 : vector<1x1x128xf32> to vector<1x128xf32>
    %cst_56 = arith.constant dense<0.000000e+00> : vector<200x128xf32>
    %66 = tpu.matmul %61, %63, %cst_56 {dimension_numbers = #tpu.dot_dimension_numbers<[1], [0], [0], [1], [0, 0, 1, 1], [], []>} : vector<200x128xf32>, vector<128x128xf32>, vector<200x128xf32> -> vector<200x128xf32>
    %cst_57 = arith.constant dense<0.000000e+00> : vector<200x128xf32>
    %67 = tpu.matmul %0, %66, %cst_57 {dimension_numbers = #tpu.dot_dimension_numbers<[1], [0], [0], [1], [0, 0, 1, 1], [], []>} : vector<200x200xf32>, vector<200x128xf32>, vector<200x128xf32> -> vector<200x128xf32>
    %68 = vector.broadcast %65 : vector<1x128xf32> to vector<200x128xf32>
    %69 = arith.addf %67, %68 : vector<200x128xf32>
    %cst_58 = arith.constant 0.000000e+00 : f32
    %70 = vector.broadcast %cst_58 : f32 to vector<200x128xf32>
    %71 = arith.maximumf %69, %70 : vector<200x128xf32>
    %c7 = arith.constant 7 : index
    %c0_59 = arith.constant 0 : index
    %c0_60 = arith.constant 0 : index
    %72 = vector.load %arg2[%c7, %c0_59, %c0_60] : memref<8x128x128xf32, #tpu.memory_space<vmem>>, vector<1x128x128xf32>
    %73 = vector.shape_cast %72 : vector<1x128x128xf32> to vector<128x128xf32>
    %c7_61 = arith.constant 7 : index
    %c0_62 = arith.constant 0 : index
    %c0_63 = arith.constant 0 : index
    %74 = vector.load %arg3[%c7_61, %c0_62, %c0_63] : memref<8x1x128xf32, #tpu.memory_space<vmem>>, vector<1x1x128xf32>
    %75 = vector.shape_cast %74 : vector<1x1x128xf32> to vector<1x128xf32>
    %cst_64 = arith.constant dense<0.000000e+00> : vector<200x128xf32>
    %76 = tpu.matmul %71, %73, %cst_64 {dimension_numbers = #tpu.dot_dimension_numbers<[1], [0], [0], [1], [0, 0, 1, 1], [], []>} : vector<200x128xf32>, vector<128x128xf32>, vector<200x128xf32> -> vector<200x128xf32>
    %cst_65 = arith.constant dense<0.000000e+00> : vector<200x128xf32>
    %77 = tpu.matmul %0, %76, %cst_65 {dimension_numbers = #tpu.dot_dimension_numbers<[1], [0], [0], [1], [0, 0, 1, 1], [], []>} : vector<200x200xf32>, vector<200x128xf32>, vector<200x128xf32> -> vector<200x128xf32>
    %78 = vector.broadcast %75 : vector<1x128xf32> to vector<200x128xf32>
    %79 = arith.addf %77, %78 : vector<200x128xf32>
    %80 = tpu.iota {dimensions = array<i32: 1>} : vector<200x128xi32>
    %c7_i32 = arith.constant 7 : i32
    %81 = vector.broadcast %c7_i32 : i32 to vector<200x128xi32>
    %82 = arith.cmpi slt, %80, %81 : vector<200x128xi32>
    %cst_66 = arith.constant 0xFF800000 : f32
    %83 = vector.broadcast %cst_66 : f32 to vector<200x128xf32>
    %84 = arith.select %82, %79, %83 : vector<200x128xi1>, vector<200x128xf32>
    %cst_67 = arith.constant dense<0xFF800000> : vector<200xf32>
    %85 = vector.multi_reduction <maximumf>, %84, %cst_67 [1] : vector<200x128xf32> to vector<200xf32>
    %86 = vector.shape_cast %85 : vector<200xf32> to vector<200x1xf32>
    %87 = vector.broadcast %86 : vector<200x1xf32> to vector<200x128xf32>
    %88 = arith.subf %84, %87 : vector<200x128xf32>
    %89 = math.exp %88 : vector<200x128xf32>
    %cst_68 = arith.constant dense<0.000000e+00> : vector<200xf32>
    %90 = vector.multi_reduction <add>, %89, %cst_68 [1] : vector<200x128xf32> to vector<200xf32>
    %91 = vector.shape_cast %90 : vector<200xf32> to vector<200x1xf32>
    %92 = math.log %91 : vector<200x1xf32>
    %93 = vector.broadcast %92 : vector<200x1xf32> to vector<200x128xf32>
    %94 = arith.subf %88, %93 : vector<200x128xf32>
    %cst_69 = arith.constant 0.000000e+00 : f32
    %95 = vector.broadcast %cst_69 : f32 to vector<200x128xf32>
    %96 = arith.select %82, %94, %95 : vector<200x128xi1>, vector<200x128xf32>
    %c0_70 = arith.constant 0 : index
    %c0_71 = arith.constant 0 : index
    %97 = vector.load %arg4[%c0_70, %c0_71] : memref<200x128xf32, #tpu.memory_space<vmem>>, vector<200x128xf32>
    tpu.vector_store %arg4[%c0_70, %c0_71], %96 {strides = array<i32>} : memref<200x128xf32, #tpu.memory_space<vmem>>, vector<200x128xf32>,
    return
  }
}

</mosaic_0001>

<llo_original>
// kernel: gnn_forward_fused.1
$region0: #{gnn_forward_fused.1}
  #allocation0 [shape = 'u32[]', space=smem, size = 0x4, offset = 0x4, fixed_abs, tag = 'smem constant byte address 0x4 - core index']
  #allocation1 [shape = 'u32[144,128]{1,0:T(1,128)}', space=vmem, size = 0x12000, scoped, tag = 'internal scratch']
  %s0 = inlined_call_operand.vmem [shape: f32[200,128], index: 0, kind: input, shape index: {}]
  %s1 = inlined_call_operand.hbm [shape: f32[200,200], index: 1, kind: input, shape index: {}]
  %s2 = inlined_call_operand.vmem [shape: f32[8,128,128], index: 2, kind: input, shape index: {}]
  %s3 = inlined_call_operand.vmem [shape: f32[8,1,128], index: 3, kind: input, shape index: {}]
  %s4 = inlined_call_operand.vmem [shape: f32[200,128], index: 4, kind: output, shape index: {}]
  %s5 = sld [smem:[#allocation0]]
  $region30: #{gnn_forward_fused.1} parent=0
    _
  %s7 = ssub.s32 1, %s5
  %s8 = scalar_select 0, %s7, %s5
  $region1: #{gnn_forward_fused.1} parent=0
    #allocation2 [shape = 'u8[204800]{0}', space=vmem, size = 0x32000, scoped, tag = 'input window, operand 1, single buffered']
    #allocation3 [shape = 's32[1]{0}', space=sflag, size = 0x4, scoped, tag = 'scoped memory for gnn_forward_fused.1']
    %9 = vsyncpa [#allocation3], 0
    // Predicated region
    $region2: #{gnn_forward_fused.1} parent=1 // pred_check
      _
    $region3: #{gnn_forward_fused.1} parent=1 // pred_check_branch
      %11 = sbr.rel (0) target = $region5
    $region4: #{gnn_forward_fused.1} parent=1 // pred_region
      _
    $region5: #{gnn_forward_fused.1} parent=1 // pred_fallthru
      _
    // Predicated region
    $region6: #{gnn_forward_fused.1} parent=1 // pred_check
      _
    $region7: #{gnn_forward_fused.1} parent=1 // pred_check_branch
      %13 = sbr.rel (0) target = $region9
    $region8: #{gnn_forward_fused.1} parent=1 // pred_region
      %s15 = ssub.s32 6400, 6400
      %16 = vsyncadd [#allocation3], %s15
      %s17 = sshll.u32 [#allocation2], 4
      %s18 = int_to_ptr.vmem [resolvable:$true] %s17
      %23 = dma.hbm_to_vmem [thread:$0]  %s1, 6400, %s18, [#allocation3], 256, 256, 16
    $region9: #{gnn_forward_fused.1} parent=1 // pred_fallthru
      _
    // Predicated region
    $region10: #{gnn_forward_fused.1} parent=1 // pred_check
      _
    $region11: #{gnn_forward_fused.1} parent=1 // pred_check_branch
      %25 = sbr.rel (0) target = $region13
    $region12: #{gnn_forward_fused.1} parent=1 // pred_region
      _
    $region13: #{gnn_forward_fused.1} parent=1 // pred_fallthru
      _
    // Predicated region
    $region14: #{gnn_forward_fused.1} parent=1 // pred_check
      _
    $region15: #{gnn_forward_fused.1} parent=1 // pred_check_branch
      %27 = sbr.rel (0) target = $region17
    $region16: #{gnn_forward_fused.1} parent=1 // pred_region
      _
    $region17: #{gnn_forward_fused.1} parent=1 // pred_fallthru
      _
    // Predicated region
    $region18: #{gnn_forward_fused.1} parent=1 // pred_check
      _
    $region19: #{gnn_forward_fused.1} parent=1 // pred_check_branch
      %29 = sbr.rel (0) target = $region21
    $region20: #{gnn_forward_fused.1} parent=1 // pred_region
      %30 = dma.done [#allocation3], 6400
    $region21: #{gnn_forward_fused.1} parent=1 // pred_fallthru
      _
    %v31 = vld [vmem:[#allocation2] sm:$0xff]
    %v32 = vld [vmem:[#allocation2 + $0x8] sm:$0xff]
    %v33 = vld [vmem:[#allocation2 + $0x10] sm:$0xff]
    %v34 = vld [vmem:[#allocation2 + $0x18] sm:$0xff]
    %v35 = vld [vmem:[#allocation2 + $0x20] sm:$0xff]
    %v36 = vld [vmem:[#allocation2 + $0x28] sm:$0xff]
    %v37 = vld [vmem:[#allocation2 + $0x30] sm:$0xff]
    %v38 = vld [vmem:[#allocation2 + $0x38] sm:$0xff]
    %v39 = vld [vmem:[#allocation2 + $0x40] sm:$0xff]
    %v40 = vld [vmem:[#allocation2 + $0x48] sm:$0xff]
    %v41 = vld [vmem:[#allocation2 + $0x50] sm:$0xff]
    %v42 = vld [vmem:[#allocation2 + $0x58] sm:$0xff]
    %v43 = vld [vmem:[#allocation2 + $0x60] sm:$0xff]
    %v44 = vld [vmem:[#allocation2 + $0x68] sm:$0xff]
    %v45 = vld [vmem:[#allocation2 + $0x70] sm:$0xff]
    %v46 = vld [vmem:[#allocation2 + $0x78] sm:$0xff]
    %v47 = vld [vmem:[#allocation2 + $0x80] sm:$0xff]
    %v48 = vld [vmem:[#allocation2 + $0x88] sm:$0xff]
    %v49 = vld [vmem:[#allocation2 + $0x90] sm:$0xff]
    %v50 = vld [vmem:[#allocation2 + $0x98] sm:$0xff]
    %v51 = vld [vmem:[#allocation2 + $0xa0] sm:$0xff]
    %v52 = vld [vmem:[#allocation2 + $0xa8] sm:$0xff]
    %v53 = vld [vmem:[#allocation2 + $0xb0] sm:$0xff]
    %v54 = vld [vmem:[#allocation2 + $0xb8] sm:$0xff]
    %v55 = vld [vmem:[#allocation2 + $0xc0] sm:$0xff]
    %v56 = vld [vmem:[#allocation2 + $0xc8] sm:$0xff]
    %v57 = vld [vmem:[#allocation2 + $0xd0] sm:$0xff]
    %v58 = vld [vmem:[#allocation2 + $0xd8] sm:$0xff]
    %v59 = vld [vmem:[#allocation2 + $0xe0] sm:$0xff]
    %v60 = vld [vmem:[#allocation2 + $0xe8] sm:$0xff]
    %v61 = vld [vmem:[#allocation2 + $0xf0] sm:$0xff]
    %v62 = vld [vmem:[#allocation2 + $0xf8] sm:$0xff]
    %v63 = vld [vmem:[#allocation2 + $0x100] sm:$0xff]
    %v64 = vld [vmem:[#allocation2 + $0x108] sm:$0xff]
    %v65 = vld [vmem:[#allocation2 + $0x110] sm:$0xff]
    %v66 = vld [vmem:[#allocation2 + $0x118] sm:$0xff]
    %v67 = vld [vmem:[#allocation2 + $0x120] sm:$0xff]
    %v68 = vld [vmem:[#allocation2 + $0x128] sm:$0xff]
    %v69 = vld [vmem:[#allocation2 + $0x130] sm:$0xff]
    %v70 = vld [vmem:[#allocation2 + $0x138] sm:$0xff]
    %v71 = vld [vmem:[#allocation2 + $0x140] sm:$0xff]
    %v72 = vld [vmem:[#allocation2 + $0x148] sm:$0xff]
    %v73 = vld [vmem:[#allocation2 + $0x150] sm:$0xff]
    %v74 = vld [vmem:[#allocation2 + $0x158] sm:$0xff]
    %v75 = vld [vmem:[#allocation2 + $0x160] sm:$0xff]
    %v76 = vld [vmem:[#allocation2 + $0x168] sm:$0xff]
    %v77 = vld [vmem:[#allocation2 + $0x170] sm:$0xff]
    %v78 = vld [vmem:[#allocation2 + $0x178] sm:$0xff]
    %v79 = vld [vmem:[#allocation2 + $0x180] sm:$0xff]
    %v80 = vld [vmem:[#allocation2 + $0x188] sm:$0xff]
    %v81 = vld [vmem:[%s0] sm:$0xff]
    %v82 = vld [vmem:[%s0 + $0x8] sm:$0xff]
    %v83 = vld [vmem:[%s0 + $0x10] sm:$0xff]
    %v84 = vld [vmem:[%s0 + $0x18] sm:$0xff]
    %v85 = vld [vmem:[%s0 + $0x20] sm:$0xff]
    %v86 = vld [vmem:[%s0 + $0x28] sm:$0xff]
    %v87 = vld [vmem:[%s0 + $0x30] sm:$0xff]
    %v88 = vld [vmem:[%s0 + $0x38] sm:$0xff]
    %v89 = vld [vmem:[%s0 + $0x40] sm:$0xff]
    %v90 = vld [vmem:[%s0 + $0x48] sm:$0xff]
    %v91 = vld [vmem:[%s0 + $0x50] sm:$0xff]
    %v92 = vld [vmem:[%s0 + $0x58] sm:$0xff]
    %v93 = vld [vmem:[%s0 + $0x60] sm:$0xff]
    %v94 = vld [vmem:[%s0 + $0x68] sm:$0xff]
    %v95 = vld [vmem:[%s0 + $0x70] sm:$0xff]
    %v96 = vld [vmem:[%s0 + $0x78] sm:$0xff]
    %v97 = vld [vmem:[%s0 + $0x80] sm:$0xff]
    %v98 = vld [vmem:[%s0 + $0x88] sm:$0xff]
    %v99 = vld [vmem:[%s0 + $0x90] sm:$0xff]
    %v100 = vld [vmem:[%s0 + $0x98] sm:$0xff]
    %v101 = vld [vmem:[%s0 + $0xa0] sm:$0xff]
    %v102 = vld [vmem:[%s0 + $0xa8] sm:$0xff]
    %v103 = vld [vmem:[%s0 + $0xb0] sm:$0xff]
    %v104 = vld [vmem:[%s0 + $0xb8] sm:$0xff]
    %v105 = vld [vmem:[%s0 + $0xc0] sm:$0xff]
    %v106 = vld [vmem:[%s2] sm:$0xff]
    %v107 = vld [vmem:[%s2 + $0x8] sm:$0xff]
    %v108 = vld [vmem:[%s2 + $0x10] sm:$0xff]
    %v109 = vld [vmem:[%s2 + $0x18] sm:$0xff]
    %v110 = vld [vmem:[%s2 + $0x20] sm:$0xff]
    %v111 = vld [vmem:[%s2 + $0x28] sm:$0xff]
    %v112 = vld [vmem:[%s2 + $0x30] sm:$0xff]
    %v113 = vld [vmem:[%s2 + $0x38] sm:$0xff]
    %v114 = vld [vmem:[%s2 + $0x40] sm:$0xff]
    %v115 = vld [vmem:[%s2 + $0x48] sm:$0xff]
    %v116 = vld [vmem:[%s2 + $0x50] sm:$0xff]
    %v117 = vld [vmem:[%s2 + $0x58] sm:$0xff]
    %v118 = vld [vmem:[%s2 + $0x60] sm:$0xff]
    %v119 = vld [vmem:[%s2 + $0x68] sm:$0xff]
    %v120 = vld [vmem:[%s2 + $0x70] sm:$0xff]
    %v121 = vld [vmem:[%s2 + $0x78] sm:$0xff]
    %v122 = vld [vmem:[%s3] sm:$0x1]
    %vm123 = vcmask 588800
    %v125 = vsel %vm123, %v32, 0
    %v128 = vsel %vm123, %v34, 0
    %v131 = vsel %vm123, %v36, 0
    %v134 = vsel %vm123, %v38, 0
    %v137 = vsel %vm123, %v40, 0
    %v140 = vsel %vm123, %v42, 0
    %v143 = vsel %vm123, %v44, 0
    %v146 = vsel %vm123, %v46, 0
    %v149 = vsel %vm123, %v48, 0
    %v152 = vsel %vm123, %v50, 0
    %v155 = vsel %vm123, %v52, 0
    %v158 = vsel %vm123, %v54, 0
    %v161 = vsel %vm123, %v56, 0
    %v164 = vsel %vm123, %v58, 0
    %v167 = vsel %vm123, %v60, 0
    %v170 = vsel %vm123, %v62, 0
    %v173 = vsel %vm123, %v64, 0
    %v176 = vsel %vm123, %v66, 0
    %v179 = vsel %vm123, %v68, 0
    %v182 = vsel %vm123, %v70, 0
    %v185 = vsel %vm123, %v72, 0
    %v188 = vsel %vm123, %v74, 0
    %v191 = vsel %vm123, %v76, 0
    %v194 = vsel %vm123, %v78, 0
    %v197 = vsel %vm123, %v80, 0
    %199 = vmatprep.subr.mxu0 0.0
    %200 = vmatpush1.msra.mxu0 %v81
    %201 = vmatprep.subr.mxu0 0.0
    %202 = vmatpush1.msra.mxu0 %v82
    %203 = vmatprep.subr.mxu0 0.0
    %204 = vmatpush1.msra.mxu0 %v83
    %205 = vmatprep.subr.mxu0 0.0
    %206 = vmatpush1.msra.mxu0 %v84
    %207 = vmatprep.subr.mxu0 0.0
    %208 = vmatpush1.msra.mxu0 %v85
    %209 = vmatprep.subr.mxu0 0.0
    %210 = vmatpush1.msra.mxu0 %v86
    %211 = vmatprep.subr.mxu0 0.0
    %212 = vmatpush1.msra.mxu0 %v87
    %213 = vmatprep.subr.mxu0 0.0
    %214 = vmatpush1.msra.mxu0 %v88
    %215 = vmatprep.subr.mxu0 0.0
    %216 = vmatpush1.msra.mxu0 %v89
    %217 = vmatprep.subr.mxu0 0.0
    %218 = vmatpush1.msra.mxu0 %v90
    %219 = vmatprep.subr.mxu0 0.0
    %220 = vmatpush1.msra.mxu0 %v91
    %221 = vmatprep.subr.mxu0 0.0
    %222 = vmatpush1.msra.mxu0 %v92
    %223 = vmatprep.subr.mxu0 0.0
    %224 = vmatpush1.msra.mxu0 %v93
    %225 = vmatprep.subr.mxu0 0.0
    %226 = vmatpush1.msra.mxu0 %v94
    %227 = vmatprep.subr.mxu0 0.0
    %228 = vmatpush1.msra.mxu0 %v95
    %229 = vmatprep.subr.mxu0 0.0
    %230 = vmatpush1.msra.mxu0 %v96
    %231 = vmatprep.subr.mxu0 0.0
    %232 = vmatpush1.msra.mxu0 %v97
    %233 = vmatprep.subr.mxu0 0.0
    %234 = vmatpush1.msra.mxu0 %v98
    %235 = vmatprep.subr.mxu0 0.0
    %236 = vmatpush1.msra.mxu0 %v99
    %237 = vmatprep.subr.mxu0 0.0
    %238 = vmatpush1.msra.mxu0 %v100
    %239 = vmatprep.subr.mxu0 0.0
    %240 = vmatpush1.msra.mxu0 %v101
    %241 = vmatprep.subr.mxu0 0.0
    %242 = vmatpush1.msra.mxu0 %v102
    %243 = vmatprep.subr.mxu0 0.0
    %244 = vmatpush1.msra.mxu0 %v103
    %245 = vmatprep.subr.mxu0 0.0
    %246 = vmatpush1.msra.mxu0 %v104
    %247 = vmatprep.subr.mxu0 0.0
    %248 = vmatpush1.msra.mxu0 %v105
    %249 = vmatprep.subr.mxu0 0.0
    %250 = vmatpush1.msra.mxu0 0.0
    %251 = vmatprep.subr.mxu0 0.0
    %252 = vmatpush1.msra.mxu0 0.0
    %253 = vmatprep.subr.mxu0 0.0
    %254 = vmatpush1.msra.mxu0 0.0
    %255 = vmatprep.subr.mxu0 0.0
    %256 = vmatpush1.msra.mxu0 0.0
    %257 = vmatprep.subr.mxu0 0.0
    %258 = vmatpush1.msra.mxu0 0.0
    %259 = vmatprep.subr.mxu0 0.0
    %260 = vmatpush1.msra.mxu0 0.0
    %261 = vmatprep.subr.mxu0 0.0
    %262 = vmatpush1.msra.mxu0 0.0
    %263 = vmatprep.mubr.f32.mxu0 %v125
    %264 = vmatmul.mubr.f32.gmra.mrb[0].mxu0 %v31
    %v265 = vpop.f32.mrb[0].mxu0
    %v266 = vadd.f32 0.0, %v265
    %v267 = vpop.f32.mrb[0].mxu0
    %268 = vmatprep.mubr.f32.mxu0 %v128
    %269 = vmatmul.mubr.f32.gmra.mrb[0].mxu0 %v33
    %v270 = vpop.f32.mrb[0].mxu0
    %v271 = vadd.f32 0.0, %v270
    %v272 = vpop.f32.mrb[0].mxu0
    %273 = vmatprep.mubr.f32.mxu0 %v131
    %274 = vmatmul.mubr.f32.gmra.mrb[0].mxu0 %v35
    %v275 = vpop.f32.mrb[0].mxu0
    %v276 = vadd.f32 0.0, %v275
    %v277 = vpop.f32.mrb[0].mxu0
    %278 = vmatprep.mubr.f32.mxu0 %v134
    %279 = vmatmul.mubr.f32.gmra.mrb[0].mxu0 %v37
    %v280 = vpop.f32.mrb[0].mxu0
    %v281 = vadd.f32 0.0, %v280
    %v282 = vpop.f32.mrb[0].mxu0
    %283 = vmatprep.mubr.f32.mxu0 %v137
    %284 = vmatmul.mubr.f32.gmra.mrb[0].mxu0 %v39
    %v285 = vpop.f32.mrb[0].mxu0
    %v286 = vadd.f32 0.0, %v285
    %v287 = vpop.f32.mrb[0].mxu0
    %288 = vmatprep.mubr.f32.mxu0 %v140
    %289 = vmatmul.mubr.f32.gmra.mrb[0].mxu0 %v41
    %v290 = vpop.f32.mrb[0].mxu0
    %v291 = vadd.f32 0.0, %v290
    %v292 = vpop.f32.mrb[0].mxu0
    %293 = vmatprep.mubr.f32.mxu0 %v143
    %294 = vmatmul.mubr.f32.gmra.mrb[0].mxu0 %v43
    %v295 = vpop.f32.mrb[0].mxu0
    %v296 = vadd.f32 0.0, %v295
    %v297 = vpop.f32.mrb[0].mxu0
    %298 = vmatprep.mubr.f32.mxu0 %v146
    %299 = vmatmul.mubr.f32.gmra.mrb[0].mxu0 %v45
    %v300 = vpop.f32.mrb[0].mxu0
    %v301 = vadd.f32 0.0, %v300
    %v302 = vpop.f32.mrb[0].mxu0
    %303 = vmatprep.mubr.f32.mxu0 %v149
    %304 = vmatmul.mubr.f32.gmra.mrb[0].mxu0 %v47
    %v305 = vpop.f32.mrb[0].mxu0
    %v306 = vadd.f32 0.0, %v305
    %v307 = vpop.f32.mrb[0].mxu0
    %308 = vmatprep.mubr.f32.mxu0 %v152
    %309 = vmatmul.mubr.f32.gmra.mrb[0].mxu0 %v49
    %v310 = vpop.f32.mrb[0].mxu0
    %v311 = vadd.f32 0.0, %v310
    %v312 = vpop.f32.mrb[0].mxu0
    %313 = vmatprep.mubr.f32.mxu0 %v155
    %314 = vmatmul.mubr.f32.gmra.mrb[0].mxu0 %v51
    %v315 = vpop.f32.mrb[0].mxu0
    %v316 = vadd.f32 0.0, %v315
    %v317 = vpop.f32.mrb[0].mxu0
    %318 = vmatprep.mubr.f32.mxu0 %v158
    %319 = vmatmul.mubr.f32.gmra.mrb[0].mxu0 %v53
    %v320 = vpop.f32.mrb[0].mxu0
    %v321 = vadd.f32 0.0, %v320
    %v322 = vpop.f32.mrb[0].mxu0
    %323 = vmatprep.mubr.f32.mxu0 %v161
    %324 = vmatmul.mubr.f32.gmra.mrb[0].mxu0 %v55
    %v325 = vpop.f32.mrb[0].mxu0
    %v326 = vadd.f32 0.0, %v325
    %v327 = vpop.f32.mrb[0].mxu0
    %328 = vmatprep.mubr.f32.mxu0 %v164
    %329 = vmatmul.mubr.f32.gmra.mrb[0].mxu0 %v57
    %v330 = vpop.f32.mrb[0].mxu0
    %v331 = vadd.f32 0.0, %v330
    %v332 = vpop.f32.mrb[0].mxu0
    %333 = vmatprep.mubr.f32.mxu0 %v167
    %334 = vmatmul.mubr.f32.gmra.mrb[0].mxu0 %v59
    %v335 = vpop.f32.mrb[0].mxu0
    %v336 = vadd.f32 0.0, %v335
    %v337 = vpop.f32.mrb[0].mxu0
    %338 = vmatprep.mubr.f32.mxu0 %v170
    %339 = vmatmul.mubr.f32.gmra.mrb[0].mxu0 %v61
    %v340 = vpop.f32.mrb[0].mxu0
    %v341 = vadd.f32 0.0, %v340
    %v342 = vpop.f32.mrb[0].mxu0
    %343 = vmatprep.mubr.f32.mxu0 %v173
    %344 = vmatmul.mubr.f32.gmra.mrb[0].mxu0 %v63
    %v345 = vpop.f32.mrb[0].mxu0
    %v346 = vadd.f32 0.0, %v345
    %v347 = vpop.f32.mrb[0].mxu0
    %348 = vmatprep.mubr.f32.mxu0 %v176
    %349 = vmatmul.mubr.f32.gmra.mrb[0].mxu0 %v65
    %v350 = vpop.f32.mrb[0].mxu0
    %v351 = vadd.f32 0.0, %v350
    %v352 = vpop.f32.mrb[0].mxu0
    %353 = vmatprep.mubr.f32.mxu0 %v179
    %354 = vmatmul.mubr.f32.gmra.mrb[0].mxu0 %v67
    %v355 = vpop.f32.mrb[0].mxu0
    %v356 = vadd.f32 0.0, %v355
    %v357 = vpop.f32.mrb[0].mxu0
    %358 = vmatprep.mubr.f32.mxu0 %v182
    %359 = vmatmul.mubr.f32.gmra.mrb[0].mxu0 %v69
    %v360 = vpop.f32.mrb[0].mxu0
    %v361 = vadd.f32 0.0, %v360
    %v362 = vpop.f32.mrb[0].mxu0
    %363 = vmatprep.mubr.f32.mxu0 %v185
    %364 = vmatmul.mubr.f32.gmra.mrb[0].mxu0 %v71
    %v365 = vpop.f32.mrb[0].mxu0
    %v366 = vadd.f32 0.0, %v365
    %v367 = vpop.f32.mrb[0].mxu0
    %368 = vmatprep.mubr.f32.mxu0 %v188
    %369 = vmatmul.mubr.f32.gmra.mrb[0].mxu0 %v73
    %v370 = vpop.f32.mrb[0].mxu0
    %v371 = vadd.f32 0.0, %v370
    %v372 = vpop.f32.mrb[0].mxu0
    %373 = vmatprep.mubr.f32.mxu0 %v191
    %374 = vmatmul.mubr.f32.gmra.mrb[0].mxu0 %v75
    %v375 = vpop.f32.mrb[0].mxu0
    %v376 = vadd.f32 0.0, %v375
    %v377 = vpop.f32.mrb[0].mxu0
    %378 = vmatprep.mubr.f32.mxu0 %v194
    %379 = vmatmul.mubr.f32.gmra.mrb[0].mxu0 %v77
    %v380 = vpop.f32.mrb[0].mxu0
    %v381 = vadd.f32 0.0, %v380
    %v382 = vpop.f32.mrb[0].mxu0
    %383 = vmatprep.mubr.f32.mxu0 %v197
    %384 = vmatmul.mubr.f32.gmra.mrb[0].mxu0 %v79
    %v385 = vpop.f32.mrb[0].mxu0
    %v386 = vadd.f32 0.0, %v385
    %v387 = vpop.f32.mrb[0].mxu0
    %388 = vdwg.mxu0
    %v390 = vlaneseq
    %v391 = vshrl.u32 %v390, 7
    %v392 = vsub.s32 0, %v391
    %v393 = vrot.slane %v122, %v392
    %395 = vmatprep.subr.mxu0 0.0
    %396 = vmatpush1.msra.mxu0 %v106
    %397 = vmatprep.subr.mxu0 0.0
    %398 = vmatpush1.msra.mxu0 %v107
    %399 = vmatprep.subr.mxu0 0.0
    %400 = vmatpush1.msra.mxu0 %v108
    %401 = vmatprep.subr.mxu0 0.0
    %402 = vmatpush1.msra.mxu0 %v109
    %403 = vmatprep.subr.mxu0 0.0
    %404 = vmatpush1.msra.mxu0 %v110
    %405 = vmatprep.subr.mxu0 0.0
    %406 = vmatpush1.msra.mxu0 %v111
    %407 = vmatprep.subr.mxu0 0.0
    %408 = vmatpush1.msra.mxu0 %v112
    %409 = vmatprep.subr.mxu0 0.0
    %410 = vmatpush1.msra.mxu0 %v113
    %411 = vmatprep.subr.mxu0 0.0
    %412 = vmatpush1.msra.mxu0 %v114
    %413 = vmatprep.subr.mxu0 0.0
    %414 = vmatpush1.msra.mxu0 %v115
    %415 = vmatprep.subr.mxu0 0.0
    %416 = vmatpush1.msra.mxu0 %v116
    %417 = vmatprep.subr.mxu0 0.0
    %418 = vmatpush1.msra.mxu0 %v117
    %419 = vmatprep.subr.mxu0 0.0
    %420 = vmatpush1.msra.mxu0 %v118
    %421 = vmatprep.subr.mxu0 0.0
    %422 = vmatpush1.msra.mxu0 %v119
    %423 = vmatprep.subr.mxu0 0.0
    %424 = vmatpush1.msra.mxu0 %v120
    %425 = vmatprep.subr.mxu0 0.0
    %426 = vmatpush1.msra.mxu0 %v121
    %427 = vmatprep.subr.mxu0 0.0
    %428 = vmatpush1.msra.mxu0 0.0
    %429 = vmatprep.subr.mxu0 0.0
    %430 = vmatpush1.msra.mxu0 0.0
    %431 = vmatprep.subr.mxu0 0.0
    %432 = vmatpush1.msra.mxu0 0.0
    %433 = vmatprep.subr.mxu0 0.0
    %434 = vmatpush1.msra.mxu0 0.0
    %435 = vmatprep.subr.mxu0 0.0
    %436 = vmatpush1.msra.mxu0 0.0
    %437 = vmatprep.subr.mxu0 0.0
    %438 = vmatpush1.msra.mxu0 0.0
    %439 = vmatprep.subr.mxu0 0.0
    %440 = vmatpush1.msra.mxu0 0.0
    %441 = vmatprep.subr.mxu0 0.0
    %442 = vmatpush1.msra.mxu0 0.0
    %443 = vmatprep.subr.mxu0 0.0
    %444 = vmatpush1.msra.mxu0 0.0
    %445 = vmatprep.subr.mxu0 0.0
    %446 = vmatpush1.msra.mxu0 0.0
    %447 = vmatprep.subr.mxu0 0.0
    %448 = vmatpush1.msra.mxu0 0.0
    %449 = vmatprep.subr.mxu0 0.0
    %450 = vmatpush1.msra.mxu0 0.0
    %451 = vmatprep.subr.mxu0 0.0
    %452 = vmatpush1.msra.mxu0 0.0
    %453 = vmatprep.subr.mxu0 0.0
    %454 = vmatpush1.msra.mxu0 0.0
    %455 = vmatprep.subr.mxu0 0.0
    %456 = vmatpush1.msra.mxu0 0.0
    %457 = vmatprep.subr.mxu0 0.0
    %458 = vmatpush1.msra.mxu0 0.0
    %459 = vmatprep.mubr.f32.mxu0 0.0
    %460 = vmatmul.mubr.f32.gmra.mrb[0].mxu0 %v266
    %v461 = vpop.f32.mrb[0].mxu0
    %v462 = vadd.f32 %v393, %v461
    %v463 = vpop.f32.mrb[0].mxu0
    %464 = vmatprep.mubr.f32.mxu0 0.0
    %465 = vmatmul.mubr.f32.gmra.mrb[0].mxu0 %v271
    %v466 = vpop.f32.mrb[0].mxu0
    %v467 = vadd.f32 %v393, %v466
    %v468 = vpop.f32.mrb[0].mxu0
    %469 = vmatprep.mubr.f32.mxu0 0.0
    %470 = vmatmul.mubr.f32.gmra.mrb[0].mxu0 %v276
    %v471 = vpop.f32.mrb[0].mxu0
    %v472 = vadd.f32 %v393, %v471
    %v473 = vpop.f32.mrb[0].mxu0
    %474 = vmatprep.mubr.f32.mxu0 0.0
    %475 = vmatmul.mubr.f32.gmra.mrb[0].mxu0 %v281
    %v476 = vpop.f32.mrb[0].mxu0
    %v477 = vadd.f32 %v393, %v476
    %v478 = vpop.f32.mrb[0].mxu0
    %479 = vmatprep.mubr.f32.mxu0 0.0
    %480 = vmatmul.mubr.f32.gmra.mrb[0].mxu0 %v286
    %v481 = vpop.f32.mrb[0].mxu0
    %v482 = vadd.f32 %v393, %v481
    %v483 = vpop.f32.mrb[0].mxu0
    %484 = vmatprep.mubr.f32.mxu0 0.0
    %485 = vmatmul.mubr.f32.gmra.mrb[0].mxu0 %v291
    %v486 = vpop.f32.mrb[0].mxu0
    %v487 = vadd.f32 %v393, %v486
    %v488 = vpop.f32.mrb[0].mxu0
    %489 = vmatprep.mubr.f32.mxu0 0.0
    %490 = vmatmul.mubr.f32.gmra.mrb[0].mxu0 %v296
    %v491 = vpop.f32.mrb[0].mxu0
    %v492 = vadd.f32 %v393, %v491
    %v493 = vpop.f32.mrb[0].mxu0
    %494 = vmatprep.mubr.f32.mxu0 0.0
    %495 = vmatmul.mubr.f32.gmra.mrb[0].mxu0 %v301
    %v496 = vpop.f32.mrb[0].mxu0
    %v497 = vadd.f32 %v393, %v496
    %v498 = vpop.f32.mrb[0].mxu0
    %499 = vmatprep.mubr.f32.mxu0 0.0
    %500 = vmatmul.mubr.f32.gmra.mrb[0].mxu0 %v306
    %v501 = vpop.f32.mrb[0].mxu0
    %v502 = vadd.f32 %v393, %v501
    %v503 = vpop.f32.mrb[0].mxu0
    %504 = vmatprep.mubr.f32.mxu0 0.0
    %505 = vmatmul.mubr.f32.gmra.mrb[0].mxu0 %v311
    %v506 = vpop.f32.mrb[0].mxu0
    %v507 = vadd.f32 %v393, %v506
    %v508 = vpop.f32.mrb[0].mxu0
    %509 = vmatprep.mubr.f32.mxu0 0.0
    %510 = vmatmul.mubr.f32.gmra.mrb[0].mxu0 %v316
    %v511 = vpop.f32.mrb[0].mxu0
    %v512 = vadd.f32 %v393, %v511
    %v513 = vpop.f32.mrb[0].mxu0
    %514 = vmatprep.mubr.f32.mxu0 0.0
    %515 = vmatmul.mubr.f32.gmra.mrb[0].mxu0 %v321
    %v516 = vpop.f32.mrb[0].mxu0
    %v517 = vadd.f32 %v393, %v516
    %v518 = vpop.f32.mrb[0].mxu0
    %519 = vmatprep.mubr.f32.mxu0 0.0
    %520 = vmatmul.mubr.f32.gmra.mrb[0].mxu0 %v326
    %v521 = vpop.f32.mrb[0].mxu0
    %v522 = vadd.f32 %v393, %v521
    %v523 = vpop.f32.mrb[0].mxu0
    %524 = vmatprep.mubr.f32.mxu0 0.0
    %525 = vmatmul.mubr.f32.gmra.mrb[0].mxu0 %v331
    %v526 = vpop.f32.mrb[0].mxu0
    %v527 = vadd.f32 %v393, %v526
    %v528 = vpop.f32.mrb[0].mxu0
    %529 = vmatprep.mubr.f32.mxu0 0.0
    %530 = vmatmul.mubr.f32.gmra.mrb[0].mxu0 %v336
    %v531 = vpop.f32.mrb[0].mxu0
    %v532 = vadd.f32 %v393, %v531
    %v533 = vpop.f32.mrb[0].mxu0
    %534 = vmatprep.mubr.f32.mxu0 0.0
    %535 = vmatmul.mubr.f32.gmra.mrb[0].mxu0 %v341
    %v536 = vpop.f32.mrb[0].mxu0
    %v537 = vadd.f32 %v393, %v536
    %v538 = vpop.f32.mrb[0].mxu0
    %539 = vmatprep.mubr.f32.mxu0 0.0
    %540 = vmatmul.mubr.f32.gmra.mrb[0].mxu0 %v346
    %v541 = vpop.f32.mrb[0].mxu0
    %v542 = vadd.f32 %v393, %v541
    %v543 = vpop.f32.mrb[0].mxu0
    %544 = vmatprep.mubr.f32.mxu0 0.0
    %545 = vmatmul.mubr.f32.gmra.mrb[0].mxu0 %v351
    %v546 = vpop.f32.mrb[0].mxu0
    %v547 = vadd.f32 %v393, %v546
    %v548 = vpop.f32.mrb[0].mxu0
    %549 = vmatprep.mubr.f32.mxu0 0.0
    %550 = vmatmul.mubr.f32.gmra.mrb[0].mxu0 %v356
    %v551 = vpop.f32.mrb[0].mxu0
    %v552 = vadd.f32 %v393, %v551
    %v553 = vpop.f32.mrb[0].mxu0
    %554 = vmatprep.mubr.f32.mxu0 0.0
    %555 = vmatmul.mubr.f32.gmra.mrb[0].mxu0 %v361
    %v556 = vpop.f32.mrb[0].mxu0
    %v557 = vadd.f32 %v393, %v556
    %v558 = vpop.f32.mrb[0].mxu0
    %559 = vmatprep.mubr.f32.mxu0 0.0
    %560 = vmatmul.mubr.f32.gmra.mrb[0].mxu0 %v366
    %v561 = vpop.f32.mrb[0].mxu0
    %v562 = vadd.f32 %v393, %v561
    %v563 = vpop.f32.mrb[0].mxu0
    %564 = vmatprep.mubr.f32.mxu0 0.0
    %565 = vmatmul.mubr.f32.gmra.mrb[0].mxu0 %v371
    %v566 = vpop.f32.mrb[0].mxu0
    %v567 = vadd.f32 %v393, %v566
    %v568 = vpop.f32.mrb[0].mxu0
    %569 = vmatprep.mubr.f32.mxu0 0.0
    %570 = vmatmul.mubr.f32.gmra.mrb[0].mxu0 %v376
    %v571 = vpop.f32.mrb[0].mxu0
    %v572 = vadd.f32 %v393, %v571
    %v573 = vpop.f32.mrb[0].mxu0
    %574 = vmatprep.mubr.f32.mxu0 0.0
    %575 = vmatmul.mubr.f32.gmra.mrb[0].mxu0 %v381
    %v576 = vpop.f32.mrb[0].mxu0
    %v577 = vadd.f32 %v393, %v576
    %v578 = vpop.f32.mrb[0].mxu0
    %579 = vmatprep.mubr.f32.mxu0 0.0
    %580 = vmatmul.mubr.f32.gmra.mrb[0].mxu0 %v386
    %v581 = vpop.f32.mrb[0].mxu0
    %v582 = vadd.f32 %v393, %v581
    %v583 = vpop.f32.mrb[0].mxu0
    %584 = vdwg.mxu0
    %v585 = vmax.f32 %v462, 0.0
    %v586 = vmax.f32 %v467, 0.0
    %v587 = vmax.f32 %v472, 0.0
    %v588 = vmax.f32 %v477, 0.0
    %v589 = vmax.f32 %v482, 0.0
    %v590 = vmax.f32 %v487, 0.0
    %v591 = vmax.f32 %v492, 0.0
    %v592 = vmax.f32 %v497, 0.0
    %v593 = vmax.f32 %v502, 0.0
    %v594 = vmax.f32 %v507, 0.0
    %v595 = vmax.f32 %v512, 0.0
    %v596 = vmax.f32 %v517, 0.0
    %v597 = vmax.f32 %v522, 0.0
    %v598 = vmax.f32 %v527, 0.0
    %v599 = vmax.f32 %v532, 0.0
    %v600 = vmax.f32 %v537, 0.0
    %v601 = vmax.f32 %v542, 0.0
    %v602 = vmax.f32 %v547, 0.0
    %v603 = vmax.f32 %v552, 0.0
    %v604 = vmax.f32 %v557, 0.0
    %v605 = vmax.f32 %v562, 0.0
    %v606 = vmax.f32 %v567, 0.0
    %v607 = vmax.f32 %v572, 0.0
    %v608 = vmax.f32 %v577, 0.0
    %v609 = vmax.f32 %v582, 0.0
    %s610 = scalar_lea.vmem %s2, 128
    %v611 = vld [vmem:[%s610] sm:$0xff]
    %v612 = vld [vmem:[%s610 + $0x8] sm:$0xff]
    %v613 = vld [vmem:[%s610 + $0x10] sm:$0xff]
    %v614 = vld [vmem:[%s610 + $0x18] sm:$0xff]
    %v615 = vld [vmem:[%s610 + $0x20] sm:$0xff]
    %v616 = vld [vmem:[%s610 + $0x28] sm:$0xff]
    %v617 = vld [vmem:[%s610 + $0x30] sm:$0xff]
    %v618 = vld [vmem:[%s610 + $0x38] sm:$0xff]
    %v619 = vld [vmem:[%s610 + $0x40] sm:$0xff]
    %v620 = vld [vmem:[%s610 + $0x48] sm:$0xff]
    %v621 = vld [vmem:[%s610 + $0x50] sm:$0xff]
    %v622 = vld [vmem:[%s610 + $0x58] sm:$0xff]
    %v623 = vld [vmem:[%s610 + $0x60] sm:$0xff]
    %v624 = vld [vmem:[%s610 + $0x68] sm:$0xff]
    %v625 = vld [vmem:[%s610 + $0x70] sm:$0xff]
    %v626 = vld [vmem:[%s610 + $0x78] sm:$0xff]
    %s627 = scalar_lea.vmem %s3, 1
    %v628 = vld [vmem:[%s627] sm:$0x1]
    %629 = vmatprep.subr.mxu0 0.0
    %630 = vmatpush1.msra.mxu0 %v611
    %631 = vmatprep.subr.mxu0 0.0
    %632 = vmatpush1.msra.mxu0 %v612
    %633 = vmatprep.subr.mxu0 0.0
    %634 = vmatpush1.msra.mxu0 %v613
    %635 = vmatprep.subr.mxu0 0.0
    %636 = vmatpush1.msra.mxu0 %v614
    %637 = vmatprep.subr.mxu0 0.0
    %638 = vmatpush1.msra.mxu0 %v615
    %639 = vmatprep.subr.mxu0 0.0
    %640 = vmatpush1.msra.mxu0 %v616
    %641 = vmatprep.subr.mxu0 0.0
    %642 = vmatpush1.msra.mxu0 %v617
    %643 = vmatprep.subr.mxu0 0.0
    %644 = vmatpush1.msra.mxu0 %v618
    %645 = vmatprep.subr.mxu0 0.0
    %646 = vmatpush1.msra.mxu0 %v619
    %647 = vmatprep.subr.mxu0 0.0
    %648 = vmatpush1.msra.mxu0 %v620
    %649 = vmatprep.subr.mxu0 0.0
    %650 = vmatpush1.msra.mxu0 %v621
    %651 = vmatprep.subr.mxu0 0.0
    %652 = vmatpush1.msra.mxu0 %v622
    %653 = vmatprep.subr.mxu0 0.0
    %654 = vmatpush1.msra.mxu0 %v623
    %655 = vmatprep.subr.mxu0 0.0
    %656 = vmatpush1.msra.mxu0 %v624
    %657 = vmatprep.subr.mxu0 0.0
    %658 = vmatpush1.msra.mxu0 %v625
    %659 = vmatprep.subr.mxu0 0.0
    %660 = vmatpush1.msra.mxu0 %v626
    %661 = vmatprep.subr.mxu0 0.0
    %662 = vmatpush1.msra.mxu0 0.0
    %663 = vmatprep.subr.mxu0 0.0
    %664 = vmatpush1.msra.mxu0 0.0
    %665 = vmatprep.subr.mxu0 0.0
    %666 = vmatpush1.msra.mxu0 0.0
    %667 = vmatprep.subr.mxu0 0.0
    %668 = vmatpush1.msra.mxu0 0.0
    %669 = vmatprep.subr.mxu0 0.0
    %670 = vmatpush1.msra.mxu0 0.0
    %671 = vmatprep.subr.mxu0 0.0
    %672 = vmatpush1.msra.mxu0 0.0
    %673 = vmatprep.subr.mxu0 0.0
    %674 = vmatpush1.msra.mxu0 0.0
    %675 = vmatprep.subr.mxu0 0.0
    %676 = vmatpush1.msra.mxu0 0.0
    %677 = vmatprep.subr.mxu0 0.0
    %678 = vmatpush1.msra.mxu0 0.0
    %679 = vmatprep.subr.mxu0 0.0
    %680 = vmatpush1.msra.mxu0 0.0
    %681 = vmatprep.subr.mxu0 0.0
    %682 = vmatpush1.msra.mxu0 0.0
    %683 = vmatprep.subr.mxu0 0.0
    %684 = vmatpush1.msra.mxu0 0.0
    %685 = vmatprep.subr.mxu0 0.0
    %686 = vmatpush1.msra.mxu0 0.0
    %687 = vmatprep.subr.mxu0 0.0
    %688 = vmatpush1.msra.mxu0 0.0
    %689 = vmatprep.subr.mxu0 0.0
    %690 = vmatpush1.msra.mxu0 0.0
    %691 = vmatprep.subr.mxu0 0.0
    %692 = vmatpush1.msra.mxu0 0.0
    %693 = vmatprep.mubr.f32.mxu0 0.0
    %694 = vmatmul.mubr.f32.gmra.mrb[0].mxu0 %v585
    %v695 = vpop.f32.mrb[0].mxu0
    %v696 = vadd.f32 0.0, %v695
    %v697 = vpop.f32.mrb[0].mxu0
    %698 = vmatprep.mubr.f32.mxu0 0.0
    %699 = vmatmul.mubr.f32.gmra.mrb[0].mxu0 %v586
    %v700 = vpop.f32.mrb[0].mxu0
    %v701 = vadd.f32 0.0, %v700
    %v702 = vpop.f32.mrb[0].mxu0
    %703 = vmatprep.mubr.f32.mxu0 0.0
    %704 = vmatmul.mubr.f32.gmra.mrb[0].mxu0 %v587
    %v705 = vpop.f32.mrb[0].mxu0
    %v706 = vadd.f32 0.0, %v705
    %v707 = vpop.f32.mrb[0].mxu0
    %708 = vmatprep.mubr.f32.mxu0 0.0
    %709 = vmatmul.mubr.f32.gmra.mrb[0].mxu0 %v588
    %v710 = vpop.f32.mrb[0].mxu0
    %v711 = vadd.f32 0.0, %v710
    %v712 = vpop.f32.mrb[0].mxu0
    %713 = vmatprep.mubr.f32.mxu0 0.0
    %714 = vmatmul.mubr.f32.gmra.mrb[0].mxu0 %v589
    %v715 = vpop.f32.mrb[0].mxu0
    %v716 = vadd.f32 0.0, %v715
    %v717 = vpop.f32.mrb[0].mxu0
    %718 = vmatprep.mubr.f32.mxu0 0.0
    %719 = vmatmul.mubr.f32.gmra.mrb[0].mxu0 %v590
    %v720 = vpop.f32.mrb[0].mxu0
    %v721 = vadd.f32 0.0, %v720
    %v722 = vpop.f32.mrb[0].mxu0
    %723 = vmatprep.mubr.f32.mxu0 0.0
    %724 = vmatmul.mubr.f32.gmra.mrb[0].mxu0 %v591
    %v725 = vpop.f32.mrb[0].mxu0
    %v726 = vadd.f32 0.0, %v725
    %v727 = vpop.f32.mrb[0].mxu0
    %728 = vmatprep.mubr.f32.mxu0 0.0
    %729 = vmatmul.mubr.f32.gmra.mrb[0].mxu0 %v592
    %v730 = vpop.f32.mrb[0].mxu0
    %v731 = vadd.f32 0.0, %v730
    %v732 = vpop.f32.mrb[0].mxu0
    %733 = vmatprep.mubr.f32.mxu0 0.0
    %734 = vmatmul.mubr.f32.gmra.mrb[0].mxu0 %v593
    %v735 = vpop.f32.mrb[0].mxu0
    %v736 = vadd.f32 0.0, %v735
    %v737 = vpop.f32.mrb[0].mxu0
    %738 = vmatprep.mubr.f32.mxu0 0.0
    %739 = vmatmul.mubr.f32.gmra.mrb[0].mxu0 %v594
    %v740 = vpop.f32.mrb[0].mxu0
    %v741 = vadd.f32 0.0, %v740
    %v742 = vpop.f32.mrb[0].mxu0
    %743 = vmatprep.mubr.f32.mxu0 0.0
    %744 = vmatmul.mubr.f32.gmra.mrb[0].mxu0 %v595
    %v745 = vpop.f32.mrb[0].mxu0
    %v746 = vadd.f32 0.0, %v745
    %v747 = vpop.f32.mrb[0].mxu0
    %748 = vmatprep.mubr.f32.mxu0 0.0
    %749 = vmatmul.mubr.f32.gmra.mrb[0].mxu0 %v596
    %v750 = vpop.f32.mrb[0].mxu0
    %v751 = vadd.f32 0.0, %v750
    %v752 = vpop.f32.mrb[0].mxu0
    %753 = vmatprep.mubr.f32.mxu0 0.0
    %754 = vmatmul.mubr.f32.gmra.mrb[0].mxu0 %v597
    %v755 = vpop.f32.mrb[0].mxu0
    %v756 = vadd.f32 0.0, %v755
    %v757 = vpop.f32.mrb[0].mxu0
    %758 = vmatprep.mubr.f32.mxu0 0.0
    %759 = vmatmul.mubr.f32.gmra.mrb[0].mxu0 %v598
    %v760 = vpop.f32.mrb[0].mxu0
    %v761 = vadd.f32 0.0, %v760
    %v762 = vpop.f32.mrb[0].mxu0
    %763 = vmatprep.mubr.f32.mxu0 0.0
    %764 = vmatmul.mubr.f32.gmra.mrb[0].mxu0 %v599
    %v765 = vpop.f32.mrb[0].mxu0
    %v766 = vadd.f32 0.0, %v765
    %v767 = vpop.f32.mrb[0].mxu0
    %768 = vmatprep.mubr.f32.mxu0 0.0
    %769 = vmatmul.mubr.f32.gmra.mrb[0].mxu0 %v600
    %v770 = vpop.f32.mrb[0].mxu0
    %v771 = vadd.f32 0.0, %v770
    %v772 = vpop.f32.mrb[0].mxu0
    %773 = vmatprep.mubr.f32.mxu0 0.0
    %774 = vmatmul.mubr.f32.gmra.mrb[0].mxu0 %v601
    %v775 = vpop.f32.mrb[0].mxu0
    %v776 = vadd.f32 0.0, %v775
    %v777 = vpop.f32.mrb[0].mxu0
    %778 = vmatprep.mubr.f32.mxu0 0.0
    %779 = vmatmul.mubr.f32.gmra.mrb[0].mxu0 %v602
    %v780 = vpop.f32.mrb[0].mxu0
    %v781 = vadd.f32 0.0, %v780
    %v782 = vpop.f32.mrb[0].mxu0
    %783 = vmatprep.mubr.f32.mxu0 0.0
    %784 = vmatmul.mubr.f32.gmra.mrb[0].mxu0 %v603
    %v785 = vpop.f32.mrb[0].mxu0
    %v786 = vadd.f32 0.0, %v785
    %v787 = vpop.f32.mrb[0].mxu0
    %788 = vmatprep.mubr.f32.mxu0 0.0
    %789 = vmatmul.mubr.f32.gmra.mrb[0].mxu0 %v604
    %v790 = vpop.f32.mrb[0].mxu0
    %v791 = vadd.f32 0.0, %v790
    %v792 = vpop.f32.mrb[0].mxu0
    %793 = vmatprep.mubr.f32.mxu0 0.0
    %794 = vmatmul.mubr.f32.gmra.mrb[0].mxu0 %v605
    %v795 = vpop.f32.mrb[0].mxu0
    %v796 = vadd.f32 0.0, %v795
    %v797 = vpop.f32.mrb[0].mxu0
    %798 = vmatprep.mubr.f32.mxu0 0.0
    %799 = vmatmul.mubr.f32.gmra.mrb[0].mxu0 %v606
    %v800 = vpop.f32.mrb[0].mxu0
    %v801 = vadd.f32 0.0, %v800
    %v802 = vpop.f32.mrb[0].mxu0
    %803 = vmatprep.mubr.f32.mxu0 0.0
    %804 = vmatmul.mubr.f32.gmra.mrb[0].mxu0 %v607
    %v805 = vpop.f32.mrb[0].mxu0
    %v806 = vadd.f32 0.0, %v805
    %v807 = vpop.f32.mrb[0].mxu0
    %808 = vmatprep.mubr.f32.mxu0 0.0
    %809 = vmatmul.mubr.f32.gmra.mrb[0].mxu0 %v608
    %v810 = vpop.f32.mrb[0].mxu0
    %v811 = vadd.f32 0.0, %v810
    %v812 = vpop.f32.mrb[0].mxu0
    %813 = vmatprep.mubr.f32.mxu0 0.0
    %814 = vmatmul.mubr.f32.gmra.mrb[0].mxu0 %v609
    %v815 = vpop.f32.mrb[0].mxu0
    %v816 = vadd.f32 0.0, %v815
    %v817 = vpop.f32.mrb[0].mxu0
    %818 = vdwg.mxu0
    %v820 = vlaneseq
    %v821 = vshrl.u32 %v820, 7
    %v822 = vsub.s32 0, %v821
    %v823 = vrot.slane %v628, %v822
    %825 = vmatprep.subr.mxu0 0.0
    %826 = vmatpush1.msra.mxu0 %v696
    %827 = vmatprep.subr.mxu0 0.0
    %828 = vmatpush1.msra.mxu0 %v701
    %829 = vmatprep.subr.mxu0 0.0
    %830 = vmatpush1.msra.mxu0 %v706
    %831 = vmatprep.subr.mxu0 0.0
    %832 = vmatpush1.msra.mxu0 %v711
    %833 = vmatprep.subr.mxu0 0.0
    %834 = vmatpush1.msra.mxu0 %v716
    %835 = vmatprep.subr.mxu0 0.0
    %836 = vmatpush1.msra.mxu0 %v721
    %837 = vmatprep.subr.mxu0 0.0
    %838 = vmatpush1.msra.mxu0 %v726
    %839 = vmatprep.subr.mxu0 0.0
    %840 = vmatpush1.msra.mxu0 %v731
    %841 = vmatprep.subr.mxu0 0.0
    %842 = vmatpush1.msra.mxu0 %v736
    %843 = vmatprep.subr.mxu0 0.0
    %844 = vmatpush1.msra.mxu0 %v741
    %845 = vmatprep.subr.mxu0 0.0
    %846 = vmatpush1.msra.mxu0 %v746
    %847 = vmatprep.subr.mxu0 0.0
    %848 = vmatpush1.msra.mxu0 %v751
    %849 = vmatprep.subr.mxu0 0.0
    %850 = vmatpush1.msra.mxu0 %v756
    %851 = vmatprep.subr.mxu0 0.0
    %852 = vmatpush1.msra.mxu0 %v761
    %853 = vmatprep.subr.mxu0 0.0
    %854 = vmatpush1.msra.mxu0 %v766
    %855 = vmatprep.subr.mxu0 0.0
    %856 = vmatpush1.msra.mxu0 %v771
    %857 = vmatprep.subr.mxu0 0.0
    %858 = vmatpush1.msra.mxu0 %v776
    %859 = vmatprep.subr.mxu0 0.0
    %860 = vmatpush1.msra.mxu0 %v781
    %861 = vmatprep.subr.mxu0 0.0
    %862 = vmatpush1.msra.mxu0 %v786
    %863 = vmatprep.subr.mxu0 0.0
    %864 = vmatpush1.msra.mxu0 %v791
    %865 = vmatprep.subr.mxu0 0.0
    %866 = vmatpush1.msra.mxu0 %v796
    %867 = vmatprep.subr.mxu0 0.0
    %868 = vmatpush1.msra.mxu0 %v801
    %869 = vmatprep.subr.mxu0 0.0
    %870 = vmatpush1.msra.mxu0 %v806
    %871 = vmatprep.subr.mxu0 0.0
    %872 = vmatpush1.msra.mxu0 %v811
    %873 = vmatprep.subr.mxu0 0.0
    %874 = vmatpush1.msra.mxu0 %v816
    %875 = vmatprep.subr.mxu0 0.0
    %876 = vmatpush1.msra.mxu0 0.0
    %877 = vmatprep.subr.mxu0 0.0
    %878 = vmatpush1.msra.mxu0 0.0
    %879 = vmatprep.subr.mxu0 0.0
    %880 = vmatpush1.msra.mxu0 0.0
    %881 = vmatprep.subr.mxu0 0.0
    %882 = vmatpush1.msra.mxu0 0.0
    %883 = vmatprep.subr.mxu0 0.0
    %884 = vmatpush1.msra.mxu0 0.0
    %885 = vmatprep.subr.mxu0 0.0
    %886 = vmatpush1.msra.mxu0 0.0
    %887 = vmatprep.subr.mxu0 0.0
    %888 = vmatpush1.msra.mxu0 0.0
    %889 = vmatprep.mubr.f32.mxu0 %v125
    %890 = vmatmul.mubr.f32.gmra.mrb[0].mxu0 %v31
    %v891 = vpop.f32.mrb[0].mxu0
    %v892 = vadd.f32 %v823, %v891
    %v893 = vpop.f32.mrb[0].mxu0
    %894 = vmatprep.mubr.f32.mxu0 %v128
    %895 = vmatmul.mubr.f32.gmra.mrb[0].mxu0 %v33
    %v896 = vpop.f32.mrb[0].mxu0
    %v897 = vadd.f32 %v823, %v896
    %v898 = vpop.f32.mrb[0].mxu0
    %899 = vmatprep.mubr.f32.mxu0 %v131
    %900 = vmatmul.mubr.f32.gmra.mrb[0].mxu0 %v35
    %v901 = vpop.f32.mrb[0].mxu0
    %v902 = vadd.f32 %v823, %v901
    %v903 = vpop.f32.mrb[0].mxu0
    %904 = vmatprep.mubr.f32.mxu0 %v134
    %905 = vmatmul.mubr.f32.gmra.mrb[0].mxu0 %v37
    %v906 = vpop.f32.mrb[0].mxu0
    %v907 = vadd.f32 %v823, %v906
    %v908 = vpop.f32.mrb[0].mxu0
    %909 = vmatprep.mubr.f32.mxu0 %v137
    %910 = vmatmul.mubr.f32.gmra.mrb[0].mxu0 %v39
    %v911 = vpop.f32.mrb[0].mxu0
    %v912 = vadd.f32 %v823, %v911
    %v913 = vpop.f32.mrb[0].mxu0
    %914 = vmatprep.mubr.f32.mxu0 %v140
    %915 = vmatmul.mubr.f32.gmra.mrb[0].mxu0 %v41
    %v916 = vpop.f32.mrb[0].mxu0
    %v917 = vadd.f32 %v823, %v916
    %v918 = vpop.f32.mrb[0].mxu0
    %919 = vmatprep.mubr.f32.mxu0 %v143
    %920 = vmatmul.mubr.f32.gmra.mrb[0].mxu0 %v43
    %v921 = vpop.f32.mrb[0].mxu0
    %v922 = vadd.f32 %v823, %v921
    %v923 = vpop.f32.mrb[0].mxu0
    %924 = vmatprep.mubr.f32.mxu0 %v146
    %925 = vmatmul.mubr.f32.gmra.mrb[0].mxu0 %v45
    %v926 = vpop.f32.mrb[0].mxu0
    %v927 = vadd.f32 %v823, %v926
    %v928 = vpop.f32.mrb[0].mxu0
    %929 = vmatprep.mubr.f32.mxu0 %v149
    %930 = vmatmul.mubr.f32.gmra.mrb[0].mxu0 %v47
    %v931 = vpop.f32.mrb[0].mxu0
    %v932 = vadd.f32 %v823, %v931
    %v933 = vpop.f32.mrb[0].mxu0
    %934 = vmatprep.mubr.f32.mxu0 %v152
    %935 = vmatmul.mubr.f32.gmra.mrb[0].mxu0 %v49
    %v936 = vpop.f32.mrb[0].mxu0
    %v937 = vadd.f32 %v823, %v936
    %v938 = vpop.f32.mrb[0].mxu0
    %939 = vmatprep.mubr.f32.mxu0 %v155
    %940 = vmatmul.mubr.f32.gmra.mrb[0].mxu0 %v51
    %v941 = vpop.f32.mrb[0].mxu0
    %v942 = vadd.f32 %v823, %v941
    %v943 = vpop.f32.mrb[0].mxu0
    %944 = vmatprep.mubr.f32.mxu0 %v158
    %945 = vmatmul.mubr.f32.gmra.mrb[0].mxu0 %v53
    %v946 = vpop.f32.mrb[0].mxu0
    %v947 = vadd.f32 %v823, %v946
    %v948 = vpop.f32.mrb[0].mxu0
    %949 = vmatprep.mubr.f32.mxu0 %v161
    %950 = vmatmul.mubr.f32.gmra.mrb[0].mxu0 %v55
    %v951 = vpop.f32.mrb[0].mxu0
    %v952 = vadd.f32 %v823, %v951
    %v953 = vpop.f32.mrb[0].mxu0
    %954 = vmatprep.mubr.f32.mxu0 %v164
    %955 = vmatmul.mubr.f32.gmra.mrb[0].mxu0 %v57
    %v956 = vpop.f32.mrb[0].mxu0
    %v957 = vadd.f32 %v823, %v956
    %v958 = vpop.f32.mrb[0].mxu0
    %959 = vmatprep.mubr.f32.mxu0 %v167
    %960 = vmatmul.mubr.f32.gmra.mrb[0].mxu0 %v59
    %v961 = vpop.f32.mrb[0].mxu0
    %v962 = vadd.f32 %v823, %v961
    %v963 = vpop.f32.mrb[0].mxu0
    %964 = vmatprep.mubr.f32.mxu0 %v170
    %965 = vmatmul.mubr.f32.gmra.mrb[0].mxu0 %v61
    %v966 = vpop.f32.mrb[0].mxu0
    %v967 = vadd.f32 %v823, %v966
    %v968 = vpop.f32.mrb[0].mxu0
    %969 = vmatprep.mubr.f32.mxu0 %v173
    %970 = vmatmul.mubr.f32.gmra.mrb[0].mxu0 %v63
    %v971 = vpop.f32.mrb[0].mxu0
    %v972 = vadd.f32 %v823, %v971
    %v973 = vpop.f32.mrb[0].mxu0
    %974 = vmatprep.mubr.f32.mxu0 %v176
    %975 = vmatmul.mubr.f32.gmra.mrb[0].mxu0 %v65
    %v976 = vpop.f32.mrb[0].mxu0
    %v977 = vadd.f32 %v823, %v976
    %v978 = vpop.f32.mrb[0].mxu0
    %979 = vmatprep.mubr.f32.mxu0 %v179
    %980 = vmatmul.mubr.f32.gmra.mrb[0].mxu0 %v67
    %v981 = vpop.f32.mrb[0].mxu0
    %v982 = vadd.f32 %v823, %v981
    %v983 = vpop.f32.mrb[0].mxu0
    %984 = vmatprep.mubr.f32.mxu0 %v182
    %985 = vmatmul.mubr.f32.gmra.mrb[0].mxu0 %v69
    %v986 = vpop.f32.mrb[0].mxu0
    %v987 = vadd.f32 %v823, %v986
    %v988 = vpop.f32.mrb[0].mxu0
    %989 = vmatprep.mubr.f32.mxu0 %v185
    %990 = vmatmul.mubr.f32.gmra.mrb[0].mxu0 %v71
    %v991 = vpop.f32.mrb[0].mxu0
    %v992 = vadd.f32 %v823, %v991
    %v993 = vpop.f32.mrb[0].mxu0
    %994 = vmatprep.mubr.f32.mxu0 %v188
    %995 = vmatmul.mubr.f32.gmra.mrb[0].mxu0 %v73
    %v996 = vpop.f32.mrb[0].mxu0
    %v997 = vadd.f32 %v823, %v996
    %v998 = vpop.f32.mrb[0].mxu0
    %999 = vmatprep.mubr.f32.mxu0 %v191
    %1000 = vmatmul.mubr.f32.gmra.mrb[0].mxu0 %v75
    %v1001 = vpop.f32.mrb[0].mxu0
    %v1002 = vadd.f32 %v823, %v1001
    %v1003 = vpop.f32.mrb[0].mxu0
    %1004 = vmatprep.mubr.f32.mxu0 %v194
    %1005 = vmatmul.mubr.f32.gmra.mrb[0].mxu0 %v77
    %v1006 = vpop.f32.mrb[0].mxu0
    %v1007 = vadd.f32 %v823, %v1006
    %v1008 = vpop.f32.mrb[0].mxu0
    %1009 = vmatprep.mubr.f32.mxu0 %v197
    %1010 = vmatmul.mubr.f32.gmra.mrb[0].mxu0 %v79
    %v1011 = vpop.f32.mrb[0].mxu0
    %v1012 = vadd.f32 %v823, %v1011
    %v1013 = vpop.f32.mrb[0].mxu0
    %1014 = vdwg.mxu0
    %v1015 = vmax.f32 %v892, 0.0
    %v1016 = vmax.f32 %v897, 0.0
    %v1017 = vmax.f32 %v902, 0.0
    %v1018 = vmax.f32 %v907, 0.0
    %v1019 = vmax.f32 %v912, 0.0
    %v1020 = vmax.f32 %v917, 0.0
    %v1021 = vmax.f32 %v922, 0.0
    %v1022 = vmax.f32 %v927, 0.0
    %v1023 = vmax.f32 %v932, 0.0
    %v1024 = vmax.f32 %v937, 0.0
    %v1025 = vmax.f32 %v942, 0.0
    %v1026 = vmax.f32 %v947, 0.0
    %v1027 = vmax.f32 %v952, 0.0
    %v1028 = vmax.f32 %v957, 0.0
    %v1029 = vmax.f32 %v962, 0.0
    %v1030 = vmax.f32 %v967, 0.0
    %v1031 = vmax.f32 %v972, 0.0
    %v1032 = vmax.f32 %v977, 0.0
    %v1033 = vmax.f32 %v982, 0.0
    %v1034 = vmax.f32 %v987, 0.0
    %v1035 = vmax.f32 %v992, 0.0
    %v1036 = vmax.f32 %v997, 0.0
    %v1037 = vmax.f32 %v1002, 0.0
    %v1038 = vmax.f32 %v1007, 0.0
    %v1039 = vmax.f32 %v1012, 0.0
    %s1040 = scalar_lea.vmem %s2, 256
    %v1041 = vld [vmem:[%s1040] sm:$0xff]
    %v1042 = vld [vmem:[%s1040 + $0x8] sm:$0xff]
    %v1043 = vld [vmem:[%s1040 + $0x10] sm:$0xff]
    %v1044 = vld [vmem:[%s1040 + $0x18] sm:$0xff]
    %v1045 = vld [vmem:[%s1040 + $0x20] sm:$0xff]
    %v1046 = vld [vmem:[%s1040 + $0x28] sm:$0xff]
    %v1047 = vld [vmem:[%s1040 + $0x30] sm:$0xff]
    %v1048 = vld [vmem:[%s1040 + $0x38] sm:$0xff]
    %v1049 = vld [vmem:[%s1040 + $0x40] sm:$0xff]
    %v1050 = vld [vmem:[%s1040 + $0x48] sm:$0xff]
    %v1051 = vld [vmem:[%s1040 + $0x50] sm:$0xff]
    %v1052 = vld [vmem:[%s1040 + $0x58] sm:$0xff]
    %v1053 = vld [vmem:[%s1040 + $0x60] sm:$0xff]
    %v1054 = vld [vmem:[%s1040 + $0x68] sm:$0xff]
    %v1055 = vld [vmem:[%s1040 + $0x70] sm:$0xff]
    %v1056 = vld [vmem:[%s1040 + $0x78] sm:$0xff]
    %s1057 = scalar_lea.vmem %s3, 2
    %v1058 = vld [vmem:[%s1057] sm:$0x1]
    %1059 = vmatprep.subr.mxu0 0.0
    %1060 = vmatpush1.msra.mxu0 %v1041
    %1061 = vmatprep.subr.mxu0 0.0
    %1062 = vmatpush1.msra.mxu0 %v1042
    %1063 = vmatprep.subr.mxu0 0.0
    %1064 = vmatpush1.msra.mxu0 %v1043
    %1065 = vmatprep.subr.mxu0 0.0
    %1066 = vmatpush1.msra.mxu0 %v1044
    %1067 = vmatprep.subr.mxu0 0.0
    %1068 = vmatpush1.msra.mxu0 %v1045
    %1069 = vmatprep.subr.mxu0 0.0
    %1070 = vmatpush1.msra.mxu0 %v1046
    %1071 = vmatprep.subr.mxu0 0.0
    %1072 = vmatpush1.msra.mxu0 %v1047
    %1073 = vmatprep.subr.mxu0 0.0
    %1074 = vmatpush1.msra.mxu0 %v1048
    %1075 = vmatprep.subr.mxu0 0.0
    %1076 = vmatpush1.msra.mxu0 %v1049
    %1077 = vmatprep.subr.mxu0 0.0
    %1078 = vmatpush1.msra.mxu0 %v1050
    %1079 = vmatprep.subr.mxu0 0.0
    %1080 = vmatpush1.msra.mxu0 %v1051
    %1081 = vmatprep.subr.mxu0 0.0
    %1082 = vmatpush1.msra.mxu0 %v1052
    %1083 = vmatprep.subr.mxu0 0.0
    %1084 = vmatpush1.msra.mxu0 %v1053
    %1085 = vmatprep.subr.mxu0 0.0
    %1086 = vmatpush1.msra.mxu0 %v1054
    %1087 = vmatprep.subr.mxu0 0.0
    %1088 = vmatpush1.msra.mxu0 %v1055
    %1089 = vmatprep.subr.mxu0 0.0
    %1090 = vmatpush1.msra.mxu0 %v1056
    %1091 = vmatprep.subr.mxu0 0.0
    %1092 = vmatpush1.msra.mxu0 0.0
    %1093 = vmatprep.subr.mxu0 0.0
    %1094 = vmatpush1.msra.mxu0 0.0
    %1095 = vmatprep.subr.mxu0 0.0
    %1096 = vmatpush1.msra.mxu0 0.0
    %1097 = vmatprep.subr.mxu0 0.0
    %1098 = vmatpush1.msra.mxu0 0.0
    %1099 = vmatprep.subr.mxu0 0.0
    %1100 = vmatpush1.msra.mxu0 0.0
    %1101 = vmatprep.subr.mxu0 0.0
    %1102 = vmatpush1.msra.mxu0 0.0
    %1103 = vmatprep.subr.mxu0 0.0
    %1104 = vmatpush1.msra.mxu0 0.0
    %1105 = vmatprep.subr.mxu0 0.0
    %1106 = vmatpush1.msra.mxu0 0.0
    %1107 = vmatprep.subr.mxu0 0.0
    %1108 = vmatpush1.msra.mxu0 0.0
    %1109 = vmatprep.subr.mxu0 0.0
    %1110 = vmatpush1.msra.mxu0 0.0
    %1111 = vmatprep.subr.mxu0 0.0
    %1112 = vmatpush1.msra.mxu0 0.0
    %1113 = vmatprep.subr.mxu0 0.0
    %1114 = vmatpush1.msra.mxu0 0.0
    %1115 = vmatprep.subr.mxu0 0.0
    %1116 = vmatpush1.msra.mxu0 0.0
    %1117 = vmatprep.subr.mxu0 0.0
    %1118 = vmatpush1.msra.mxu0 0.0
    %1119 = vmatprep.subr.mxu0 0.0
    %1120 = vmatpush1.msra.mxu0 0.0
    %1121 = vmatprep.subr.mxu0 0.0
    %1122 = vmatpush1.msra.mxu0 0.0
    %1123 = vmatprep.mubr.f32.mxu0 0.0
    %1124 = vmatmul.mubr.f32.gmra.mrb[0].mxu0 %v1015
    %v1125 = vpop.f32.mrb[0].mxu0
    %v1126 = vadd.f32 0.0, %v1125
    %v1127 = vpop.f32.mrb[0].mxu0
    %1128 = vmatprep.mubr.f32.mxu0 0.0
    %1129 = vmatmul.mubr.f32.gmra.mrb[0].mxu0 %v1016
    %v1130 = vpop.f32.mrb[0].mxu0
    %v1131 = vadd.f32 0.0, %v1130
    %v1132 = vpop.f32.mrb[0].mxu0
    %1133 = vmatprep.mubr.f32.mxu0 0.0
    %1134 = vmatmul.mubr.f32.gmra.mrb[0].mxu0 %v1017
    %v1135 = vpop.f32.mrb[0].mxu0
    %v1136 = vadd.f32 0.0, %v1135
    %v1137 = vpop.f32.mrb[0].mxu0
    %1138 = vmatprep.mubr.f32.mxu0 0.0
    %1139 = vmatmul.mubr.f32.gmra.mrb[0].mxu0 %v1018
    %v1140 = vpop.f32.mrb[0].mxu0
    %v1141 = vadd.f32 0.0, %v1140
    %v1142 = vpop.f32.mrb[0].mxu0
    %1143 = vmatprep.mubr.f32.mxu0 0.0
    %1144 = vmatmul.mubr.f32.gmra.mrb[0].mxu0 %v1019
    %v1145 = vpop.f32.mrb[0].mxu0
    %v1146 = vadd.f32 0.0, %v1145
    %v1147 = vpop.f32.mrb[0].mxu0
    %1148 = vmatprep.mubr.f32.mxu0 0.0
    %1149 = vmatmul.mubr.f32.gmra.mrb[0].mxu0 %v1020
    %v1150 = vpop.f32.mrb[0].mxu0
    %v1151 = vadd.f32 0.0, %v1150
    %v1152 = vpop.f32.mrb[0].mxu0
    %1153 = vmatprep.mubr.f32.mxu0 0.0
    %1154 = vmatmul.mubr.f32.gmra.mrb[0].mxu0 %v1021
    %v1155 = vpop.f32.mrb[0].mxu0
    %v1156 = vadd.f32 0.0, %v1155
    %v1157 = vpop.f32.mrb[0].mxu0
    %1158 = vmatprep.mubr.f32.mxu0 0.0
    %1159 = vmatmul.mubr.f32.gmra.mrb[0].mxu0 %v1022
    %v1160 = vpop.f32.mrb[0].mxu0
    %v1161 = vadd.f32 0.0, %v1160
    %v1162 = vpop.f32.mrb[0].mxu0
    %1163 = vmatprep.mubr.f32.mxu0 0.0
    %1164 = vmatmul.mubr.f32.gmra.mrb[0].mxu0 %v1023
    %v1165 = vpop.f32.mrb[0].mxu0
    %v1166 = vadd.f32 0.0, %v1165
    %v1167 = vpop.f32.mrb[0].mxu0
    %1168 = vmatprep.mubr.f32.mxu0 0.0
    %1169 = vmatmul.mubr.f32.gmra.mrb[0].mxu0 %v1024
    %v1170 = vpop.f32.mrb[0].mxu0
    %v1171 = vadd.f32 0.0, %v1170
    %v1172 = vpop.f32.mrb[0].mxu0
    %1173 = vmatprep.mubr.f32.mxu0 0.0
    %1174 = vmatmul.mubr.f32.gmra.mrb[0].mxu0 %v1025
    %v1175 = vpop.f32.mrb[0].mxu0
    %v1176 = vadd.f32 0.0, %v1175
    %v1177 = vpop.f32.mrb[0].mxu0
    %1178 = vmatprep.mubr.f32.mxu0 0.0
    %1179 = vmatmul.mubr.f32.gmra.mrb[0].mxu0 %v1026
    %v1180 = vpop.f32.mrb[0].mxu0
    %v1181 = vadd.f32 0.0, %v1180
    %v1182 = vpop.f32.mrb[0].mxu0
    %1183 = vmatprep.mubr.f32.mxu0 0.0
    %1184 = vmatmul.mubr.f32.gmra.mrb[0].mxu0 %v1027
    %v1185 = vpop.f32.mrb[0].mxu0
    %v1186 = vadd.f32 0.0, %v1185
    %v1187 = vpop.f32.mrb[0].mxu0
    %1188 = vmatprep.mubr.f32.mxu0 0.0
    %1189 = vmatmul.mubr.f32.gmra.mrb[0].mxu0 %v1028
    %v1190 = vpop.f32.mrb[0].mxu0
    %v1191 = vadd.f32 0.0, %v1190
    %v1192 = vpop.f32.mrb[0].mxu0
    %1193 = vmatprep.mubr.f32.mxu0 0.0
    %1194 = vmatmul.mubr.f32.gmra.mrb[0].mxu0 %v1029
    %v1195 = vpop.f32.mrb[0].mxu0
    %v1196 = vadd.f32 0.0, %v1195
    %v1197 = vpop.f32.mrb[0].mxu0
    %1198 = vmatprep.mubr.f32.mxu0 0.0
    %1199 = vmatmul.mubr.f32.gmra.mrb[0].mxu0 %v1030
    %v1200 = vpop.f32.mrb[0].mxu0
    %v1201 = vadd.f32 0.0, %v1200
    %v1202 = vpop.f32.mrb[0].mxu0
    %1203 = vmatprep.mubr.f32.mxu0 0.0
    %1204 = vmatmul.mubr.f32.gmra.mrb[0].mxu0 %v1031
    %v1205 = vpop.f32.mrb[0].mxu0
    %v1206 = vadd.f32 0.0, %v1205
    %v1207 = vpop.f32.mrb[0].mxu0
    %1208 = vmatprep.mubr.f32.mxu0 0.0
    %1209 = vmatmul.mubr.f32.gmra.mrb[0].mxu0 %v1032
    %v1210 = vpop.f32.mrb[0].mxu0
    %v1211 = vadd.f32 0.0, %v1210
    %v1212 = vpop.f32.mrb[0].mxu0
    %1213 = vmatprep.mubr.f32.mxu0 0.0
    %1214 = vmatmul.mubr.f32.gmra.mrb[0].mxu0 %v1033
    %v1215 = vpop.f32.mrb[0].mxu0
    %v1216 = vadd.f32 0.0, %v1215
    %v1217 = vpop.f32.mrb[0].mxu0
    %1218 = vmatprep.mubr.f32.mxu0 0.0
    %1219 = vmatmul.mubr.f32.gmra.mrb[0].mxu0 %v1034
    %v1220 = vpop.f32.mrb[0].mxu0
    %v1221 = vadd.f32 0.0, %v1220
    %v1222 = vpop.f32.mrb[0].mxu0
    %1223 = vmatprep.mubr.f32.mxu0 0.0
    %1224 = vmatmul.mubr.f32.gmra.mrb[0].mxu0 %v1035
    %v1225 = vpop.f32.mrb[0].mxu0
    %v1226 = vadd.f32 0.0, %v1225
    %v1227 = vpop.f32.mrb[0].mxu0
    %1228 = vmatprep.mubr.f32.mxu0 0.0
    %1229 = vmatmul.mubr.f32.gmra.mrb[0].mxu0 %v1036
    %v1230 = vpop.f32.mrb[0].mxu0
    %v1231 = vadd.f32 0.0, %v1230
    %v1232 = vpop.f32.mrb[0].mxu0
    %1233 = vmatprep.mubr.f32.mxu0 0.0
    %1234 = vmatmul.mubr.f32.gmra.mrb[0].mxu0 %v1037
    %v1235 = vpop.f32.mrb[0].mxu0
    %v1236 = vadd.f32 0.0, %v1235
    %v1237 = vpop.f32.mrb[0].mxu0
    %1238 = vmatprep.mubr.f32.mxu0 0.0
    %1239 = vmatmul.mubr.f32.gmra.mrb[0].mxu0 %v1038
    %v1240 = vpop.f32.mrb[0].mxu0
    %v1241 = vadd.f32 0.0, %v1240
    %v1242 = vpop.f32.mrb[0].mxu0
    %1243 = vmatprep.mubr.f32.mxu0 0.0
    %1244 = vmatmul.mubr.f32.gmra.mrb[0].mxu0 %v1039
    %v1245 = vpop.f32.mrb[0].mxu0
    %v1246 = vadd.f32 0.0, %v1245
    %v1247 = vpop.f32.mrb[0].mxu0
    %1248 = vdwg.mxu0
    %v1250 = vlaneseq
    %v1251 = vshrl.u32 %v1250, 7
    %v1252 = vsub.s32 0, %v1251
    %v1253 = vrot.slane %v1058, %v1252
    %1255 = vmatprep.subr.mxu0 0.0
    %1256 = vmatpush1.msra.mxu0 %v1126
    %1257 = vmatprep.subr.mxu0 0.0
    %1258 = vmatpush1.msra.mxu0 %v1131
    %1259 = vmatprep.subr.mxu0 0.0
    %1260 = vmatpush1.msra.mxu0 %v1136
    %1261 = vmatprep.subr.mxu0 0.0
    %1262 = vmatpush1.msra.mxu0 %v1141
    %1263 = vmatprep.subr.mxu0 0.0
    %1264 = vmatpush1.msra.mxu0 %v1146
    %1265 = vmatprep.subr.mxu0 0.0
    %1266 = vmatpush1.msra.mxu0 %v1151
    %1267 = vmatprep.subr.mxu0 0.0
    %1268 = vmatpush1.msra.mxu0 %v1156
    %1269 = vmatprep.subr.mxu0 0.0
    %1270 = vmatpush1.msra.mxu0 %v1161
    %1271 = vmatprep.subr.mxu0 0.0
    %1272 = vmatpush1.msra.mxu0 %v1166
    %1273 = vmatprep.subr.mxu0 0.0
    %1274 = vmatpush1.msra.mxu0 %v1171
    %1275 = vmatprep.subr.mxu0 0.0
    %1276 = vmatpush1.msra.mxu0 %v1176
    %1277 = vmatprep.subr.mxu0 0.0
    %1278 = vmatpush1.msra.mxu0 %v1181
    %1279 = vmatprep.subr.mxu0 0.0
    %1280 = vmatpush1.msra.mxu0 %v1186
    %1281 = vmatprep.subr.mxu0 0.0
    %1282 = vmatpush1.msra.mxu0 %v1191
    %1283 = vmatprep.subr.mxu0 0.0
    %1284 = vmatpush1.msra.mxu0 %v1196
    %1285 = vmatprep.subr.mxu0 0.0
    %1286 = vmatpush1.msra.mxu0 %v1201
    %1287 = vmatprep.subr.mxu0 0.0
    %1288 = vmatpush1.msra.mxu0 %v1206
    %1289 = vmatprep.subr.mxu0 0.0
    %1290 = vmatpush1.msra.mxu0 %v1211
    %1291 = vmatprep.subr.mxu0 0.0
    %1292 = vmatpush1.msra.mxu0 %v1216
    %1293 = vmatprep.subr.mxu0 0.0
    %1294 = vmatpush1.msra.mxu0 %v1221
    %1295 = vmatprep.subr.mxu0 0.0
    %1296 = vmatpush1.msra.mxu0 %v1226
    %1297 = vmatprep.subr.mxu0 0.0
    %1298 = vmatpush1.msra.mxu0 %v1231
    %1299 = vmatprep.subr.mxu0 0.0
    %1300 = vmatpush1.msra.mxu0 %v1236
    %1301 = vmatprep.subr.mxu0 0.0
    %1302 = vmatpush1.msra.mxu0 %v1241
    %1303 = vmatprep.subr.mxu0 0.0
    %1304 = vmatpush1.msra.mxu0 %v1246
    %1305 = vmatprep.subr.mxu0 0.0
    %1306 = vmatpush1.msra.mxu0 0.0
    %1307 = vmatprep.subr.mxu0 0.0
    %1308 = vmatpush1.msra.mxu0 0.0
    %1309 = vmatprep.subr.mxu0 0.0
    %1310 = vmatpush1.msra.mxu0 0.0
    %1311 = vmatprep.subr.mxu0 0.0
    %1312 = vmatpush1.msra.mxu0 0.0
    %1313 = vmatprep.subr.mxu0 0.0
    %1314 = vmatpush1.msra.mxu0 0.0
    %1315 = vmatprep.subr.mxu0 0.0
    %1316 = vmatpush1.msra.mxu0 0.0
    %1317 = vmatprep.subr.mxu0 0.0
    %1318 = vmatpush1.msra.mxu0 0.0
    %1319 = vmatprep.mubr.f32.mxu0 %v125
    %1320 = vmatmul.mubr.f32.gmra.mrb[0].mxu0 %v31
    %v1321 = vpop.f32.mrb[0].mxu0
    %v1322 = vadd.f32 %v1253, %v1321
    %v1323 = vpop.f32.mrb[0].mxu0
    %1324 = vmatprep.mubr.f32.mxu0 %v128
    %1325 = vmatmul.mubr.f32.gmra.mrb[0].mxu0 %v33
    %v1326 = vpop.f32.mrb[0].mxu0
    %v1327 = vadd.f32 %v1253, %v1326
    %v1328 = vpop.f32.mrb[0].mxu0
    %1329 = vmatprep.mubr.f32.mxu0 %v131
    %1330 = vmatmul.mubr.f32.gmra.mrb[0].mxu0 %v35
    %v1331 = vpop.f32.mrb[0].mxu0
    %v1332 = vadd.f32 %v1253, %v1331
    %v1333 = vpop.f32.mrb[0].mxu0
    %1334 = vmatprep.mubr.f32.mxu0 %v134
    %1335 = vmatmul.mubr.f32.gmra.mrb[0].mxu0 %v37
    %v1336 = vpop.f32.mrb[0].mxu0
    %v1337 = vadd.f32 %v1253, %v1336
    %v1338 = vpop.f32.mrb[0].mxu0
    %1339 = vmatprep.mubr.f32.mxu0 %v137
    %1340 = vmatmul.mubr.f32.gmra.mrb[0].mxu0 %v39
    %v1341 = vpop.f32.mrb[0].mxu0
    %v1342 = vadd.f32 %v1253, %v1341
    %v1343 = vpop.f32.mrb[0].mxu0
    %1344 = vmatprep.mubr.f32.mxu0 %v140
    %1345 = vmatmul.mubr.f32.gmra.mrb[0].mxu0 %v41
    %v1346 = vpop.f32.mrb[0].mxu0
    %v1347 = vadd.f32 %v1253, %v1346
    %v1348 = vpop.f32.mrb[0].mxu0
    %1349 = vmatprep.mubr.f32.mxu0 %v143
    %1350 = vmatmul.mubr.f32.gmra.mrb[0].mxu0 %v43
    %v1351 = vpop.f32.mrb[0].mxu0
    %v1352 = vadd.f32 %v1253, %v1351
    %v1353 = vpop.f32.mrb[0].mxu0
    %1354 = vmatprep.mubr.f32.mxu0 %v146
    %1355 = vmatmul.mubr.f32.gmra.mrb[0].mxu0 %v45
    %v1356 = vpop.f32.mrb[0].mxu0
    %v1357 = vadd.f32 %v1253, %v1356
    %v1358 = vpop.f32.mrb[0].mxu0
    %1359 = vmatprep.mubr.f32.mxu0 %v149
    %1360 = vmatmul.mubr.f32.gmra.mrb[0].mxu0 %v47
    %v1361 = vpop.f32.mrb[0].mxu0
    %v1362 = vadd.f32 %v1253, %v1361
    %v1363 = vpop.f32.mrb[0].mxu0
    %1364 = vmatprep.mubr.f32.mxu0 %v152
    %1365 = vmatmul.mubr.f32.gmra.mrb[0].mxu0 %v49
    %v1366 = vpop.f32.mrb[0].mxu0
    %v1367 = vadd.f32 %v1253, %v1366
    %v1368 = vpop.f32.mrb[0].mxu0
    %1369 = vmatprep.mubr.f32.mxu0 %v155
    %1370 = vmatmul.mubr.f32.gmra.mrb[0].mxu0 %v51
    %v1371 = vpop.f32.mrb[0].mxu0
    %v1372 = vadd.f32 %v1253, %v1371
    %v1373 = vpop.f32.mrb[0].mxu0
    %1374 = vmatprep.mubr.f32.mxu0 %v158
    %1375 = vmatmul.mubr.f32.gmra.mrb[0].mxu0 %v53
    %v1376 = vpop.f32.mrb[0].mxu0
    %v1377 = vadd.f32 %v1253, %v1376
    %v1378 = vpop.f32.mrb[0].mxu0
    %1379 = vmatprep.mubr.f32.mxu0 %v161
    %1380 = vmatmul.mubr.f32.gmra.mrb[0].mxu0 %v55
    %v1381 = vpop.f32.mrb[0].mxu0
    %v1382 = vadd.f32 %v1253, %v1381
    %v1383 = vpop.f32.mrb[0].mxu0
    %1384 = vmatprep.mubr.f32.mxu0 %v164
    %1385 = vmatmul.mubr.f32.gmra.mrb[0].mxu0 %v57
    %v1386 = vpop.f32.mrb[0].mxu0
    %v1387 = vadd.f32 %v1253, %v1386
    %v1388 = vpop.f32.mrb[0].mxu0
    %1389 = vmatprep.mubr.f32.mxu0 %v167
    %1390 = vmatmul.mubr.f32.gmra.mrb[0].mxu0 %v59
    %v1391 = vpop.f32.mrb[0].mxu0
    %v1392 = vadd.f32 %v1253, %v1391
    %v1393 = vpop.f32.mrb[0].mxu0
    %1394 = vmatprep.mubr.f32.mxu0 %v170
    %1395 = vmatmul.mubr.f32.gmra.mrb[0].mxu0 %v61
    %v1396 = vpop.f32.mrb[0].mxu0
    %v1397 = vadd.f32 %v1253, %v1396
    %v1398 = vpop.f32.mrb[0].mxu0
    %1399 = vmatprep.mubr.f32.mxu0 %v173
    %1400 = vmatmul.mubr.f32.gmra.mrb[0].mxu0 %v63
    %v1401 = vpop.f32.mrb[0].mxu0
    %v1402 = vadd.f32 %v1253, %v1401
    %v1403 = vpop.f32.mrb[0].mxu0
    %1404 = vmatprep.mubr.f32.mxu0 %v176
    %1405 = vmatmul.mubr.f32.gmra.mrb[0].mxu0 %v65
    %v1406 = vpop.f32.mrb[0].mxu0
    %v1407 = vadd.f32 %v1253, %v1406
    %v1408 = vpop.f32.mrb[0].mxu0
    %1409 = vmatprep.mubr.f32.mxu0 %v179
    %1410 = vmatmul.mubr.f32.gmra.mrb[0].mxu0 %v67
    %v1411 = vpop.f32.mrb[0].mxu0
    %v1412 = vadd.f32 %v1253, %v1411
    %v1413 = vpop.f32.mrb[0].mxu0
    %1414 = vmatprep.mubr.f32.mxu0 %v182
    %1415 = vmatmul.mubr.f32.gmra.mrb[0].mxu0 %v69
    %v1416 = vpop.f32.mrb[0].mxu0
    %v1417 = vadd.f32 %v1253, %v1416
    %v1418 = vpop.f32.mrb[0].mxu0
    %1419 = vmatprep.mubr.f32.mxu0 %v185
    %1420 = vmatmul.mubr.f32.gmra.mrb[0].mxu0 %v71
    %v1421 = vpop.f32.mrb[0].mxu0
    %v1422 = vadd.f32 %v1253, %v1421
    %v1423 = vpop.f32.mrb[0].mxu0
    %1424 = vmatprep.mubr.f32.mxu0 %v188
    %1425 = vmatmul.mubr.f32.gmra.mrb[0].mxu0 %v73
    %v1426 = vpop.f32.mrb[0].mxu0
    %v1427 = vadd.f32 %v1253, %v1426
    %v1428 = vpop.f32.mrb[0].mxu0
    %1429 = vmatprep.mubr.f32.mxu0 %v191
    %1430 = vmatmul.mubr.f32.gmra.mrb[0].mxu0 %v75
    %v1431 = vpop.f32.mrb[0].mxu0
    %v1432 = vadd.f32 %v1253, %v1431
    %v1433 = vpop.f32.mrb[0].mxu0
    %1434 = vmatprep.mubr.f32.mxu0 %v194
    %1435 = vmatmul.mubr.f32.gmra.mrb[0].mxu0 %v77
    %v1436 = vpop.f32.mrb[0].mxu0
    %v1437 = vadd.f32 %v1253, %v1436
    %v1438 = vpop.f32.mrb[0].mxu0
    %1439 = vmatprep.mubr.f32.mxu0 %v197
    %1440 = vmatmul.mubr.f32.gmra.mrb[0].mxu0 %v79
    %v1441 = vpop.f32.mrb[0].mxu0
    %v1442 = vadd.f32 %v1253, %v1441
    %v1443 = vpop.f32.mrb[0].mxu0
    %1444 = vdwg.mxu0
    %v1445 = vmax.f32 %v1322, 0.0
    %v1446 = vmax.f32 %v1327, 0.0
    %v1447 = vmax.f32 %v1332, 0.0
    %v1448 = vmax.f32 %v1337, 0.0
    %v1449 = vmax.f32 %v1342, 0.0
    %v1450 = vmax.f32 %v1347, 0.0
    %v1451 = vmax.f32 %v1352, 0.0
    %v1452 = vmax.f32 %v1357, 0.0
    %v1453 = vmax.f32 %v1362, 0.0
    %v1454 = vmax.f32 %v1367, 0.0
    %v1455 = vmax.f32 %v1372, 0.0
    %v1456 = vmax.f32 %v1377, 0.0
    %v1457 = vmax.f32 %v1382, 0.0
    %v1458 = vmax.f32 %v1387, 0.0
    %v1459 = vmax.f32 %v1392, 0.0
    %v1460 = vmax.f32 %v1397, 0.0
    %v1461 = vmax.f32 %v1402, 0.0
    %v1462 = vmax.f32 %v1407, 0.0
    %v1463 = vmax.f32 %v1412, 0.0
    %v1464 = vmax.f32 %v1417, 0.0
    %v1465 = vmax.f32 %v1422, 0.0
    %v1466 = vmax.f32 %v1427, 0.0
    %v1467 = vmax.f32 %v1432, 0.0
    %v1468 = vmax.f32 %v1437, 0.0
    %v1469 = vmax.f32 %v1442, 0.0
    %s1470 = scalar_lea.vmem %s2, 384
    %v1471 = vld [vmem:[%s1470] sm:$0xff]
    %v1472 = vld [vmem:[%s1470 + $0x8] sm:$0xff]
    %v1473 = vld [vmem:[%s1470 + $0x10] sm:$0xff]
    %v1474 = vld [vmem:[%s1470 + $0x18] sm:$0xff]
    %v1475 = vld [vmem:[%s1470 + $0x20] sm:$0xff]
    %v1476 = vld [vmem:[%s1470 + $0x28] sm:$0xff]
    %v1477 = vld [vmem:[%s1470 + $0x30] sm:$0xff]
    %v1478 = vld [vmem:[%s1470 + $0x38] sm:$0xff]
    %v1479 = vld [vmem:[%s1470 + $0x40] sm:$0xff]
    %v1480 = vld [vmem:[%s1470 + $0x48] sm:$0xff]
    %v1481 = vld [vmem:[%s1470 + $0x50] sm:$0xff]
    %v1482 = vld [vmem:[%s1470 + $0x58] sm:$0xff]
    %v1483 = vld [vmem:[%s1470 + $0x60] sm:$0xff]
    %v1484 = vld [vmem:[%s1470 + $0x68] sm:$0xff]
    %v1485 = vld [vmem:[%s1470 + $0x70] sm:$0xff]
    %v1486 = vld [vmem:[%s1470 + $0x78] sm:$0xff]
    %s1487 = scalar_lea.vmem %s3, 3
    %v1488 = vld [vmem:[%s1487] sm:$0x1]
    %1489 = vmatprep.subr.mxu0 0.0
    %1490 = vmatpush1.msra.mxu0 %v1471
    %1491 = vmatprep.subr.mxu0 0.0
    %1492 = vmatpush1.msra.mxu0 %v1472
    %1493 = vmatprep.subr.mxu0 0.0
    %1494 = vmatpush1.msra.mxu0 %v1473
    %1495 = vmatprep.subr.mxu0 0.0
    %1496 = vmatpush1.msra.mxu0 %v1474
    %1497 = vmatprep.subr.mxu0 0.0
    %1498 = vmatpush1.msra.mxu0 %v1475
    %1499 = vmatprep.subr.mxu0 0.0
    %1500 = vmatpush1.msra.mxu0 %v1476
    %1501 = vmatprep.subr.mxu0 0.0
    %1502 = vmatpush1.msra.mxu0 %v1477
    %1503 = vmatprep.subr.mxu0 0.0
    %1504 = vmatpush1.msra.mxu0 %v1478
    %1505 = vmatprep.subr.mxu0 0.0
    %1506 = vmatpush1.msra.mxu0 %v1479
    %1507 = vmatprep.subr.mxu0 0.0
    %1508 = vmatpush1.msra.mxu0 %v1480
    %1509 = vmatprep.subr.mxu0 0.0
    %1510 = vmatpush1.msra.mxu0 %v1481
    %1511 = vmatprep.subr.mxu0 0.0
    %1512 = vmatpush1.msra.mxu0 %v1482
    %1513 = vmatprep.subr.mxu0 0.0
    %1514 = vmatpush1.msra.mxu0 %v1483
    %1515 = vmatprep.subr.mxu0 0.0
    %1516 = vmatpush1.msra.mxu0 %v1484
    %1517 = vmatprep.subr.mxu0 0.0
    %1518 = vmatpush1.msra.mxu0 %v1485
    %1519 = vmatprep.subr.mxu0 0.0
    %1520 = vmatpush1.msra.mxu0 %v1486
    %1521 = vmatprep.subr.mxu0 0.0
    %1522 = vmatpush1.msra.mxu0 0.0
    %1523 = vmatprep.subr.mxu0 0.0
    %1524 = vmatpush1.msra.mxu0 0.0
    %1525 = vmatprep.subr.mxu0 0.0
    %1526 = vmatpush1.msra.mxu0 0.0
    %1527 = vmatprep.subr.mxu0 0.0
    %1528 = vmatpush1.msra.mxu0 0.0
    %1529 = vmatprep.subr.mxu0 0.0
    %1530 = vmatpush1.msra.mxu0 0.0
    %1531 = vmatprep.subr.mxu0 0.0
    %1532 = vmatpush1.msra.mxu0 0.0
    %1533 = vmatprep.subr.mxu0 0.0
    %1534 = vmatpush1.msra.mxu0 0.0
    %1535 = vmatprep.subr.mxu0 0.0
    %1536 = vmatpush1.msra.mxu0 0.0
    %1537 = vmatprep.subr.mxu0 0.0
    %1538 = vmatpush1.msra.mxu0 0.0
    %1539 = vmatprep.subr.mxu0 0.0
    %1540 = vmatpush1.msra.mxu0 0.0
    %1541 = vmatprep.subr.mxu0 0.0
    %1542 = vmatpush1.msra.mxu0 0.0
    %1543 = vmatprep.subr.mxu0 0.0
    %1544 = vmatpush1.msra.mxu0 0.0
    %1545 = vmatprep.subr.mxu0 0.0
    %1546 = vmatpush1.msra.mxu0 0.0
    %1547 = vmatprep.subr.mxu0 0.0
    %1548 = vmatpush1.msra.mxu0 0.0
    %1549 = vmatprep.subr.mxu0 0.0
    %1550 = vmatpush1.msra.mxu0 0.0
    %1551 = vmatprep.subr.mxu0 0.0
    %1552 = vmatpush1.msra.mxu0 0.0
    %1553 = vmatprep.mubr.f32.mxu0 0.0
    %1554 = vmatmul.mubr.f32.gmra.mrb[0].mxu0 %v1445
    %v1555 = vpop.f32.mrb[0].mxu0
    %v1556 = vadd.f32 0.0, %v1555
    %v1557 = vpop.f32.mrb[0].mxu0
    %1558 = vmatprep.mubr.f32.mxu0 0.0
    %1559 = vmatmul.mubr.f32.gmra.mrb[0].mxu0 %v1446
    %v1560 = vpop.f32.mrb[0].mxu0
    %v1561 = vadd.f32 0.0, %v1560
    %v1562 = vpop.f32.mrb[0].mxu0
    %1563 = vmatprep.mubr.f32.mxu0 0.0
    %1564 = vmatmul.mubr.f32.gmra.mrb[0].mxu0 %v1447
    %v1565 = vpop.f32.mrb[0].mxu0
    %v1566 = vadd.f32 0.0, %v1565
    %v1567 = vpop.f32.mrb[0].mxu0
    %1568 = vmatprep.mubr.f32.mxu0 0.0
    %1569 = vmatmul.mubr.f32.gmra.mrb[0].mxu0 %v1448
    %v1570 = vpop.f32.mrb[0].mxu0
    %v1571 = vadd.f32 0.0, %v1570
    %v1572 = vpop.f32.mrb[0].mxu0
    %1573 = vmatprep.mubr.f32.mxu0 0.0
    %1574 = vmatmul.mubr.f32.gmra.mrb[0].mxu0 %v1449
    %v1575 = vpop.f32.mrb[0].mxu0
    %v1576 = vadd.f32 0.0, %v1575
    %v1577 = vpop.f32.mrb[0].mxu0
    %1578 = vmatprep.mubr.f32.mxu0 0.0
    %1579 = vmatmul.mubr.f32.gmra.mrb[0].mxu0 %v1450
    %v1580 = vpop.f32.mrb[0].mxu0
    %v1581 = vadd.f32 0.0, %v1580
    %v1582 = vpop.f32.mrb[0].mxu0
    %1583 = vmatprep.mubr.f32.mxu0 0.0
    %1584 = vmatmul.mubr.f32.gmra.mrb[0].mxu0 %v1451
    %v1585 = vpop.f32.mrb[0].mxu0
    %v1586 = vadd.f32 0.0, %v1585
    %v1587 = vpop.f32.mrb[0].mxu0
    %1588 = vmatprep.mubr.f32.mxu0 0.0
    %1589 = vmatmul.mubr.f32.gmra.mrb[0].mxu0 %v1452
    %v1590 = vpop.f32.mrb[0].mxu0
    %v1591 = vadd.f32 0.0, %v1590
    %v1592 = vpop.f32.mrb[0].mxu0
    %1593 = vmatprep.mubr.f32.mxu0 0.0
    %1594 = vmatmul.mubr.f32.gmra.mrb[0].mxu0 %v1453
    %v1595 = vpop.f32.mrb[0].mxu0
    %v1596 = vadd.f32 0.0, %v1595
    %v1597 = vpop.f32.mrb[0].mxu0
    %1598 = vmatprep.mubr.f32.mxu0 0.0
    %1599 = vmatmul.mubr.f32.gmra.mrb[0].mxu0 %v1454
    %v1600 = vpop.f32.mrb[0].mxu0
    %v1601 = vadd.f32 0.0, %v1600
    %v1602 = vpop.f32.mrb[0].mxu0
    %1603 = vmatprep.mubr.f32.mxu0 0.0
    %1604 = vmatmul.mubr.f32.gmra.mrb[0].mxu0 %v1455
    %v1605 = vpop.f32.mrb[0].mxu0
    %v1606 = vadd.f32 0.0, %v1605
    %v1607 = vpop.f32.mrb[0].mxu0
    %1608 = vmatprep.mubr.f32.mxu0 0.0
    %1609 = vmatmul.mubr.f32.gmra.mrb[0].mxu0 %v1456
    %v1610 = vpop.f32.mrb[0].mxu0
    %v1611 = vadd.f32 0.0, %v1610
    %v1612 = vpop.f32.mrb[0].mxu0
    %1613 = vmatprep.mubr.f32.mxu0 0.0
    %1614 = vmatmul.mubr.f32.gmra.mrb[0].mxu0 %v1457
    %v1615 = vpop.f32.mrb[0].mxu0
    %v1616 = vadd.f32 0.0, %v1615
    %v1617 = vpop.f32.mrb[0].mxu0
    %1618 = vmatprep.mubr.f32.mxu0 0.0
    %1619 = vmatmul.mubr.f32.gmra.mrb[0].mxu0 %v1458
    %v1620 = vpop.f32.mrb[0].mxu0
    %v1621 = vadd.f32 0.0, %v1620
    %v1622 = vpop.f32.mrb[0].mxu0
    %1623 = vmatprep.mubr.f32.mxu0 0.0
    %1624 = vmatmul.mubr.f32.gmra.mrb[0].mxu0 %v1459
    %v1625 = vpop.f32.mrb[0].mxu0
    %v1626 = vadd.f32 0.0, %v1625
    %v1627 = vpop.f32.mrb[0].mxu0
    %1628 = vmatprep.mubr.f32.mxu0 0.0
    %1629 = vmatmul.mubr.f32.gmra.mrb[0].mxu0 %v1460
    %v1630 = vpop.f32.mrb[0].mxu0
    %v1631 = vadd.f32 0.0, %v1630
    %v1632 = vpop.f32.mrb[0].mxu0
    %1633 = vmatprep.mubr.f32.mxu0 0.0
    %1634 = vmatmul.mubr.f32.gmra.mrb[0].mxu0 %v1461
    %v1635 = vpop.f32.mrb[0].mxu0
    %v1636 = vadd.f32 0.0, %v1635
    %v1637 = vpop.f32.mrb[0].mxu0
    %1638 = vmatprep.mubr.f32.mxu0 0.0
    %1639 = vmatmul.mubr.f32.gmra.mrb[0].mxu0 %v1462
    %v1640 = vpop.f32.mrb[0].mxu0
    %v1641 = vadd.f32 0.0, %v1640
    %v1642 = vpop.f32.mrb[0].mxu0
    %1643 = vmatprep.mubr.f32.mxu0 0.0
    %1644 = vmatmul.mubr.f32.gmra.mrb[0].mxu0 %v1463
    %v1645 = vpop.f32.mrb[0].mxu0
    %v1646 = vadd.f32 0.0, %v1645
    %v1647 = vpop.f32.mrb[0].mxu0
    %1648 = vmatprep.mubr.f32.mxu0 0.0
    %1649 = vmatmul.mubr.f32.gmra.mrb[0].mxu0 %v1464
    %v1650 = vpop.f32.mrb[0].mxu0
    %v1651 = vadd.f32 0.0, %v1650
    %v1652 = vpop.f32.mrb[0].mxu0
    %1653 = vmatprep.mubr.f32.mxu0 0.0
    %1654 = vmatmul.mubr.f32.gmra.mrb[0].mxu0 %v1465
    %v1655 = vpop.f32.mrb[0].mxu0
    %v1656 = vadd.f32 0.0, %v1655
    %v1657 = vpop.f32.mrb[0].mxu0
    %1658 = vmatprep.mubr.f32.mxu0 0.0
    %1659 = vmatmul.mubr.f32.gmra.mrb[0].mxu0 %v1466
    %v1660 = vpop.f32.mrb[0].mxu0
    %v1661 = vadd.f32 0.0, %v1660
    %v1662 = vpop.f32.mrb[0].mxu0
    %1663 = vmatprep.mubr.f32.mxu0 0.0
    %1664 = vmatmul.mubr.f32.gmra.mrb[0].mxu0 %v1467
    %v1665 = vpop.f32.mrb[0].mxu0
    %v1666 = vadd.f32 0.0, %v1665
    %v1667 = vpop.f32.mrb[0].mxu0
    %1668 = vmatprep.mubr.f32.mxu0 0.0
    %1669 = vmatmul.mubr.f32.gmra.mrb[0].mxu0 %v1468
    %v1670 = vpop.f32.mrb[0].mxu0
    %v1671 = vadd.f32 0.0, %v1670
    %v1672 = vpop.f32.mrb[0].mxu0
    %1673 = vmatprep.mubr.f32.mxu0 0.0
    %1674 = vmatmul.mubr.f32.gmra.mrb[0].mxu0 %v1469
    %v1675 = vpop.f32.mrb[0].mxu0
    %v1676 = vadd.f32 0.0, %v1675
    %v1677 = vpop.f32.mrb[0].mxu0
    %1678 = vdwg.mxu0
    %v1680 = vlaneseq
    %v1681 = vshrl.u32 %v1680, 7
    %v1682 = vsub.s32 0, %v1681
    %v1683 = vrot.slane %v1488, %v1682
    %1685 = vmatprep.subr.mxu0 0.0
    %1686 = vmatpush1.msra.mxu0 %v1556
    %1687 = vmatprep.subr.mxu0 0.0
    %1688 = vmatpush1.msra.mxu0 %v1561
    %1689 = vmatprep.subr.mxu0 0.0
    %1690 = vmatpush1.msra.mxu0 %v1566
    %1691 = vmatprep.subr.mxu0 0.0
    %1692 = vmatpush1.msra.mxu0 %v1571
    %1693 = vmatprep.subr.mxu0 0.0
    %1694 = vmatpush1.msra.mxu0 %v1576
    %1695 = vmatprep.subr.mxu0 0.0
    %1696 = vmatpush1.msra.mxu0 %v1581
    %1697 = vmatprep.subr.mxu0 0.0
    %1698 = vmatpush1.msra.mxu0 %v1586
    %1699 = vmatprep.subr.mxu0 0.0
    %1700 = vmatpush1.msra.mxu0 %v1591
    %1701 = vmatprep.subr.mxu0 0.0
    %1702 = vmatpush1.msra.mxu0 %v1596
    %1703 = vmatprep.subr.mxu0 0.0
    %1704 = vmatpush1.msra.mxu0 %v1601
    %1705 = vmatprep.subr.mxu0 0.0
    %1706 = vmatpush1.msra.mxu0 %v1606
    %1707 = vmatprep.subr.mxu0 0.0
    %1708 = vmatpush1.msra.mxu0 %v1611
    %1709 = vmatprep.subr.mxu0 0.0
    %1710 = vmatpush1.msra.mxu0 %v1616
    %1711 = vmatprep.subr.mxu0 0.0
    %1712 = vmatpush1.msra.mxu0 %v1621
    %1713 = vmatprep.subr.mxu0 0.0
    %1714 = vmatpush1.msra.mxu0 %v1626
    %1715 = vmatprep.subr.mxu0 0.0
    %1716 = vmatpush1.msra.mxu0 %v1631
    %1717 = vmatprep.subr.mxu0 0.0
    %1718 = vmatpush1.msra.mxu0 %v1636
    %1719 = vmatprep.subr.mxu0 0.0
    %1720 = vmatpush1.msra.mxu0 %v1641
    %1721 = vmatprep.subr.mxu0 0.0
    %1722 = vmatpush1.msra.mxu0 %v1646
    %1723 = vmatprep.subr.mxu0 0.0
    %1724 = vmatpush1.msra.mxu0 %v1651
    %1725 = vmatprep.subr.mxu0 0.0
    %1726 = vmatpush1.msra.mxu0 %v1656
    %1727 = vmatprep.subr.mxu0 0.0
    %1728 = vmatpush1.msra.mxu0 %v1661
    %1729 = vmatprep.subr.mxu0 0.0
    %1730 = vmatpush1.msra.mxu0 %v1666
    %1731 = vmatprep.subr.mxu0 0.0
    %1732 = vmatpush1.msra.mxu0 %v1671
    %1733 = vmatprep.subr.mxu0 0.0
    %1734 = vmatpush1.msra.mxu0 %v1676
    %1735 = vmatprep.subr.mxu0 0.0
    %1736 = vmatpush1.msra.mxu0 0.0
    %1737 = vmatprep.subr.mxu0 0.0
    %1738 = vmatpush1.msra.mxu0 0.0
    %1739 = vmatprep.subr.mxu0 0.0
    %1740 = vmatpush1.msra.mxu0 0.0
    %1741 = vmatprep.subr.mxu0 0.0
    %1742 = vmatpush1.msra.mxu0 0.0
    %1743 = vmatprep.subr.mxu0 0.0
    %1744 = vmatpush1.msra.mxu0 0.0
    %1745 = vmatprep.subr.mxu0 0.0
    %1746 = vmatpush1.msra.mxu0 0.0
    %1747 = vmatprep.subr.mxu0 0.0
    %1748 = vmatpush1.msra.mxu0 0.0
    %1749 = vmatprep.mubr.f32.mxu0 %v125
    %1750 = vmatmul.mubr.f32.gmra.mrb[0].mxu0 %v31
    %v1751 = vpop.f32.mrb[0].mxu0
    %v1752 = vadd.f32 %v1683, %v1751
    %v1753 = vpop.f32.mrb[0].mxu0
    %1754 = vmatprep.mubr.f32.mxu0 %v128
    %1755 = vmatmul.mubr.f32.gmra.mrb[0].mxu0 %v33
    %v1756 = vpop.f32.mrb[0].mxu0
    %v1757 = vadd.f32 %v1683, %v1756
    %v1758 = vpop.f32.mrb[0].mxu0
    %1759 = vmatprep.mubr.f32.mxu0 %v131
    %1760 = vmatmul.mubr.f32.gmra.mrb[0].mxu0 %v35
    %v1761 = vpop.f32.mrb[0].mxu0
    %v1762 = vadd.f32 %v1683, %v1761
    %v1763 = vpop.f32.mrb[0].mxu0
    %1764 = vmatprep.mubr.f32.mxu0 %v134
    %1765 = vmatmul.mubr.f32.gmra.mrb[0].mxu0 %v37
    %v1766 = vpop.f32.mrb[0].mxu0
    %v1767 = vadd.f32 %v1683, %v1766
    %v1768 = vpop.f32.mrb[0].mxu0
    %1769 = vmatprep.mubr.f32.mxu0 %v137
    %1770 = vmatmul.mubr.f32.gmra.mrb[0].mxu0 %v39
    %v1771 = vpop.f32.mrb[0].mxu0
    %v1772 = vadd.f32 %v1683, %v1771
    %v1773 = vpop.f32.mrb[0].mxu0
    %1774 = vmatprep.mubr.f32.mxu0 %v140
    %1775 = vmatmul.mubr.f32.gmra.mrb[0].mxu0 %v41
    %v1776 = vpop.f32.mrb[0].mxu0
    %v1777 = vadd.f32 %v1683, %v1776
    %v1778 = vpop.f32.mrb[0].mxu0
    %1779 = vmatprep.mubr.f32.mxu0 %v143
    %1780 = vmatmul.mubr.f32.gmra.mrb[0].mxu0 %v43
    %v1781 = vpop.f32.mrb[0].mxu0
    %v1782 = vadd.f32 %v1683, %v1781
    %v1783 = vpop.f32.mrb[0].mxu0
    %1784 = vmatprep.mubr.f32.mxu0 %v146
    %1785 = vmatmul.mubr.f32.gmra.mrb[0].mxu0 %v45
    %v1786 = vpop.f32.mrb[0].mxu0
    %v1787 = vadd.f32 %v1683, %v1786
    %v1788 = vpop.f32.mrb[0].mxu0
    %1789 = vmatprep.mubr.f32.mxu0 %v149
    %1790 = vmatmul.mubr.f32.gmra.mrb[0].mxu0 %v47
    %v1791 = vpop.f32.mrb[0].mxu0
    %v1792 = vadd.f32 %v1683, %v1791
    %v1793 = vpop.f32.mrb[0].mxu0
    %1794 = vmatprep.mubr.f32.mxu0 %v152
    %1795 = vmatmul.mubr.f32.gmra.mrb[0].mxu0 %v49
    %v1796 = vpop.f32.mrb[0].mxu0
    %v1797 = vadd.f32 %v1683, %v1796
    %v1798 = vpop.f32.mrb[0].mxu0
    %1799 = vmatprep.mubr.f32.mxu0 %v155
    %1800 = vmatmul.mubr.f32.gmra.mrb[0].mxu0 %v51
    %v1801 = vpop.f32.mrb[0].mxu0
    %v1802 = vadd.f32 %v1683, %v1801
    %v1803 = vpop.f32.mrb[0].mxu0
    %1804 = vmatprep.mubr.f32.mxu0 %v158
    %1805 = vmatmul.mubr.f32.gmra.mrb[0].mxu0 %v53
    %v1806 = vpop.f32.mrb[0].mxu0
    %v1807 = vadd.f32 %v1683, %v1806
    %v1808 = vpop.f32.mrb[0].mxu0
    %1809 = vmatprep.mubr.f32.mxu0 %v161
    %1810 = vmatmul.mubr.f32.gmra.mrb[0].mxu0 %v55
    %v1811 = vpop.f32.mrb[0].mxu0
    %v1812 = vadd.f32 %v1683, %v1811
    %v1813 = vpop.f32.mrb[0].mxu0
    %1814 = vmatprep.mubr.f32.mxu0 %v164
    %1815 = vmatmul.mubr.f32.gmra.mrb[0].mxu0 %v57
    %v1816 = vpop.f32.mrb[0].mxu0
    %v1817 = vadd.f32 %v1683, %v1816
    %v1818 = vpop.f32.mrb[0].mxu0
    %1819 = vmatprep.mubr.f32.mxu0 %v167
    %1820 = vmatmul.mubr.f32.gmra.mrb[0].mxu0 %v59
    %v1821 = vpop.f32.mrb[0].mxu0
    %v1822 = vadd.f32 %v1683, %v1821
    %v1823 = vpop.f32.mrb[0].mxu0
    %1824 = vmatprep.mubr.f32.mxu0 %v170
    %1825 = vmatmul.mubr.f32.gmra.mrb[0].mxu0 %v61
    %v1826 = vpop.f32.mrb[0].mxu0
    %v1827 = vadd.f32 %v1683, %v1826
    %v1828 = vpop.f32.mrb[0].mxu0
    %1829 = vmatprep.mubr.f32.mxu0 %v173
    %1830 = vmatmul.mubr.f32.gmra.mrb[0].mxu0 %v63
    %v1831 = vpop.f32.mrb[0].mxu0
    %v1832 = vadd.f32 %v1683, %v1831
    %v1833 = vpop.f32.mrb[0].mxu0
    %1834 = vmatprep.mubr.f32.mxu0 %v176
    %1835 = vmatmul.mubr.f32.gmra.mrb[0].mxu0 %v65
    %v1836 = vpop.f32.mrb[0].mxu0
    %v1837 = vadd.f32 %v1683, %v1836
    %v1838 = vpop.f32.mrb[0].mxu0
    %1839 = vmatprep.mubr.f32.mxu0 %v179
    %1840 = vmatmul.mubr.f32.gmra.mrb[0].mxu0 %v67
    %v1841 = vpop.f32.mrb[0].mxu0
    %v1842 = vadd.f32 %v1683, %v1841
    %v1843 = vpop.f32.mrb[0].mxu0
    %1844 = vmatprep.mubr.f32.mxu0 %v182
    %1845 = vmatmul.mubr.f32.gmra.mrb[0].mxu0 %v69
    %v1846 = vpop.f32.mrb[0].mxu0
    %v1847 = vadd.f32 %v1683, %v1846
    %v1848 = vpop.f32.mrb[0].mxu0
    %1849 = vmatprep.mubr.f32.mxu0 %v185
    %1850 = vmatmul.mubr.f32.gmra.mrb[0].mxu0 %v71
    %v1851 = vpop.f32.mrb[0].mxu0
    %v1852 = vadd.f32 %v1683, %v1851
    %v1853 = vpop.f32.mrb[0].mxu0
    %1854 = vmatprep.mubr.f32.mxu0 %v188
    %1855 = vmatmul.mubr.f32.gmra.mrb[0].mxu0 %v73
    %v1856 = vpop.f32.mrb[0].mxu0
    %v1857 = vadd.f32 %v1683, %v1856
    %v1858 = vpop.f32.mrb[0].mxu0
    %1859 = vmatprep.mubr.f32.mxu0 %v191
    %1860 = vmatmul.mubr.f32.gmra.mrb[0].mxu0 %v75
    %v1861 = vpop.f32.mrb[0].mxu0
    %v1862 = vadd.f32 %v1683, %v1861
    %v1863 = vpop.f32.mrb[0].mxu0
    %1864 = vmatprep.mubr.f32.mxu0 %v194
    %1865 = vmatmul.mubr.f32.gmra.mrb[0].mxu0 %v77
    %v1866 = vpop.f32.mrb[0].mxu0
    %v1867 = vadd.f32 %v1683, %v1866
    %v1868 = vpop.f32.mrb[0].mxu0
    %1869 = vmatprep.mubr.f32.mxu0 %v197
    %1870 = vmatmul.mubr.f32.gmra.mrb[0].mxu0 %v79
    %v1871 = vpop.f32.mrb[0].mxu0
    %v1872 = vadd.f32 %v1683, %v1871
    %v1873 = vpop.f32.mrb[0].mxu0
    %1874 = vdwg.mxu0
    %v1875 = vmax.f32 %v1752, 0.0
    %v1876 = vmax.f32 %v1757, 0.0
    %v1877 = vmax.f32 %v1762, 0.0
    %v1878 = vmax.f32 %v1767, 0.0
    %v1879 = vmax.f32 %v1772, 0.0
    %v1880 = vmax.f32 %v1777, 0.0
    %v1881 = vmax.f32 %v1782, 0.0
    %v1882 = vmax.f32 %v1787, 0.0
    %v1883 = vmax.f32 %v1792, 0.0
    %v1884 = vmax.f32 %v1797, 0.0
    %v1885 = vmax.f32 %v1802, 0.0
    %v1886 = vmax.f32 %v1807, 0.0
    %v1887 = vmax.f32 %v1812, 0.0
    %v1888 = vmax.f32 %v1817, 0.0
    %v1889 = vmax.f32 %v1822, 0.0
    %v1890 = vmax.f32 %v1827, 0.0
    %v1891 = vmax.f32 %v1832, 0.0
    %v1892 = vmax.f32 %v1837, 0.0
    %v1893 = vmax.f32 %v1842, 0.0
    %v1894 = vmax.f32 %v1847, 0.0
    %v1895 = vmax.f32 %v1852, 0.0
    %v1896 = vmax.f32 %v1857, 0.0
    %v1897 = vmax.f32 %v1862, 0.0
    %v1898 = vmax.f32 %v1867, 0.0
    %v1899 = vmax.f32 %v1872, 0.0
    %s1900 = scalar_lea.vmem %s2, 512
    %v1901 = vld [vmem:[%s1900] sm:$0xff]
    %v1902 = vld [vmem:[%s1900 + $0x8] sm:$0xff]
    %v1903 = vld [vmem:[%s1900 + $0x10] sm:$0xff]
    %v1904 = vld [vmem:[%s1900 + $0x18] sm:$0xff]
    %v1905 = vld [vmem:[%s1900 + $0x20] sm:$0xff]
    %v1906 = vld [vmem:[%s1900 + $0x28] sm:$0xff]
    %v1907 = vld [vmem:[%s1900 + $0x30] sm:$0xff]
    %v1908 = vld [vmem:[%s1900 + $0x38] sm:$0xff]
    %v1909 = vld [vmem:[%s1900 + $0x40] sm:$0xff]
    %v1910 = vld [vmem:[%s1900 + $0x48] sm:$0xff]
    %v1911 = vld [vmem:[%s1900 + $0x50] sm:$0xff]
    %v1912 = vld [vmem:[%s1900 + $0x58] sm:$0xff]
    %v1913 = vld [vmem:[%s1900 + $0x60] sm:$0xff]
    %v1914 = vld [vmem:[%s1900 + $0x68] sm:$0xff]
    %v1915 = vld [vmem:[%s1900 + $0x70] sm:$0xff]
    %v1916 = vld [vmem:[%s1900 + $0x78] sm:$0xff]
    %s1917 = scalar_lea.vmem %s3, 4
    %v1918 = vld [vmem:[%s1917] sm:$0x1]
    %1919 = vmatprep.subr.mxu0 0.0
    %1920 = vmatpush1.msra.mxu0 %v1901
    %1921 = vmatprep.subr.mxu0 0.0
    %1922 = vmatpush1.msra.mxu0 %v1902
    %1923 = vmatprep.subr.mxu0 0.0
    %1924 = vmatpush1.msra.mxu0 %v1903
    %1925 = vmatprep.subr.mxu0 0.0
    %1926 = vmatpush1.msra.mxu0 %v1904
    %1927 = vmatprep.subr.mxu0 0.0
    %1928 = vmatpush1.msra.mxu0 %v1905
    %1929 = vmatprep.subr.mxu0 0.0
    %1930 = vmatpush1.msra.mxu0 %v1906
    %1931 = vmatprep.subr.mxu0 0.0
    %1932 = vmatpush1.msra.mxu0 %v1907
    %1933 = vmatprep.subr.mxu0 0.0
    %1934 = vmatpush1.msra.mxu0 %v1908
    %1935 = vmatprep.subr.mxu0 0.0
    %1936 = vmatpush1.msra.mxu0 %v1909
    %1937 = vmatprep.subr.mxu0 0.0
    %1938 = vmatpush1.msra.mxu0 %v1910
    %1939 = vmatprep.subr.mxu0 0.0
    %1940 = vmatpush1.msra.mxu0 %v1911
    %1941 = vmatprep.subr.mxu0 0.0
    %1942 = vmatpush1.msra.mxu0 %v1912
    %1943 = vmatprep.subr.mxu0 0.0
    %1944 = vmatpush1.msra.mxu0 %v1913
    %1945 = vmatprep.subr.mxu0 0.0
    %1946 = vmatpush1.msra.mxu0 %v1914
    %1947 = vmatprep.subr.mxu0 0.0
    %1948 = vmatpush1.msra.mxu0 %v1915
    %1949 = vmatprep.subr.mxu0 0.0
    %1950 = vmatpush1.msra.mxu0 %v1916
    %1951 = vmatprep.subr.mxu0 0.0
    %1952 = vmatpush1.msra.mxu0 0.0
    %1953 = vmatprep.subr.mxu0 0.0
    %1954 = vmatpush1.msra.mxu0 0.0
    %1955 = vmatprep.subr.mxu0 0.0
    %1956 = vmatpush1.msra.mxu0 0.0
    %1957 = vmatprep.subr.mxu0 0.0
    %1958 = vmatpush1.msra.mxu0 0.0
    %1959 = vmatprep.subr.mxu0 0.0
    %1960 = vmatpush1.msra.mxu0 0.0
    %1961 = vmatprep.subr.mxu0 0.0
    %1962 = vmatpush1.msra.mxu0 0.0
    %1963 = vmatprep.subr.mxu0 0.0
    %1964 = vmatpush1.msra.mxu0 0.0
    %1965 = vmatprep.subr.mxu0 0.0
    %1966 = vmatpush1.msra.mxu0 0.0
    %1967 = vmatprep.subr.mxu0 0.0
    %1968 = vmatpush1.msra.mxu0 0.0
    %1969 = vmatprep.subr.mxu0 0.0
    %1970 = vmatpush1.msra.mxu0 0.0
    %1971 = vmatprep.subr.mxu0 0.0
    %1972 = vmatpush1.msra.mxu0 0.0
    %1973 = vmatprep.subr.mxu0 0.0
    %1974 = vmatpush1.msra.mxu0 0.0
    %1975 = vmatprep.subr.mxu0 0.0
    %1976 = vmatpush1.msra.mxu0 0.0
    %1977 = vmatprep.subr.mxu0 0.0
    %1978 = vmatpush1.msra.mxu0 0.0
    %1979 = vmatprep.subr.mxu0 0.0
    %1980 = vmatpush1.msra.mxu0 0.0
    %1981 = vmatprep.subr.mxu0 0.0
    %1982 = vmatpush1.msra.mxu0 0.0
    %1983 = vmatprep.mubr.f32.mxu0 0.0
    %1984 = vmatmul.mubr.f32.gmra.mrb[0].mxu0 %v1875
    %v1985 = vpop.f32.mrb[0].mxu0
    %v1986 = vadd.f32 0.0, %v1985
    %v1987 = vpop.f32.mrb[0].mxu0
    %1988 = vmatprep.mubr.f32.mxu0 0.0
    %1989 = vmatmul.mubr.f32.gmra.mrb[0].mxu0 %v1876
    %v1990 = vpop.f32.mrb[0].mxu0
    %v1991 = vadd.f32 0.0, %v1990
    %v1992 = vpop.f32.mrb[0].mxu0
    %1993 = vmatprep.mubr.f32.mxu0 0.0
    %1994 = vmatmul.mubr.f32.gmra.mrb[0].mxu0 %v1877
    %v1995 = vpop.f32.mrb[0].mxu0
    %v1996 = vadd.f32 0.0, %v1995
    %v1997 = vpop.f32.mrb[0].mxu0
    %1998 = vmatprep.mubr.f32.mxu0 0.0
    %1999 = vmatmul.mubr.f32.gmra.mrb[0].mxu0 %v1878
    %v2000 = vpop.f32.mrb[0].mxu0
    %v2001 = vadd.f32 0.0, %v2000
    %v2002 = vpop.f32.mrb[0].mxu0
    %2003 = vmatprep.mubr.f32.mxu0 0.0
    %2004 = vmatmul.mubr.f32.gmra.mrb[0].mxu0 %v1879
    %v2005 = vpop.f32.mrb[0].mxu0
    %v2006 = vadd.f32 0.0, %v2005
    %v2007 = vpop.f32.mrb[0].mxu0
    %2008 = vmatprep.mubr.f32.mxu0 0.0
    %2009 = vmatmul.mubr.f32.gmra.mrb[0].mxu0 %v1880
    %v2010 = vpop.f32.mrb[0].mxu0
    %v2011 = vadd.f32 0.0, %v2010
    %v2012 = vpop.f32.mrb[0].mxu0
    %2013 = vmatprep.mubr.f32.mxu0 0.0
    %2014 = vmatmul.mubr.f32.gmra.mrb[0].mxu0 %v1881
    %v2015 = vpop.f32.mrb[0].mxu0
    %v2016 = vadd.f32 0.0, %v2015
    %v2017 = vpop.f32.mrb[0].mxu0
    %2018 = vmatprep.mubr.f32.mxu0 0.0
    %2019 = vmatmul.mubr.f32.gmra.mrb[0].mxu0 %v1882
    %v2020 = vpop.f32.mrb[0].mxu0
    %v2021 = vadd.f32 0.0, %v2020
    %v2022 = vpop.f32.mrb[0].mxu0
    %2023 = vmatprep.mubr.f32.mxu0 0.0
    %2024 = vmatmul.mubr.f32.gmra.mrb[0].mxu0 %v1883
    %v2025 = vpop.f32.mrb[0].mxu0
    %v2026 = vadd.f32 0.0, %v2025
    %v2027 = vpop.f32.mrb[0].mxu0
    %2028 = vmatprep.mubr.f32.mxu0 0.0
    %2029 = vmatmul.mubr.f32.gmra.mrb[0].mxu0 %v1884
    %v2030 = vpop.f32.mrb[0].mxu0
    %v2031 = vadd.f32 0.0, %v2030
    %v2032 = vpop.f32.mrb[0].mxu0
    %2033 = vmatprep.mubr.f32.mxu0 0.0
    %2034 = vmatmul.mubr.f32.gmra.mrb[0].mxu0 %v1885
    %v2035 = vpop.f32.mrb[0].mxu0
    %v2036 = vadd.f32 0.0, %v2035
    %v2037 = vpop.f32.mrb[0].mxu0
    %2038 = vmatprep.mubr.f32.mxu0 0.0
    %2039 = vmatmul.mubr.f32.gmra.mrb[0].mxu0 %v1886
    %v2040 = vpop.f32.mrb[0].mxu0
    %v2041 = vadd.f32 0.0, %v2040
    %v2042 = vpop.f32.mrb[0].mxu0
    %2043 = vmatprep.mubr.f32.mxu0 0.0
    %2044 = vmatmul.mubr.f32.gmra.mrb[0].mxu0 %v1887
    %v2045 = vpop.f32.mrb[0].mxu0
    %v2046 = vadd.f32 0.0, %v2045
    %v2047 = vpop.f32.mrb[0].mxu0
    %2048 = vmatprep.mubr.f32.mxu0 0.0
    %2049 = vmatmul.mubr.f32.gmra.mrb[0].mxu0 %v1888
    %v2050 = vpop.f32.mrb[0].mxu0
    %v2051 = vadd.f32 0.0, %v2050
    %v2052 = vpop.f32.mrb[0].mxu0
    %2053 = vmatprep.mubr.f32.mxu0 0.0
    %2054 = vmatmul.mubr.f32.gmra.mrb[0].mxu0 %v1889
    %v2055 = vpop.f32.mrb[0].mxu0
    %v2056 = vadd.f32 0.0, %v2055
    %v2057 = vpop.f32.mrb[0].mxu0
    %2058 = vmatprep.mubr.f32.mxu0 0.0
    %2059 = vmatmul.mubr.f32.gmra.mrb[0].mxu0 %v1890
    %v2060 = vpop.f32.mrb[0].mxu0
    %v2061 = vadd.f32 0.0, %v2060
    %v2062 = vpop.f32.mrb[0].mxu0
    %2063 = vmatprep.mubr.f32.mxu0 0.0
    %2064 = vmatmul.mubr.f32.gmra.mrb[0].mxu0 %v1891
    %v2065 = vpop.f32.mrb[0].mxu0
    %v2066 = vadd.f32 0.0, %v2065
    %v2067 = vpop.f32.mrb[0].mxu0
    %2068 = vmatprep.mubr.f32.mxu0 0.0
    %2069 = vmatmul.mubr.f32.gmra.mrb[0].mxu0 %v1892
    %v2070 = vpop.f32.mrb[0].mxu0
    %v2071 = vadd.f32 0.0, %v2070
    %v2072 = vpop.f32.mrb[0].mxu0
    %2073 = vmatprep.mubr.f32.mxu0 0.0
    %2074 = vmatmul.mubr.f32.gmra.mrb[0].mxu0 %v1893
    %v2075 = vpop.f32.mrb[0].mxu0
    %v2076 = vadd.f32 0.0, %v2075
    %v2077 = vpop.f32.mrb[0].mxu0
    %2078 = vmatprep.mubr.f32.mxu0 0.0
    %2079 = vmatmul.mubr.f32.gmra.mrb[0].mxu0 %v1894
    %v2080 = vpop.f32.mrb[0].mxu0
    %v2081 = vadd.f32 0.0, %v2080
    %v2082 = vpop.f32.mrb[0].mxu0
    %2083 = vmatprep.mubr.f32.mxu0 0.0
    %2084 = vmatmul.mubr.f32.gmra.mrb[0].mxu0 %v1895
    %v2085 = vpop.f32.mrb[0].mxu0
    %v2086 = vadd.f32 0.0, %v2085
    %v2087 = vpop.f32.mrb[0].mxu0
    %2088 = vmatprep.mubr.f32.mxu0 0.0
    %2089 = vmatmul.mubr.f32.gmra.mrb[0].mxu0 %v1896
    %v2090 = vpop.f32.mrb[0].mxu0
    %v2091 = vadd.f32 0.0, %v2090
    %v2092 = vpop.f32.mrb[0].mxu0
    %2093 = vmatprep.mubr.f32.mxu0 0.0
    %2094 = vmatmul.mubr.f32.gmra.mrb[0].mxu0 %v1897
    %v2095 = vpop.f32.mrb[0].mxu0
    %v2096 = vadd.f32 0.0, %v2095
    %v2097 = vpop.f32.mrb[0].mxu0
    %2098 = vmatprep.mubr.f32.mxu0 0.0
    %2099 = vmatmul.mubr.f32.gmra.mrb[0].mxu0 %v1898
    %v2100 = vpop.f32.mrb[0].mxu0
    %v2101 = vadd.f32 0.0, %v2100
    %v2102 = vpop.f32.mrb[0].mxu0
    %2103 = vmatprep.mubr.f32.mxu0 0.0
    %2104 = vmatmul.mubr.f32.gmra.mrb[0].mxu0 %v1899
    %v2105 = vpop.f32.mrb[0].mxu0
    %v2106 = vadd.f32 0.0, %v2105
    %v2107 = vpop.f32.mrb[0].mxu0
    %2108 = vdwg.mxu0
    %v2110 = vlaneseq
    %v2111 = vshrl.u32 %v2110, 7
    %v2112 = vsub.s32 0, %v2111
    %v2113 = vrot.slane %v1918, %v2112
    %2115 = vmatprep.subr.mxu0 0.0
    %2116 = vmatpush1.msra.mxu0 %v1986
    %2117 = vmatprep.subr.mxu0 0.0
    %2118 = vmatpush1.msra.mxu0 %v1991
    %2119 = vmatprep.subr.mxu0 0.0
    %2120 = vmatpush1.msra.mxu0 %v1996
    %2121 = vmatprep.subr.mxu0 0.0
    %2122 = vmatpush1.msra.mxu0 %v2001
    %2123 = vmatprep.subr.mxu0 0.0
    %2124 = vmatpush1.msra.mxu0 %v2006
    %2125 = vmatprep.subr.mxu0 0.0
    %2126 = vmatpush1.msra.mxu0 %v2011
    %2127 = vmatprep.subr.mxu0 0.0
    %2128 = vmatpush1.msra.mxu0 %v2016
    %2129 = vmatprep.subr.mxu0 0.0
    %2130 = vmatpush1.msra.mxu0 %v2021
    %2131 = vmatprep.subr.mxu0 0.0
    %2132 = vmatpush1.msra.mxu0 %v2026
    %2133 = vmatprep.subr.mxu0 0.0
    %2134 = vmatpush1.msra.mxu0 %v2031
    %2135 = vmatprep.subr.mxu0 0.0
    %2136 = vmatpush1.msra.mxu0 %v2036
    %2137 = vmatprep.subr.mxu0 0.0
    %2138 = vmatpush1.msra.mxu0 %v2041
    %2139 = vmatprep.subr.mxu0 0.0
    %2140 = vmatpush1.msra.mxu0 %v2046
    %2141 = vmatprep.subr.mxu0 0.0
    %2142 = vmatpush1.msra.mxu0 %v2051
    %2143 = vmatprep.subr.mxu0 0.0
    %2144 = vmatpush1.msra.mxu0 %v2056
    %2145 = vmatprep.subr.mxu0 0.0
    %2146 = vmatpush1.msra.mxu0 %v2061
    %2147 = vmatprep.subr.mxu0 0.0
    %2148 = vmatpush1.msra.mxu0 %v2066
    %2149 = vmatprep.subr.mxu0 0.0
    %2150 = vmatpush1.msra.mxu0 %v2071
    %2151 = vmatprep.subr.mxu0 0.0
    %2152 = vmatpush1.msra.mxu0 %v2076
    %2153 = vmatprep.subr.mxu0 0.0
    %2154 = vmatpush1.msra.mxu0 %v2081
    %2155 = vmatprep.subr.mxu0 0.0
    %2156 = vmatpush1.msra.mxu0 %v2086
    %2157 = vmatprep.subr.mxu0 0.0
    %2158 = vmatpush1.msra.mxu0 %v2091
    %2159 = vmatprep.subr.mxu0 0.0
    %2160 = vmatpush1.msra.mxu0 %v2096
    %2161 = vmatprep.subr.mxu0 0.0
    %2162 = vmatpush1.msra.mxu0 %v2101
    %2163 = vmatprep.subr.mxu0 0.0
    %2164 = vmatpush1.msra.mxu0 %v2106
    %2165 = vmatprep.subr.mxu0 0.0
    %2166 = vmatpush1.msra.mxu0 0.0
    %2167 = vmatprep.subr.mxu0 0.0
    %2168 = vmatpush1.msra.mxu0 0.0
    %2169 = vmatprep.subr.mxu0 0.0
    %2170 = vmatpush1.msra.mxu0 0.0
    %2171 = vmatprep.subr.mxu0 0.0
    %2172 = vmatpush1.msra.mxu0 0.0
    %2173 = vmatprep.subr.mxu0 0.0
    %2174 = vmatpush1.msra.mxu0 0.0
    %2175 = vmatprep.subr.mxu0 0.0
    %2176 = vmatpush1.msra.mxu0 0.0
    %2177 = vmatprep.subr.mxu0 0.0
    %2178 = vmatpush1.msra.mxu0 0.0
    %2179 = vmatprep.mubr.f32.mxu0 %v125
    %2180 = vmatmul.mubr.f32.gmra.mrb[0].mxu0 %v31
    %v2181 = vpop.f32.mrb[0].mxu0
    %v2182 = vadd.f32 %v2113, %v2181
    %v2183 = vpop.f32.mrb[0].mxu0
    %2184 = vmatprep.mubr.f32.mxu0 %v128
    %2185 = vmatmul.mubr.f32.gmra.mrb[0].mxu0 %v33
    %v2186 = vpop.f32.mrb[0].mxu0
    %v2187 = vadd.f32 %v2113, %v2186
    %v2188 = vpop.f32.mrb[0].mxu0
    %2189 = vmatprep.mubr.f32.mxu0 %v131
    %2190 = vmatmul.mubr.f32.gmra.mrb[0].mxu0 %v35
    %v2191 = vpop.f32.mrb[0].mxu0
    %v2192 = vadd.f32 %v2113, %v2191
    %v2193 = vpop.f32.mrb[0].mxu0
    %2194 = vmatprep.mubr.f32.mxu0 %v134
    %2195 = vmatmul.mubr.f32.gmra.mrb[0].mxu0 %v37
    %v2196 = vpop.f32.mrb[0].mxu0
    %v2197 = vadd.f32 %v2113, %v2196
    %v2198 = vpop.f32.mrb[0].mxu0
    %2199 = vmatprep.mubr.f32.mxu0 %v137
    %2200 = vmatmul.mubr.f32.gmra.mrb[0].mxu0 %v39
    %v2201 = vpop.f32.mrb[0].mxu0
    %v2202 = vadd.f32 %v2113, %v2201
    %v2203 = vpop.f32.mrb[0].mxu0
    %2204 = vmatprep.mubr.f32.mxu0 %v140
    %2205 = vmatmul.mubr.f32.gmra.mrb[0].mxu0 %v41
    %v2206 = vpop.f32.mrb[0].mxu0
    %v2207 = vadd.f32 %v2113, %v2206
    %v2208 = vpop.f32.mrb[0].mxu0
    %2209 = vmatprep.mubr.f32.mxu0 %v143
    %2210 = vmatmul.mubr.f32.gmra.mrb[0].mxu0 %v43
    %v2211 = vpop.f32.mrb[0].mxu0
    %v2212 = vadd.f32 %v2113, %v2211
    %v2213 = vpop.f32.mrb[0].mxu0
    %2214 = vmatprep.mubr.f32.mxu0 %v146
    %2215 = vmatmul.mubr.f32.gmra.mrb[0].mxu0 %v45
    %v2216 = vpop.f32.mrb[0].mxu0
    %v2217 = vadd.f32 %v2113, %v2216
    %v2218 = vpop.f32.mrb[0].mxu0
    %2219 = vmatprep.mubr.f32.mxu0 %v149
    %2220 = vmatmul.mubr.f32.gmra.mrb[0].mxu0 %v47
    %v2221 = vpop.f32.mrb[0].mxu0
    %v2222 = vadd.f32 %v2113, %v2221
    %v2223 = vpop.f32.mrb[0].mxu0
    %2224 = vmatprep.mubr.f32.mxu0 %v152
    %2225 = vmatmul.mubr.f32.gmra.mrb[0].mxu0 %v49
    %v2226 = vpop.f32.mrb[0].mxu0
    %v2227 = vadd.f32 %v2113, %v2226
    %v2228 = vpop.f32.mrb[0].mxu0
    %2229 = vmatprep.mubr.f32.mxu0 %v155
    %2230 = vmatmul.mubr.f32.gmra.mrb[0].mxu0 %v51
    %v2231 = vpop.f32.mrb[0].mxu0
    %v2232 = vadd.f32 %v2113, %v2231
    %v2233 = vpop.f32.mrb[0].mxu0
    %2234 = vmatprep.mubr.f32.mxu0 %v158
    %2235 = vmatmul.mubr.f32.gmra.mrb[0].mxu0 %v53
    %v2236 = vpop.f32.mrb[0].mxu0
    %v2237 = vadd.f32 %v2113, %v2236
    %v2238 = vpop.f32.mrb[0].mxu0
    %2239 = vmatprep.mubr.f32.mxu0 %v161
    %2240 = vmatmul.mubr.f32.gmra.mrb[0].mxu0 %v55
    %v2241 = vpop.f32.mrb[0].mxu0
    %v2242 = vadd.f32 %v2113, %v2241
    %v2243 = vpop.f32.mrb[0].mxu0
    %2244 = vmatprep.mubr.f32.mxu0 %v164
    %2245 = vmatmul.mubr.f32.gmra.mrb[0].mxu0 %v57
    %v2246 = vpop.f32.mrb[0].mxu0
    %v2247 = vadd.f32 %v2113, %v2246
    %v2248 = vpop.f32.mrb[0].mxu0
    %2249 = vmatprep.mubr.f32.mxu0 %v167
    %2250 = vmatmul.mubr.f32.gmra.mrb[0].mxu0 %v59
    %v2251 = vpop.f32.mrb[0].mxu0
    %v2252 = vadd.f32 %v2113, %v2251
    %v2253 = vpop.f32.mrb[0].mxu0
    %2254 = vmatprep.mubr.f32.mxu0 %v170
    %2255 = vmatmul.mubr.f32.gmra.mrb[0].mxu0 %v61
    %v2256 = vpop.f32.mrb[0].mxu0
    %v2257 = vadd.f32 %v2113, %v2256
    %v2258 = vpop.f32.mrb[0].mxu0
    %2259 = vmatprep.mubr.f32.mxu0 %v173
    %2260 = vmatmul.mubr.f32.gmra.mrb[0].mxu0 %v63
    %v2261 = vpop.f32.mrb[0].mxu0
    %v2262 = vadd.f32 %v2113, %v2261
    %v2263 = vpop.f32.mrb[0].mxu0
    %2264 = vmatprep.mubr.f32.mxu0 %v176
    %2265 = vmatmul.mubr.f32.gmra.mrb[0].mxu0 %v65
    %v2266 = vpop.f32.mrb[0].mxu0
    %v2267 = vadd.f32 %v2113, %v2266
    %v2268 = vpop.f32.mrb[0].mxu0
    %2269 = vmatprep.mubr.f32.mxu0 %v179
    %2270 = vmatmul.mubr.f32.gmra.mrb[0].mxu0 %v67
    %v2271 = vpop.f32.mrb[0].mxu0
    %v2272 = vadd.f32 %v2113, %v2271
    %v2273 = vpop.f32.mrb[0].mxu0
    %2274 = vmatprep.mubr.f32.mxu0 %v182
    %2275 = vmatmul.mubr.f32.gmra.mrb[0].mxu0 %v69
    %v2276 = vpop.f32.mrb[0].mxu0
    %v2277 = vadd.f32 %v2113, %v2276
    %v2278 = vpop.f32.mrb[0].mxu0
    %2279 = vmatprep.mubr.f32.mxu0 %v185
    %2280 = vmatmul.mubr.f32.gmra.mrb[0].mxu0 %v71
    %v2281 = vpop.f32.mrb[0].mxu0
    %v2282 = vadd.f32 %v2113, %v2281
    %v2283 = vpop.f32.mrb[0].mxu0
    %2284 = vmatprep.mubr.f32.mxu0 %v188
    %2285 = vmatmul.mubr.f32.gmra.mrb[0].mxu0 %v73
    %v2286 = vpop.f32.mrb[0].mxu0
    %v2287 = vadd.f32 %v2113, %v2286
    %v2288 = vpop.f32.mrb[0].mxu0
    %2289 = vmatprep.mubr.f32.mxu0 %v191
    %2290 = vmatmul.mubr.f32.gmra.mrb[0].mxu0 %v75
    %v2291 = vpop.f32.mrb[0].mxu0
    %v2292 = vadd.f32 %v2113, %v2291
    %v2293 = vpop.f32.mrb[0].mxu0
    %2294 = vmatprep.mubr.f32.mxu0 %v194
    %2295 = vmatmul.mubr.f32.gmra.mrb[0].mxu0 %v77
    %v2296 = vpop.f32.mrb[0].mxu0
    %v2297 = vadd.f32 %v2113, %v2296
    %v2298 = vpop.f32.mrb[0].mxu0
    %2299 = vmatprep.mubr.f32.mxu0 %v197
    %2300 = vmatmul.mubr.f32.gmra.mrb[0].mxu0 %v79
    %v2301 = vpop.f32.mrb[0].mxu0
    %v2302 = vadd.f32 %v2113, %v2301
    %v2303 = vpop.f32.mrb[0].mxu0
    %2304 = vdwg.mxu0
    %v2305 = vmax.f32 %v2182, 0.0
    %v2306 = vmax.f32 %v2187, 0.0
    %v2307 = vmax.f32 %v2192, 0.0
    %v2308 = vmax.f32 %v2197, 0.0
    %v2309 = vmax.f32 %v2202, 0.0
    %v2310 = vmax.f32 %v2207, 0.0
    %v2311 = vmax.f32 %v2212, 0.0
    %v2312 = vmax.f32 %v2217, 0.0
    %v2313 = vmax.f32 %v2222, 0.0
    %v2314 = vmax.f32 %v2227, 0.0
    %v2315 = vmax.f32 %v2232, 0.0
    %v2316 = vmax.f32 %v2237, 0.0
    %v2317 = vmax.f32 %v2242, 0.0
    %v2318 = vmax.f32 %v2247, 0.0
    %v2319 = vmax.f32 %v2252, 0.0
    %v2320 = vmax.f32 %v2257, 0.0
    %v2321 = vmax.f32 %v2262, 0.0
    %v2322 = vmax.f32 %v2267, 0.0
    %v2323 = vmax.f32 %v2272, 0.0
    %v2324 = vmax.f32 %v2277, 0.0
    %v2325 = vmax.f32 %v2282, 0.0
    %v2326 = vmax.f32 %v2287, 0.0
    %v2327 = vmax.f32 %v2292, 0.0
    %v2328 = vmax.f32 %v2297, 0.0
    %v2329 = vmax.f32 %v2302, 0.0
    %s2330 = scalar_lea.vmem %s2, 640
    %v2331 = vld [vmem:[%s2330] sm:$0xff]
    %v2332 = vld [vmem:[%s2330 + $0x8] sm:$0xff]
    %v2333 = vld [vmem:[%s2330 + $0x10] sm:$0xff]
    %v2334 = vld [vmem:[%s2330 + $0x18] sm:$0xff]
    %v2335 = vld [vmem:[%s2330 + $0x20] sm:$0xff]
    %v2336 = vld [vmem:[%s2330 + $0x28] sm:$0xff]
    %v2337 = vld [vmem:[%s2330 + $0x30] sm:$0xff]
    %v2338 = vld [vmem:[%s2330 + $0x38] sm:$0xff]
    %v2339 = vld [vmem:[%s2330 + $0x40] sm:$0xff]
    %v2340 = vld [vmem:[%s2330 + $0x48] sm:$0xff]
    %v2341 = vld [vmem:[%s2330 + $0x50] sm:$0xff]
    %v2342 = vld [vmem:[%s2330 + $0x58] sm:$0xff]
    %v2343 = vld [vmem:[%s2330 + $0x60] sm:$0xff]
    %v2344 = vld [vmem:[%s2330 + $0x68] sm:$0xff]
    %v2345 = vld [vmem:[%s2330 + $0x70] sm:$0xff]
    %v2346 = vld [vmem:[%s2330 + $0x78] sm:$0xff]
    %s2347 = scalar_lea.vmem %s3, 5
    %v2348 = vld [vmem:[%s2347] sm:$0x1]
    %2349 = vmatprep.subr.mxu0 0.0
    %2350 = vmatpush1.msra.mxu0 %v2331
    %2351 = vmatprep.subr.mxu0 0.0
    %2352 = vmatpush1.msra.mxu0 %v2332
    %2353 = vmatprep.subr.mxu0 0.0
    %2354 = vmatpush1.msra.mxu0 %v2333
    %2355 = vmatprep.subr.mxu0 0.0
    %2356 = vmatpush1.msra.mxu0 %v2334
    %2357 = vmatprep.subr.mxu0 0.0
    %2358 = vmatpush1.msra.mxu0 %v2335
    %2359 = vmatprep.subr.mxu0 0.0
    %2360 = vmatpush1.msra.mxu0 %v2336
    %2361 = vmatprep.subr.mxu0 0.0
    %2362 = vmatpush1.msra.mxu0 %v2337
    %2363 = vmatprep.subr.mxu0 0.0
    %2364 = vmatpush1.msra.mxu0 %v2338
    %2365 = vmatprep.subr.mxu0 0.0
    %2366 = vmatpush1.msra.mxu0 %v2339
    %2367 = vmatprep.subr.mxu0 0.0
    %2368 = vmatpush1.msra.mxu0 %v2340
    %2369 = vmatprep.subr.mxu0 0.0
    %2370 = vmatpush1.msra.mxu0 %v2341
    %2371 = vmatprep.subr.mxu0 0.0
    %2372 = vmatpush1.msra.mxu0 %v2342
    %2373 = vmatprep.subr.mxu0 0.0
    %2374 = vmatpush1.msra.mxu0 %v2343
    %2375 = vmatprep.subr.mxu0 0.0
    %2376 = vmatpush1.msra.mxu0 %v2344
    %2377 = vmatprep.subr.mxu0 0.0
    %2378 = vmatpush1.msra.mxu0 %v2345
    %2379 = vmatprep.subr.mxu0 0.0
    %2380 = vmatpush1.msra.mxu0 %v2346
    %2381 = vmatprep.subr.mxu0 0.0
    %2382 = vmatpush1.msra.mxu0 0.0
    %2383 = vmatprep.subr.mxu0 0.0
    %2384 = vmatpush1.msra.mxu0 0.0
    %2385 = vmatprep.subr.mxu0 0.0
    %2386 = vmatpush1.msra.mxu0 0.0
    %2387 = vmatprep.subr.mxu0 0.0
    %2388 = vmatpush1.msra.mxu0 0.0
    %2389 = vmatprep.subr.mxu0 0.0
    %2390 = vmatpush1.msra.mxu0 0.0
    %2391 = vmatprep.subr.mxu0 0.0
    %2392 = vmatpush1.msra.mxu0 0.0
    %2393 = vmatprep.subr.mxu0 0.0
    %2394 = vmatpush1.msra.mxu0 0.0
    %2395 = vmatprep.subr.mxu0 0.0
    %2396 = vmatpush1.msra.mxu0 0.0
    %2397 = vmatprep.subr.mxu0 0.0
    %2398 = vmatpush1.msra.mxu0 0.0
    %2399 = vmatprep.subr.mxu0 0.0
    %2400 = vmatpush1.msra.mxu0 0.0
    %2401 = vmatprep.subr.mxu0 0.0
    %2402 = vmatpush1.msra.mxu0 0.0
    %2403 = vmatprep.subr.mxu0 0.0
    %2404 = vmatpush1.msra.mxu0 0.0
    %2405 = vmatprep.subr.mxu0 0.0
    %2406 = vmatpush1.msra.mxu0 0.0
    %2407 = vmatprep.subr.mxu0 0.0
    %2408 = vmatpush1.msra.mxu0 0.0
    %2409 = vmatprep.subr.mxu0 0.0
    %2410 = vmatpush1.msra.mxu0 0.0
    %2411 = vmatprep.subr.mxu0 0.0
    %2412 = vmatpush1.msra.mxu0 0.0
    %2413 = vmatprep.mubr.f32.mxu0 0.0
    %2414 = vmatmul.mubr.f32.gmra.mrb[0].mxu0 %v2305
    %v2415 = vpop.f32.mrb[0].mxu0
    %v2416 = vadd.f32 0.0, %v2415
    %v2417 = vpop.f32.mrb[0].mxu0
    %2418 = vmatprep.mubr.f32.mxu0 0.0
    %2419 = vmatmul.mubr.f32.gmra.mrb[0].mxu0 %v2306
    %v2420 = vpop.f32.mrb[0].mxu0
    %v2421 = vadd.f32 0.0, %v2420
    %v2422 = vpop.f32.mrb[0].mxu0
    %2423 = vmatprep.mubr.f32.mxu0 0.0
    %2424 = vmatmul.mubr.f32.gmra.mrb[0].mxu0 %v2307
    %v2425 = vpop.f32.mrb[0].mxu0
    %v2426 = vadd.f32 0.0, %v2425
    %v2427 = vpop.f32.mrb[0].mxu0
    %2428 = vmatprep.mubr.f32.mxu0 0.0
    %2429 = vmatmul.mubr.f32.gmra.mrb[0].mxu0 %v2308
    %v2430 = vpop.f32.mrb[0].mxu0
    %v2431 = vadd.f32 0.0, %v2430
    %v2432 = vpop.f32.mrb[0].mxu0
    %2433 = vmatprep.mubr.f32.mxu0 0.0
    %2434 = vmatmul.mubr.f32.gmra.mrb[0].mxu0 %v2309
    %v2435 = vpop.f32.mrb[0].mxu0
    %v2436 = vadd.f32 0.0, %v2435
    %v2437 = vpop.f32.mrb[0].mxu0
    %2438 = vmatprep.mubr.f32.mxu0 0.0
    %2439 = vmatmul.mubr.f32.gmra.mrb[0].mxu0 %v2310
    %v2440 = vpop.f32.mrb[0].mxu0
    %v2441 = vadd.f32 0.0, %v2440
    %v2442 = vpop.f32.mrb[0].mxu0
    %2443 = vmatprep.mubr.f32.mxu0 0.0
    %2444 = vmatmul.mubr.f32.gmra.mrb[0].mxu0 %v2311
    %v2445 = vpop.f32.mrb[0].mxu0
    %v2446 = vadd.f32 0.0, %v2445
    %v2447 = vpop.f32.mrb[0].mxu0
    %2448 = vmatprep.mubr.f32.mxu0 0.0
    %2449 = vmatmul.mubr.f32.gmra.mrb[0].mxu0 %v2312
    %v2450 = vpop.f32.mrb[0].mxu0
    %v2451 = vadd.f32 0.0, %v2450
    %v2452 = vpop.f32.mrb[0].mxu0
    %2453 = vmatprep.mubr.f32.mxu0 0.0
    %2454 = vmatmul.mubr.f32.gmra.mrb[0].mxu0 %v2313
    %v2455 = vpop.f32.mrb[0].mxu0
    %v2456 = vadd.f32 0.0, %v2455
    %v2457 = vpop.f32.mrb[0].mxu0
    %2458 = vmatprep.mubr.f32.mxu0 0.0
    %2459 = vmatmul.mubr.f32.gmra.mrb[0].mxu0 %v2314
    %v2460 = vpop.f32.mrb[0].mxu0
    %v2461 = vadd.f32 0.0, %v2460
    %v2462 = vpop.f32.mrb[0].mxu0
    %2463 = vmatprep.mubr.f32.mxu0 0.0
    %2464 = vmatmul.mubr.f32.gmra.mrb[0].mxu0 %v2315
    %v2465 = vpop.f32.mrb[0].mxu0
    %v2466 = vadd.f32 0.0, %v2465
    %v2467 = vpop.f32.mrb[0].mxu0
    %2468 = vmatprep.mubr.f32.mxu0 0.0
    %2469 = vmatmul.mubr.f32.gmra.mrb[0].mxu0 %v2316
    %v2470 = vpop.f32.mrb[0].mxu0
    %v2471 = vadd.f32 0.0, %v2470
    %v2472 = vpop.f32.mrb[0].mxu0
    %2473 = vmatprep.mubr.f32.mxu0 0.0
    %2474 = vmatmul.mubr.f32.gmra.mrb[0].mxu0 %v2317
    %v2475 = vpop.f32.mrb[0].mxu0
    %v2476 = vadd.f32 0.0, %v2475
    %v2477 = vpop.f32.mrb[0].mxu0
    %2478 = vmatprep.mubr.f32.mxu0 0.0
    %2479 = vmatmul.mubr.f32.gmra.mrb[0].mxu0 %v2318
    %v2480 = vpop.f32.mrb[0].mxu0
    %v2481 = vadd.f32 0.0, %v2480
    %v2482 = vpop.f32.mrb[0].mxu0
    %2483 = vmatprep.mubr.f32.mxu0 0.0
    %2484 = vmatmul.mubr.f32.gmra.mrb[0].mxu0 %v2319
    %v2485 = vpop.f32.mrb[0].mxu0
    %v2486 = vadd.f32 0.0, %v2485
    %v2487 = vpop.f32.mrb[0].mxu0
    %2488 = vmatprep.mubr.f32.mxu0 0.0
    %2489 = vmatmul.mubr.f32.gmra.mrb[0].mxu0 %v2320
    %v2490 = vpop.f32.mrb[0].mxu0
    %v2491 = vadd.f32 0.0, %v2490
    %v2492 = vpop.f32.mrb[0].mxu0
    %2493 = vmatprep.mubr.f32.mxu0 0.0
    %2494 = vmatmul.mubr.f32.gmra.mrb[0].mxu0 %v2321
    %v2495 = vpop.f32.mrb[0].mxu0
    %v2496 = vadd.f32 0.0, %v2495
    %v2497 = vpop.f32.mrb[0].mxu0
    %2498 = vmatprep.mubr.f32.mxu0 0.0
    %2499 = vmatmul.mubr.f32.gmra.mrb[0].mxu0 %v2322
    %v2500 = vpop.f32.mrb[0].mxu0
    %v2501 = vadd.f32 0.0, %v2500
    %v2502 = vpop.f32.mrb[0].mxu0
    %2503 = vmatprep.mubr.f32.mxu0 0.0
    %2504 = vmatmul.mubr.f32.gmra.mrb[0].mxu0 %v2323
    %v2505 = vpop.f32.mrb[0].mxu0
    %v2506 = vadd.f32 0.0, %v2505
    %v2507 = vpop.f32.mrb[0].mxu0
    %2508 = vmatprep.mubr.f32.mxu0 0.0
    %2509 = vmatmul.mubr.f32.gmra.mrb[0].mxu0 %v2324
    %v2510 = vpop.f32.mrb[0].mxu0
    %v2511 = vadd.f32 0.0, %v2510
    %v2512 = vpop.f32.mrb[0].mxu0
    %2513 = vmatprep.mubr.f32.mxu0 0.0
    %2514 = vmatmul.mubr.f32.gmra.mrb[0].mxu0 %v2325
    %v2515 = vpop.f32.mrb[0].mxu0
    %v2516 = vadd.f32 0.0, %v2515
    %v2517 = vpop.f32.mrb[0].mxu0
    %2518 = vmatprep.mubr.f32.mxu0 0.0
    %2519 = vmatmul.mubr.f32.gmra.mrb[0].mxu0 %v2326
    %v2520 = vpop.f32.mrb[0].mxu0
    %v2521 = vadd.f32 0.0, %v2520
    %v2522 = vpop.f32.mrb[0].mxu0
    %2523 = vmatprep.mubr.f32.mxu0 0.0
    %2524 = vmatmul.mubr.f32.gmra.mrb[0].mxu0 %v2327
    %v2525 = vpop.f32.mrb[0].mxu0
    %v2526 = vadd.f32 0.0, %v2525
    %v2527 = vpop.f32.mrb[0].mxu0
    %2528 = vmatprep.mubr.f32.mxu0 0.0
    %2529 = vmatmul.mubr.f32.gmra.mrb[0].mxu0 %v2328
    %v2530 = vpop.f32.mrb[0].mxu0
    %v2531 = vadd.f32 0.0, %v2530
    %v2532 = vpop.f32.mrb[0].mxu0
    %2533 = vmatprep.mubr.f32.mxu0 0.0
    %2534 = vmatmul.mubr.f32.gmra.mrb[0].mxu0 %v2329
    %v2535 = vpop.f32.mrb[0].mxu0
    %v2536 = vadd.f32 0.0, %v2535
    %v2537 = vpop.f32.mrb[0].mxu0
    %2538 = vdwg.mxu0
    %v2540 = vlaneseq
    %v2541 = vshrl.u32 %v2540, 7
    %v2542 = vsub.s32 0, %v2541
    %v2543 = vrot.slane %v2348, %v2542
    %2545 = vmatprep.subr.mxu0 0.0
    %2546 = vmatpush1.msra.mxu0 %v2416
    %2547 = vmatprep.subr.mxu0 0.0
    %2548 = vmatpush1.msra.mxu0 %v2421
    %2549 = vmatprep.subr.mxu0 0.0
    %2550 = vmatpush1.msra.mxu0 %v2426
    %2551 = vmatprep.subr.mxu0 0.0
    %2552 = vmatpush1.msra.mxu0 %v2431
    %2553 = vmatprep.subr.mxu0 0.0
    %2554 = vmatpush1.msra.mxu0 %v2436
    %2555 = vmatprep.subr.mxu0 0.0
    %2556 = vmatpush1.msra.mxu0 %v2441
    %2557 = vmatprep.subr.mxu0 0.0
    %2558 = vmatpush1.msra.mxu0 %v2446
    %2559 = vmatprep.subr.mxu0 0.0
    %2560 = vmatpush1.msra.mxu0 %v2451
    %2561 = vmatprep.subr.mxu0 0.0
    %2562 = vmatpush1.msra.mxu0 %v2456
    %2563 = vmatprep.subr.mxu0 0.0
    %2564 = vmatpush1.msra.mxu0 %v2461
    %2565 = vmatprep.subr.mxu0 0.0
    %2566 = vmatpush1.msra.mxu0 %v2466
    %2567 = vmatprep.subr.mxu0 0.0
    %2568 = vmatpush1.msra.mxu0 %v2471
    %2569 = vmatprep.subr.mxu0 0.0
    %2570 = vmatpush1.msra.mxu0 %v2476
    %2571 = vmatprep.subr.mxu0 0.0
    %2572 = vmatpush1.msra.mxu0 %v2481
    %2573 = vmatprep.subr.mxu0 0.0
    %2574 = vmatpush1.msra.mxu0 %v2486
    %2575 = vmatprep.subr.mxu0 0.0
    %2576 = vmatpush1.msra.mxu0 %v2491
    %2577 = vmatprep.subr.mxu0 0.0
    %2578 = vmatpush1.msra.mxu0 %v2496
    %2579 = vmatprep.subr.mxu0 0.0
    %2580 = vmatpush1.msra.mxu0 %v2501
    %2581 = vmatprep.subr.mxu0 0.0
    %2582 = vmatpush1.msra.mxu0 %v2506
    %2583 = vmatprep.subr.mxu0 0.0
    %2584 = vmatpush1.msra.mxu0 %v2511
    %2585 = vmatprep.subr.mxu0 0.0
    %2586 = vmatpush1.msra.mxu0 %v2516
    %2587 = vmatprep.subr.mxu0 0.0
    %2588 = vmatpush1.msra.mxu0 %v2521
    %2589 = vmatprep.subr.mxu0 0.0
    %2590 = vmatpush1.msra.mxu0 %v2526
    %2591 = vmatprep.subr.mxu0 0.0
    %2592 = vmatpush1.msra.mxu0 %v2531
    %2593 = vmatprep.subr.mxu0 0.0
    %2594 = vmatpush1.msra.mxu0 %v2536
    %2595 = vmatprep.subr.mxu0 0.0
    %2596 = vmatpush1.msra.mxu0 0.0
    %2597 = vmatprep.subr.mxu0 0.0
    %2598 = vmatpush1.msra.mxu0 0.0
    %2599 = vmatprep.subr.mxu0 0.0
    %2600 = vmatpush1.msra.mxu0 0.0
    %2601 = vmatprep.subr.mxu0 0.0
    %2602 = vmatpush1.msra.mxu0 0.0
    %2603 = vmatprep.subr.mxu0 0.0
    %2604 = vmatpush1.msra.mxu0 0.0
    %2605 = vmatprep.subr.mxu0 0.0
    %2606 = vmatpush1.msra.mxu0 0.0
    %2607 = vmatprep.subr.mxu0 0.0
    %2608 = vmatpush1.msra.mxu0 0.0
    %2609 = vmatprep.mubr.f32.mxu0 %v125
    %2610 = vmatmul.mubr.f32.gmra.mrb[0].mxu0 %v31
    %v2611 = vpop.f32.mrb[0].mxu0
    %v2612 = vadd.f32 %v2543, %v2611
    %v2613 = vpop.f32.mrb[0].mxu0
    %2614 = vmatprep.mubr.f32.mxu0 %v128
    %2615 = vmatmul.mubr.f32.gmra.mrb[0].mxu0 %v33
    %v2616 = vpop.f32.mrb[0].mxu0
    %v2617 = vadd.f32 %v2543, %v2616
    %v2618 = vpop.f32.mrb[0].mxu0
    %2619 = vmatprep.mubr.f32.mxu0 %v131
    %2620 = vmatmul.mubr.f32.gmra.mrb[0].mxu0 %v35
    %v2621 = vpop.f32.mrb[0].mxu0
    %v2622 = vadd.f32 %v2543, %v2621
    %v2623 = vpop.f32.mrb[0].mxu0
    %2624 = vmatprep.mubr.f32.mxu0 %v134
    %2625 = vmatmul.mubr.f32.gmra.mrb[0].mxu0 %v37
    %v2626 = vpop.f32.mrb[0].mxu0
    %v2627 = vadd.f32 %v2543, %v2626
    %v2628 = vpop.f32.mrb[0].mxu0
    %2629 = vmatprep.mubr.f32.mxu0 %v137
    %2630 = vmatmul.mubr.f32.gmra.mrb[0].mxu0 %v39
    %v2631 = vpop.f32.mrb[0].mxu0
    %v2632 = vadd.f32 %v2543, %v2631
    %v2633 = vpop.f32.mrb[0].mxu0
    %2634 = vmatprep.mubr.f32.mxu0 %v140
    %2635 = vmatmul.mubr.f32.gmra.mrb[0].mxu0 %v41
    %v2636 = vpop.f32.mrb[0].mxu0
    %v2637 = vadd.f32 %v2543, %v2636
    %v2638 = vpop.f32.mrb[0].mxu0
    %2639 = vmatprep.mubr.f32.mxu0 %v143
    %2640 = vmatmul.mubr.f32.gmra.mrb[0].mxu0 %v43
    %v2641 = vpop.f32.mrb[0].mxu0
    %v2642 = vadd.f32 %v2543, %v2641
    %v2643 = vpop.f32.mrb[0].mxu0
    %2644 = vmatprep.mubr.f32.mxu0 %v146
    %2645 = vmatmul.mubr.f32.gmra.mrb[0].mxu0 %v45
    %v2646 = vpop.f32.mrb[0].mxu0
    %v2647 = vadd.f32 %v2543, %v2646
    %v2648 = vpop.f32.mrb[0].mxu0
    %2649 = vmatprep.mubr.f32.mxu0 %v149
    %2650 = vmatmul.mubr.f32.gmra.mrb[0].mxu0 %v47
    %v2651 = vpop.f32.mrb[0].mxu0
    %v2652 = vadd.f32 %v2543, %v2651
    %v2653 = vpop.f32.mrb[0].mxu0
    %2654 = vmatprep.mubr.f32.mxu0 %v152
    %2655 = vmatmul.mubr.f32.gmra.mrb[0].mxu0 %v49
    %v2656 = vpop.f32.mrb[0].mxu0
    %v2657 = vadd.f32 %v2543, %v2656
    %v2658 = vpop.f32.mrb[0].mxu0
    %2659 = vmatprep.mubr.f32.mxu0 %v155
    %2660 = vmatmul.mubr.f32.gmra.mrb[0].mxu0 %v51
    %v2661 = vpop.f32.mrb[0].mxu0
    %v2662 = vadd.f32 %v2543, %v2661
    %v2663 = vpop.f32.mrb[0].mxu0
    %2664 = vmatprep.mubr.f32.mxu0 %v158
    %2665 = vmatmul.mubr.f32.gmra.mrb[0].mxu0 %v53
    %v2666 = vpop.f32.mrb[0].mxu0
    %v2667 = vadd.f32 %v2543, %v2666
    %v2668 = vpop.f32.mrb[0].mxu0
    %2669 = vmatprep.mubr.f32.mxu0 %v161
    %2670 = vmatmul.mubr.f32.gmra.mrb[0].mxu0 %v55
    %v2671 = vpop.f32.mrb[0].mxu0
    %v2672 = vadd.f32 %v2543, %v2671
    %v2673 = vpop.f32.mrb[0].mxu0
    %2674 = vmatprep.mubr.f32.mxu0 %v164
    %2675 = vmatmul.mubr.f32.gmra.mrb[0].mxu0 %v57
    %v2676 = vpop.f32.mrb[0].mxu0
    %v2677 = vadd.f32 %v2543, %v2676
    %v2678 = vpop.f32.mrb[0].mxu0
    %2679 = vmatprep.mubr.f32.mxu0 %v167
    %2680 = vmatmul.mubr.f32.gmra.mrb[0].mxu0 %v59
    %v2681 = vpop.f32.mrb[0].mxu0
    %v2682 = vadd.f32 %v2543, %v2681
    %v2683 = vpop.f32.mrb[0].mxu0
    %2684 = vmatprep.mubr.f32.mxu0 %v170
    %2685 = vmatmul.mubr.f32.gmra.mrb[0].mxu0 %v61
    %v2686 = vpop.f32.mrb[0].mxu0
    %v2687 = vadd.f32 %v2543, %v2686
    %v2688 = vpop.f32.mrb[0].mxu0
    %2689 = vmatprep.mubr.f32.mxu0 %v173
    %2690 = vmatmul.mubr.f32.gmra.mrb[0].mxu0 %v63
    %v2691 = vpop.f32.mrb[0].mxu0
    %v2692 = vadd.f32 %v2543, %v2691
    %v2693 = vpop.f32.mrb[0].mxu0
    %2694 = vmatprep.mubr.f32.mxu0 %v176
    %2695 = vmatmul.mubr.f32.gmra.mrb[0].mxu0 %v65
    %v2696 = vpop.f32.mrb[0].mxu0
    %v2697 = vadd.f32 %v2543, %v2696
    %v2698 = vpop.f32.mrb[0].mxu0
    %2699 = vmatprep.mubr.f32.mxu0 %v179
    %2700 = vmatmul.mubr.f32.gmra.mrb[0].mxu0 %v67
    %v2701 = vpop.f32.mrb[0].mxu0
    %v2702 = vadd.f32 %v2543, %v2701
    %v2703 = vpop.f32.mrb[0].mxu0
    %2704 = vmatprep.mubr.f32.mxu0 %v182
    %2705 = vmatmul.mubr.f32.gmra.mrb[0].mxu0 %v69
    %v2706 = vpop.f32.mrb[0].mxu0
    %v2707 = vadd.f32 %v2543, %v2706
    %v2708 = vpop.f32.mrb[0].mxu0
    %2709 = vmatprep.mubr.f32.mxu0 %v185
    %2710 = vmatmul.mubr.f32.gmra.mrb[0].mxu0 %v71
    %v2711 = vpop.f32.mrb[0].mxu0
    %v2712 = vadd.f32 %v2543, %v2711
    %v2713 = vpop.f32.mrb[0].mxu0
    %2714 = vmatprep.mubr.f32.mxu0 %v188
    %2715 = vmatmul.mubr.f32.gmra.mrb[0].mxu0 %v73
    %v2716 = vpop.f32.mrb[0].mxu0
    %v2717 = vadd.f32 %v2543, %v2716
    %v2718 = vpop.f32.mrb[0].mxu0
    %2719 = vmatprep.mubr.f32.mxu0 %v191
    %2720 = vmatmul.mubr.f32.gmra.mrb[0].mxu0 %v75
    %v2721 = vpop.f32.mrb[0].mxu0
    %v2722 = vadd.f32 %v2543, %v2721
    %v2723 = vpop.f32.mrb[0].mxu0
    %2724 = vmatprep.mubr.f32.mxu0 %v194
    %2725 = vmatmul.mubr.f32.gmra.mrb[0].mxu0 %v77
    %v2726 = vpop.f32.mrb[0].mxu0
    %v2727 = vadd.f32 %v2543, %v2726
    %v2728 = vpop.f32.mrb[0].mxu0
    %2729 = vmatprep.mubr.f32.mxu0 %v197
    %2730 = vmatmul.mubr.f32.gmra.mrb[0].mxu0 %v79
    %v2731 = vpop.f32.mrb[0].mxu0
    %v2732 = vadd.f32 %v2543, %v2731
    %v2733 = vpop.f32.mrb[0].mxu0
    %2734 = vdwg.mxu0
    %v2735 = vmax.f32 %v2612, 0.0
    %v2736 = vmax.f32 %v2617, 0.0
    %v2737 = vmax.f32 %v2622, 0.0
    %v2738 = vmax.f32 %v2627, 0.0
    %v2739 = vmax.f32 %v2632, 0.0
    %v2740 = vmax.f32 %v2637, 0.0
    %v2741 = vmax.f32 %v2642, 0.0
    %v2742 = vmax.f32 %v2647, 0.0
    %v2743 = vmax.f32 %v2652, 0.0
    %v2744 = vmax.f32 %v2657, 0.0
    %v2745 = vmax.f32 %v2662, 0.0
    %v2746 = vmax.f32 %v2667, 0.0
    %v2747 = vmax.f32 %v2672, 0.0
    %v2748 = vmax.f32 %v2677, 0.0
    %v2749 = vmax.f32 %v2682, 0.0
    %v2750 = vmax.f32 %v2687, 0.0
    %v2751 = vmax.f32 %v2692, 0.0
    %v2752 = vmax.f32 %v2697, 0.0
    %v2753 = vmax.f32 %v2702, 0.0
    %v2754 = vmax.f32 %v2707, 0.0
    %v2755 = vmax.f32 %v2712, 0.0
    %v2756 = vmax.f32 %v2717, 0.0
    %v2757 = vmax.f32 %v2722, 0.0
    %v2758 = vmax.f32 %v2727, 0.0
    %v2759 = vmax.f32 %v2732, 0.0
    %s2760 = scalar_lea.vmem %s2, 768
    %v2761 = vld [vmem:[%s2760] sm:$0xff]
    %v2762 = vld [vmem:[%s2760 + $0x8] sm:$0xff]
    %v2763 = vld [vmem:[%s2760 + $0x10] sm:$0xff]
    %v2764 = vld [vmem:[%s2760 + $0x18] sm:$0xff]
    %v2765 = vld [vmem:[%s2760 + $0x20] sm:$0xff]
    %v2766 = vld [vmem:[%s2760 + $0x28] sm:$0xff]
    %v2767 = vld [vmem:[%s2760 + $0x30] sm:$0xff]
    %v2768 = vld [vmem:[%s2760 + $0x38] sm:$0xff]
    %v2769 = vld [vmem:[%s2760 + $0x40] sm:$0xff]
    %v2770 = vld [vmem:[%s2760 + $0x48] sm:$0xff]
    %v2771 = vld [vmem:[%s2760 + $0x50] sm:$0xff]
    %v2772 = vld [vmem:[%s2760 + $0x58] sm:$0xff]
    %v2773 = vld [vmem:[%s2760 + $0x60] sm:$0xff]
    %v2774 = vld [vmem:[%s2760 + $0x68] sm:$0xff]
    %v2775 = vld [vmem:[%s2760 + $0x70] sm:$0xff]
    %v2776 = vld [vmem:[%s2760 + $0x78] sm:$0xff]
    %s2777 = scalar_lea.vmem %s3, 6
    %v2778 = vld [vmem:[%s2777] sm:$0x1]
    %2779 = vmatprep.subr.mxu0 0.0
    %2780 = vmatpush1.msra.mxu0 %v2761
    %2781 = vmatprep.subr.mxu0 0.0
    %2782 = vmatpush1.msra.mxu0 %v2762
    %2783 = vmatprep.subr.mxu0 0.0
    %2784 = vmatpush1.msra.mxu0 %v2763
    %2785 = vmatprep.subr.mxu0 0.0
    %2786 = vmatpush1.msra.mxu0 %v2764
    %2787 = vmatprep.subr.mxu0 0.0
    %2788 = vmatpush1.msra.mxu0 %v2765
    %2789 = vmatprep.subr.mxu0 0.0
    %2790 = vmatpush1.msra.mxu0 %v2766
    %2791 = vmatprep.subr.mxu0 0.0
    %2792 = vmatpush1.msra.mxu0 %v2767
    %2793 = vmatprep.subr.mxu0 0.0
    %2794 = vmatpush1.msra.mxu0 %v2768
    %2795 = vmatprep.subr.mxu0 0.0
    %2796 = vmatpush1.msra.mxu0 %v2769
    %2797 = vmatprep.subr.mxu0 0.0
    %2798 = vmatpush1.msra.mxu0 %v2770
    %2799 = vmatprep.subr.mxu0 0.0
    %2800 = vmatpush1.msra.mxu0 %v2771
    %2801 = vmatprep.subr.mxu0 0.0
    %2802 = vmatpush1.msra.mxu0 %v2772
    %2803 = vmatprep.subr.mxu0 0.0
    %2804 = vmatpush1.msra.mxu0 %v2773
    %2805 = vmatprep.subr.mxu0 0.0
    %2806 = vmatpush1.msra.mxu0 %v2774
    %2807 = vmatprep.subr.mxu0 0.0
    %2808 = vmatpush1.msra.mxu0 %v2775
    %2809 = vmatprep.subr.mxu0 0.0
    %2810 = vmatpush1.msra.mxu0 %v2776
    %2811 = vmatprep.subr.mxu0 0.0
    %2812 = vmatpush1.msra.mxu0 0.0
    %2813 = vmatprep.subr.mxu0 0.0
    %2814 = vmatpush1.msra.mxu0 0.0
    %2815 = vmatprep.subr.mxu0 0.0
    %2816 = vmatpush1.msra.mxu0 0.0
    %2817 = vmatprep.subr.mxu0 0.0
    %2818 = vmatpush1.msra.mxu0 0.0
    %2819 = vmatprep.subr.mxu0 0.0
    %2820 = vmatpush1.msra.mxu0 0.0
    %2821 = vmatprep.subr.mxu0 0.0
    %2822 = vmatpush1.msra.mxu0 0.0
    %2823 = vmatprep.subr.mxu0 0.0
    %2824 = vmatpush1.msra.mxu0 0.0
    %2825 = vmatprep.subr.mxu0 0.0
    %2826 = vmatpush1.msra.mxu0 0.0
    %2827 = vmatprep.subr.mxu0 0.0
    %2828 = vmatpush1.msra.mxu0 0.0
    %2829 = vmatprep.subr.mxu0 0.0
    %2830 = vmatpush1.msra.mxu0 0.0
    %2831 = vmatprep.subr.mxu0 0.0
    %2832 = vmatpush1.msra.mxu0 0.0
    %2833 = vmatprep.subr.mxu0 0.0
    %2834 = vmatpush1.msra.mxu0 0.0
    %2835 = vmatprep.subr.mxu0 0.0
    %2836 = vmatpush1.msra.mxu0 0.0
    %2837 = vmatprep.subr.mxu0 0.0
    %2838 = vmatpush1.msra.mxu0 0.0
    %2839 = vmatprep.subr.mxu0 0.0
    %2840 = vmatpush1.msra.mxu0 0.0
    %2841 = vmatprep.subr.mxu0 0.0
    %2842 = vmatpush1.msra.mxu0 0.0
    %2843 = vmatprep.mubr.f32.mxu0 0.0
    %2844 = vmatmul.mubr.f32.gmra.mrb[0].mxu0 %v2735
    %v2845 = vpop.f32.mrb[0].mxu0
    %v2846 = vadd.f32 0.0, %v2845
    %v2847 = vpop.f32.mrb[0].mxu0
    %2848 = vmatprep.mubr.f32.mxu0 0.0
    %2849 = vmatmul.mubr.f32.gmra.mrb[0].mxu0 %v2736
    %v2850 = vpop.f32.mrb[0].mxu0
    %v2851 = vadd.f32 0.0, %v2850
    %v2852 = vpop.f32.mrb[0].mxu0
    %2853 = vmatprep.mubr.f32.mxu0 0.0
    %2854 = vmatmul.mubr.f32.gmra.mrb[0].mxu0 %v2737
    %v2855 = vpop.f32.mrb[0].mxu0
    %v2856 = vadd.f32 0.0, %v2855
    %v2857 = vpop.f32.mrb[0].mxu0
    %2858 = vmatprep.mubr.f32.mxu0 0.0
    %2859 = vmatmul.mubr.f32.gmra.mrb[0].mxu0 %v2738
    %v2860 = vpop.f32.mrb[0].mxu0
    %v2861 = vadd.f32 0.0, %v2860
    %v2862 = vpop.f32.mrb[0].mxu0
    %2863 = vmatprep.mubr.f32.mxu0 0.0
    %2864 = vmatmul.mubr.f32.gmra.mrb[0].mxu0 %v2739
    %v2865 = vpop.f32.mrb[0].mxu0
    %v2866 = vadd.f32 0.0, %v2865
    %v2867 = vpop.f32.mrb[0].mxu0
    %2868 = vmatprep.mubr.f32.mxu0 0.0
    %2869 = vmatmul.mubr.f32.gmra.mrb[0].mxu0 %v2740
    %v2870 = vpop.f32.mrb[0].mxu0
    %v2871 = vadd.f32 0.0, %v2870
    %v2872 = vpop.f32.mrb[0].mxu0
    %2873 = vmatprep.mubr.f32.mxu0 0.0
    %2874 = vmatmul.mubr.f32.gmra.mrb[0].mxu0 %v2741
    %v2875 = vpop.f32.mrb[0].mxu0
    %v2876 = vadd.f32 0.0, %v2875
    %v2877 = vpop.f32.mrb[0].mxu0
    %2878 = vmatprep.mubr.f32.mxu0 0.0
    %2879 = vmatmul.mubr.f32.gmra.mrb[0].mxu0 %v2742
    %v2880 = vpop.f32.mrb[0].mxu0
    %v2881 = vadd.f32 0.0, %v2880
    %v2882 = vpop.f32.mrb[0].mxu0
    %2883 = vmatprep.mubr.f32.mxu0 0.0
    %2884 = vmatmul.mubr.f32.gmra.mrb[0].mxu0 %v2743
    %v2885 = vpop.f32.mrb[0].mxu0
    %v2886 = vadd.f32 0.0, %v2885
    %v2887 = vpop.f32.mrb[0].mxu0
    %2888 = vmatprep.mubr.f32.mxu0 0.0
    %2889 = vmatmul.mubr.f32.gmra.mrb[0].mxu0 %v2744
    %v2890 = vpop.f32.mrb[0].mxu0
    %v2891 = vadd.f32 0.0, %v2890
    %v2892 = vpop.f32.mrb[0].mxu0
    %2893 = vmatprep.mubr.f32.mxu0 0.0
    %2894 = vmatmul.mubr.f32.gmra.mrb[0].mxu0 %v2745
    %v2895 = vpop.f32.mrb[0].mxu0
    %v2896 = vadd.f32 0.0, %v2895
    %v2897 = vpop.f32.mrb[0].mxu0
    %2898 = vmatprep.mubr.f32.mxu0 0.0
    %2899 = vmatmul.mubr.f32.gmra.mrb[0].mxu0 %v2746
    %v2900 = vpop.f32.mrb[0].mxu0
    %v2901 = vadd.f32 0.0, %v2900
    %v2902 = vpop.f32.mrb[0].mxu0
    %2903 = vmatprep.mubr.f32.mxu0 0.0
    %2904 = vmatmul.mubr.f32.gmra.mrb[0].mxu0 %v2747
    %v2905 = vpop.f32.mrb[0].mxu0
    %v2906 = vadd.f32 0.0, %v2905
    %v2907 = vpop.f32.mrb[0].mxu0
    %2908 = vmatprep.mubr.f32.mxu0 0.0
    %2909 = vmatmul.mubr.f32.gmra.mrb[0].mxu0 %v2748
    %v2910 = vpop.f32.mrb[0].mxu0
    %v2911 = vadd.f32 0.0, %v2910
    %v2912 = vpop.f32.mrb[0].mxu0
    %2913 = vmatprep.mubr.f32.mxu0 0.0
    %2914 = vmatmul.mubr.f32.gmra.mrb[0].mxu0 %v2749
    %v2915 = vpop.f32.mrb[0].mxu0
    %v2916 = vadd.f32 0.0, %v2915
    %v2917 = vpop.f32.mrb[0].mxu0
    %2918 = vmatprep.mubr.f32.mxu0 0.0
    %2919 = vmatmul.mubr.f32.gmra.mrb[0].mxu0 %v2750
    %v2920 = vpop.f32.mrb[0].mxu0
    %v2921 = vadd.f32 0.0, %v2920
    %v2922 = vpop.f32.mrb[0].mxu0
    %2923 = vmatprep.mubr.f32.mxu0 0.0
    %2924 = vmatmul.mubr.f32.gmra.mrb[0].mxu0 %v2751
    %v2925 = vpop.f32.mrb[0].mxu0
    %v2926 = vadd.f32 0.0, %v2925
    %v2927 = vpop.f32.mrb[0].mxu0
    %2928 = vmatprep.mubr.f32.mxu0 0.0
    %2929 = vmatmul.mubr.f32.gmra.mrb[0].mxu0 %v2752
    %v2930 = vpop.f32.mrb[0].mxu0
    %v2931 = vadd.f32 0.0, %v2930
    %v2932 = vpop.f32.mrb[0].mxu0
    %2933 = vmatprep.mubr.f32.mxu0 0.0
    %2934 = vmatmul.mubr.f32.gmra.mrb[0].mxu0 %v2753
    %v2935 = vpop.f32.mrb[0].mxu0
    %v2936 = vadd.f32 0.0, %v2935
    %v2937 = vpop.f32.mrb[0].mxu0
    %2938 = vmatprep.mubr.f32.mxu0 0.0
    %2939 = vmatmul.mubr.f32.gmra.mrb[0].mxu0 %v2754
    %v2940 = vpop.f32.mrb[0].mxu0
    %v2941 = vadd.f32 0.0, %v2940
    %v2942 = vpop.f32.mrb[0].mxu0
    %2943 = vmatprep.mubr.f32.mxu0 0.0
    %2944 = vmatmul.mubr.f32.gmra.mrb[0].mxu0 %v2755
    %v2945 = vpop.f32.mrb[0].mxu0
    %v2946 = vadd.f32 0.0, %v2945
    %v2947 = vpop.f32.mrb[0].mxu0
    %2948 = vmatprep.mubr.f32.mxu0 0.0
    %2949 = vmatmul.mubr.f32.gmra.mrb[0].mxu0 %v2756
    %v2950 = vpop.f32.mrb[0].mxu0
    %v2951 = vadd.f32 0.0, %v2950
    %v2952 = vpop.f32.mrb[0].mxu0
    %2953 = vmatprep.mubr.f32.mxu0 0.0
    %2954 = vmatmul.mubr.f32.gmra.mrb[0].mxu0 %v2757
    %v2955 = vpop.f32.mrb[0].mxu0
    %v2956 = vadd.f32 0.0, %v2955
    %v2957 = vpop.f32.mrb[0].mxu0
    %2958 = vmatprep.mubr.f32.mxu0 0.0
    %2959 = vmatmul.mubr.f32.gmra.mrb[0].mxu0 %v2758
    %v2960 = vpop.f32.mrb[0].mxu0
    %v2961 = vadd.f32 0.0, %v2960
    %v2962 = vpop.f32.mrb[0].mxu0
    %2963 = vmatprep.mubr.f32.mxu0 0.0
    %2964 = vmatmul.mubr.f32.gmra.mrb[0].mxu0 %v2759
    %v2965 = vpop.f32.mrb[0].mxu0
    %v2966 = vadd.f32 0.0, %v2965
    %v2967 = vpop.f32.mrb[0].mxu0
    %2968 = vdwg.mxu0
    %v2970 = vlaneseq
    %v2971 = vshrl.u32 %v2970, 7
    %v2972 = vsub.s32 0, %v2971
    %v2973 = vrot.slane %v2778, %v2972
    %2975 = vmatprep.subr.mxu0 0.0
    %2976 = vmatpush1.msra.mxu0 %v2846
    %2977 = vmatprep.subr.mxu0 0.0
    %2978 = vmatpush1.msra.mxu0 %v2851
    %2979 = vmatprep.subr.mxu0 0.0
    %2980 = vmatpush1.msra.mxu0 %v2856
    %2981 = vmatprep.subr.mxu0 0.0
    %2982 = vmatpush1.msra.mxu0 %v2861
    %2983 = vmatprep.subr.mxu0 0.0
    %2984 = vmatpush1.msra.mxu0 %v2866
    %2985 = vmatprep.subr.mxu0 0.0
    %2986 = vmatpush1.msra.mxu0 %v2871
    %2987 = vmatprep.subr.mxu0 0.0
    %2988 = vmatpush1.msra.mxu0 %v2876
    %2989 = vmatprep.subr.mxu0 0.0
    %2990 = vmatpush1.msra.mxu0 %v2881
    %2991 = vmatprep.subr.mxu0 0.0
    %2992 = vmatpush1.msra.mxu0 %v2886
    %2993 = vmatprep.subr.mxu0 0.0
    %2994 = vmatpush1.msra.mxu0 %v2891
    %2995 = vmatprep.subr.mxu0 0.0
    %2996 = vmatpush1.msra.mxu0 %v2896
    %2997 = vmatprep.subr.mxu0 0.0
    %2998 = vmatpush1.msra.mxu0 %v2901
    %2999 = vmatprep.subr.mxu0 0.0
    %3000 = vmatpush1.msra.mxu0 %v2906
    %3001 = vmatprep.subr.mxu0 0.0
    %3002 = vmatpush1.msra.mxu0 %v2911
    %3003 = vmatprep.subr.mxu0 0.0
    %3004 = vmatpush1.msra.mxu0 %v2916
    %3005 = vmatprep.subr.mxu0 0.0
    %3006 = vmatpush1.msra.mxu0 %v2921
    %3007 = vmatprep.subr.mxu0 0.0
    %3008 = vmatpush1.msra.mxu0 %v2926
    %3009 = vmatprep.subr.mxu0 0.0
    %3010 = vmatpush1.msra.mxu0 %v2931
    %3011 = vmatprep.subr.mxu0 0.0
    %3012 = vmatpush1.msra.mxu0 %v2936
    %3013 = vmatprep.subr.mxu0 0.0
    %3014 = vmatpush1.msra.mxu0 %v2941
    %3015 = vmatprep.subr.mxu0 0.0
    %3016 = vmatpush1.msra.mxu0 %v2946
    %3017 = vmatprep.subr.mxu0 0.0
    %3018 = vmatpush1.msra.mxu0 %v2951
    %3019 = vmatprep.subr.mxu0 0.0
    %3020 = vmatpush1.msra.mxu0 %v2956
    %3021 = vmatprep.subr.mxu0 0.0
    %3022 = vmatpush1.msra.mxu0 %v2961
    %3023 = vmatprep.subr.mxu0 0.0
    %3024 = vmatpush1.msra.mxu0 %v2966
    %3025 = vmatprep.subr.mxu0 0.0
    %3026 = vmatpush1.msra.mxu0 0.0
    %3027 = vmatprep.subr.mxu0 0.0
    %3028 = vmatpush1.msra.mxu0 0.0
    %3029 = vmatprep.subr.mxu0 0.0
    %3030 = vmatpush1.msra.mxu0 0.0
    %3031 = vmatprep.subr.mxu0 0.0
    %3032 = vmatpush1.msra.mxu0 0.0
    %3033 = vmatprep.subr.mxu0 0.0
    %3034 = vmatpush1.msra.mxu0 0.0
    %3035 = vmatprep.subr.mxu0 0.0
    %3036 = vmatpush1.msra.mxu0 0.0
    %3037 = vmatprep.subr.mxu0 0.0
    %3038 = vmatpush1.msra.mxu0 0.0
    %3039 = vmatprep.mubr.f32.mxu0 %v125
    %3040 = vmatmul.mubr.f32.gmra.mrb[0].mxu0 %v31
    %v3041 = vpop.f32.mrb[0].mxu0
    %v3042 = vadd.f32 %v2973, %v3041
    %v3043 = vpop.f32.mrb[0].mxu0
    %3044 = vmatprep.mubr.f32.mxu0 %v128
    %3045 = vmatmul.mubr.f32.gmra.mrb[0].mxu0 %v33
    %v3046 = vpop.f32.mrb[0].mxu0
    %v3047 = vadd.f32 %v2973, %v3046
    %v3048 = vpop.f32.mrb[0].mxu0
    %3049 = vmatprep.mubr.f32.mxu0 %v131
    %3050 = vmatmul.mubr.f32.gmra.mrb[0].mxu0 %v35
    %v3051 = vpop.f32.mrb[0].mxu0
    %v3052 = vadd.f32 %v2973, %v3051
    %v3053 = vpop.f32.mrb[0].mxu0
    %3054 = vmatprep.mubr.f32.mxu0 %v134
    %3055 = vmatmul.mubr.f32.gmra.mrb[0].mxu0 %v37
    %v3056 = vpop.f32.mrb[0].mxu0
    %v3057 = vadd.f32 %v2973, %v3056
    %v3058 = vpop.f32.mrb[0].mxu0
    %3059 = vmatprep.mubr.f32.mxu0 %v137
    %3060 = vmatmul.mubr.f32.gmra.mrb[0].mxu0 %v39
    %v3061 = vpop.f32.mrb[0].mxu0
    %v3062 = vadd.f32 %v2973, %v3061
    %v3063 = vpop.f32.mrb[0].mxu0
    %3064 = vmatprep.mubr.f32.mxu0 %v140
    %3065 = vmatmul.mubr.f32.gmra.mrb[0].mxu0 %v41
    %v3066 = vpop.f32.mrb[0].mxu0
    %v3067 = vadd.f32 %v2973, %v3066
    %v3068 = vpop.f32.mrb[0].mxu0
    %3069 = vmatprep.mubr.f32.mxu0 %v143
    %3070 = vmatmul.mubr.f32.gmra.mrb[0].mxu0 %v43
    %v3071 = vpop.f32.mrb[0].mxu0
    %v3072 = vadd.f32 %v2973, %v3071
    %v3073 = vpop.f32.mrb[0].mxu0
    %3074 = vmatprep.mubr.f32.mxu0 %v146
    %3075 = vmatmul.mubr.f32.gmra.mrb[0].mxu0 %v45
    %v3076 = vpop.f32.mrb[0].mxu0
    %v3077 = vadd.f32 %v2973, %v3076
    %v3078 = vpop.f32.mrb[0].mxu0
    %3079 = vmatprep.mubr.f32.mxu0 %v149
    %3080 = vmatmul.mubr.f32.gmra.mrb[0].mxu0 %v47
    %v3081 = vpop.f32.mrb[0].mxu0
    %v3082 = vadd.f32 %v2973, %v3081
    %v3083 = vpop.f32.mrb[0].mxu0
    %3084 = vmatprep.mubr.f32.mxu0 %v152
    %3085 = vmatmul.mubr.f32.gmra.mrb[0].mxu0 %v49
    %v3086 = vpop.f32.mrb[0].mxu0
    %v3087 = vadd.f32 %v2973, %v3086
    %v3088 = vpop.f32.mrb[0].mxu0
    %3089 = vmatprep.mubr.f32.mxu0 %v155
    %3090 = vmatmul.mubr.f32.gmra.mrb[0].mxu0 %v51
    %v3091 = vpop.f32.mrb[0].mxu0
    %v3092 = vadd.f32 %v2973, %v3091
    %v3093 = vpop.f32.mrb[0].mxu0
    %3094 = vmatprep.mubr.f32.mxu0 %v158
    %3095 = vmatmul.mubr.f32.gmra.mrb[0].mxu0 %v53
    %v3096 = vpop.f32.mrb[0].mxu0
    %v3097 = vadd.f32 %v2973, %v3096
    %v3098 = vpop.f32.mrb[0].mxu0
    %3099 = vmatprep.mubr.f32.mxu0 %v161
    %3100 = vmatmul.mubr.f32.gmra.mrb[0].mxu0 %v55
    %v3101 = vpop.f32.mrb[0].mxu0
    %v3102 = vadd.f32 %v2973, %v3101
    %v3103 = vpop.f32.mrb[0].mxu0
    %3104 = vmatprep.mubr.f32.mxu0 %v164
    %3105 = vmatmul.mubr.f32.gmra.mrb[0].mxu0 %v57
    %v3106 = vpop.f32.mrb[0].mxu0
    %v3107 = vadd.f32 %v2973, %v3106
    %v3108 = vpop.f32.mrb[0].mxu0
    %3109 = vmatprep.mubr.f32.mxu0 %v167
    %3110 = vmatmul.mubr.f32.gmra.mrb[0].mxu0 %v59
    %v3111 = vpop.f32.mrb[0].mxu0
    %v3112 = vadd.f32 %v2973, %v3111
    %v3113 = vpop.f32.mrb[0].mxu0
    %3114 = vmatprep.mubr.f32.mxu0 %v170
    %3115 = vmatmul.mubr.f32.gmra.mrb[0].mxu0 %v61
    %v3116 = vpop.f32.mrb[0].mxu0
    %v3117 = vadd.f32 %v2973, %v3116
    %v3118 = vpop.f32.mrb[0].mxu0
    %3119 = vmatprep.mubr.f32.mxu0 %v173
    %3120 = vmatmul.mubr.f32.gmra.mrb[0].mxu0 %v63
    %v3121 = vpop.f32.mrb[0].mxu0
    %v3122 = vadd.f32 %v2973, %v3121
    %v3123 = vpop.f32.mrb[0].mxu0
    %3124 = vmatprep.mubr.f32.mxu0 %v176
    %3125 = vmatmul.mubr.f32.gmra.mrb[0].mxu0 %v65
    %v3126 = vpop.f32.mrb[0].mxu0
    %v3127 = vadd.f32 %v2973, %v3126
    %v3128 = vpop.f32.mrb[0].mxu0
    %3129 = vmatprep.mubr.f32.mxu0 %v179
    %3130 = vmatmul.mubr.f32.gmra.mrb[0].mxu0 %v67
    %v3131 = vpop.f32.mrb[0].mxu0
    %v3132 = vadd.f32 %v2973, %v3131
    %v3133 = vpop.f32.mrb[0].mxu0
    %3134 = vmatprep.mubr.f32.mxu0 %v182
    %3135 = vmatmul.mubr.f32.gmra.mrb[0].mxu0 %v69
    %v3136 = vpop.f32.mrb[0].mxu0
    %v3137 = vadd.f32 %v2973, %v3136
    %v3138 = vpop.f32.mrb[0].mxu0
    %3139 = vmatprep.mubr.f32.mxu0 %v185
    %3140 = vmatmul.mubr.f32.gmra.mrb[0].mxu0 %v71
    %v3141 = vpop.f32.mrb[0].mxu0
    %v3142 = vadd.f32 %v2973, %v3141
    %v3143 = vpop.f32.mrb[0].mxu0
    %3144 = vmatprep.mubr.f32.mxu0 %v188
    %3145 = vmatmul.mubr.f32.gmra.mrb[0].mxu0 %v73
    %v3146 = vpop.f32.mrb[0].mxu0
    %v3147 = vadd.f32 %v2973, %v3146
    %v3148 = vpop.f32.mrb[0].mxu0
    %3149 = vmatprep.mubr.f32.mxu0 %v191
    %3150 = vmatmul.mubr.f32.gmra.mrb[0].mxu0 %v75
    %v3151 = vpop.f32.mrb[0].mxu0
    %v3152 = vadd.f32 %v2973, %v3151
    %v3153 = vpop.f32.mrb[0].mxu0
    %3154 = vmatprep.mubr.f32.mxu0 %v194
    %3155 = vmatmul.mubr.f32.gmra.mrb[0].mxu0 %v77
    %v3156 = vpop.f32.mrb[0].mxu0
    %v3157 = vadd.f32 %v2973, %v3156
    %v3158 = vpop.f32.mrb[0].mxu0
    %3159 = vmatprep.mubr.f32.mxu0 %v197
    %3160 = vmatmul.mubr.f32.gmra.mrb[0].mxu0 %v79
    %v3161 = vpop.f32.mrb[0].mxu0
    %v3162 = vadd.f32 %v2973, %v3161
    %v3163 = vpop.f32.mrb[0].mxu0
    %3164 = vdwg.mxu0
    %v3165 = vmax.f32 %v3042, 0.0
    %v3166 = vmax.f32 %v3047, 0.0
    %v3167 = vmax.f32 %v3052, 0.0
    %v3168 = vmax.f32 %v3057, 0.0
    %v3169 = vmax.f32 %v3062, 0.0
    %v3170 = vmax.f32 %v3067, 0.0
    %v3171 = vmax.f32 %v3072, 0.0
    %v3172 = vmax.f32 %v3077, 0.0
    %v3173 = vmax.f32 %v3082, 0.0
    %v3174 = vmax.f32 %v3087, 0.0
    %v3175 = vmax.f32 %v3092, 0.0
    %v3176 = vmax.f32 %v3097, 0.0
    %v3177 = vmax.f32 %v3102, 0.0
    %v3178 = vmax.f32 %v3107, 0.0
    %v3179 = vmax.f32 %v3112, 0.0
    %v3180 = vmax.f32 %v3117, 0.0
    %v3181 = vmax.f32 %v3122, 0.0
    %v3182 = vmax.f32 %v3127, 0.0
    %v3183 = vmax.f32 %v3132, 0.0
    %v3184 = vmax.f32 %v3137, 0.0
    %v3185 = vmax.f32 %v3142, 0.0
    %v3186 = vmax.f32 %v3147, 0.0
    %v3187 = vmax.f32 %v3152, 0.0
    %v3188 = vmax.f32 %v3157, 0.0
    %v3189 = vmax.f32 %v3162, 0.0
    %s3190 = scalar_lea.vmem %s2, 896
    %v3191 = vld [vmem:[%s3190] sm:$0xff]
    %v3192 = vld [vmem:[%s3190 + $0x8] sm:$0xff]
    %v3193 = vld [vmem:[%s3190 + $0x10] sm:$0xff]
    %v3194 = vld [vmem:[%s3190 + $0x18] sm:$0xff]
    %v3195 = vld [vmem:[%s3190 + $0x20] sm:$0xff]
    %v3196 = vld [vmem:[%s3190 + $0x28] sm:$0xff]
    %v3197 = vld [vmem:[%s3190 + $0x30] sm:$0xff]
    %v3198 = vld [vmem:[%s3190 + $0x38] sm:$0xff]
    %v3199 = vld [vmem:[%s3190 + $0x40] sm:$0xff]
    %v3200 = vld [vmem:[%s3190 + $0x48] sm:$0xff]
    %v3201 = vld [vmem:[%s3190 + $0x50] sm:$0xff]
    %v3202 = vld [vmem:[%s3190 + $0x58] sm:$0xff]
    %v3203 = vld [vmem:[%s3190 + $0x60] sm:$0xff]
    %v3204 = vld [vmem:[%s3190 + $0x68] sm:$0xff]
    %v3205 = vld [vmem:[%s3190 + $0x70] sm:$0xff]
    %v3206 = vld [vmem:[%s3190 + $0x78] sm:$0xff]
    %s3207 = scalar_lea.vmem %s3, 7
    %v3208 = vld [vmem:[%s3207] sm:$0x1]
    %3209 = vmatprep.subr.mxu0 0.0
    %3210 = vmatpush1.msra.mxu0 %v3191
    %3211 = vmatprep.subr.mxu0 0.0
    %3212 = vmatpush1.msra.mxu0 %v3192
    %3213 = vmatprep.subr.mxu0 0.0
    %3214 = vmatpush1.msra.mxu0 %v3193
    %3215 = vmatprep.subr.mxu0 0.0
    %3216 = vmatpush1.msra.mxu0 %v3194
    %3217 = vmatprep.subr.mxu0 0.0
    %3218 = vmatpush1.msra.mxu0 %v3195
    %3219 = vmatprep.subr.mxu0 0.0
    %3220 = vmatpush1.msra.mxu0 %v3196
    %3221 = vmatprep.subr.mxu0 0.0
    %3222 = vmatpush1.msra.mxu0 %v3197
    %3223 = vmatprep.subr.mxu0 0.0
    %3224 = vmatpush1.msra.mxu0 %v3198
    %3225 = vmatprep.subr.mxu0 0.0
    %3226 = vmatpush1.msra.mxu0 %v3199
    %3227 = vmatprep.subr.mxu0 0.0
    %3228 = vmatpush1.msra.mxu0 %v3200
    %3229 = vmatprep.subr.mxu0 0.0
    %3230 = vmatpush1.msra.mxu0 %v3201
    %3231 = vmatprep.subr.mxu0 0.0
    %3232 = vmatpush1.msra.mxu0 %v3202
    %3233 = vmatprep.subr.mxu0 0.0
    %3234 = vmatpush1.msra.mxu0 %v3203
    %3235 = vmatprep.subr.mxu0 0.0
    %3236 = vmatpush1.msra.mxu0 %v3204
    %3237 = vmatprep.subr.mxu0 0.0
    %3238 = vmatpush1.msra.mxu0 %v3205
    %3239 = vmatprep.subr.mxu0 0.0
    %3240 = vmatpush1.msra.mxu0 %v3206
    %3241 = vmatprep.subr.mxu0 0.0
    %3242 = vmatpush1.msra.mxu0 0.0
    %3243 = vmatprep.subr.mxu0 0.0
    %3244 = vmatpush1.msra.mxu0 0.0
    %3245 = vmatprep.subr.mxu0 0.0
    %3246 = vmatpush1.msra.mxu0 0.0
    %3247 = vmatprep.subr.mxu0 0.0
    %3248 = vmatpush1.msra.mxu0 0.0
    %3249 = vmatprep.subr.mxu0 0.0
    %3250 = vmatpush1.msra.mxu0 0.0
    %3251 = vmatprep.subr.mxu0 0.0
    %3252 = vmatpush1.msra.mxu0 0.0
    %3253 = vmatprep.subr.mxu0 0.0
    %3254 = vmatpush1.msra.mxu0 0.0
    %3255 = vmatprep.subr.mxu0 0.0
    %3256 = vmatpush1.msra.mxu0 0.0
    %3257 = vmatprep.subr.mxu0 0.0
    %3258 = vmatpush1.msra.mxu0 0.0
    %3259 = vmatprep.subr.mxu0 0.0
    %3260 = vmatpush1.msra.mxu0 0.0
    %3261 = vmatprep.subr.mxu0 0.0
    %3262 = vmatpush1.msra.mxu0 0.0
    %3263 = vmatprep.subr.mxu0 0.0
    %3264 = vmatpush1.msra.mxu0 0.0
    %3265 = vmatprep.subr.mxu0 0.0
    %3266 = vmatpush1.msra.mxu0 0.0
    %3267 = vmatprep.subr.mxu0 0.0
    %3268 = vmatpush1.msra.mxu0 0.0
    %3269 = vmatprep.subr.mxu0 0.0
    %3270 = vmatpush1.msra.mxu0 0.0
    %3271 = vmatprep.subr.mxu0 0.0
    %3272 = vmatpush1.msra.mxu0 0.0
    %3273 = vmatprep.mubr.f32.mxu0 0.0
    %3274 = vmatmul.mubr.f32.gmra.mrb[0].mxu0 %v3165
    %v3275 = vpop.f32.mrb[0].mxu0
    %v3276 = vadd.f32 0.0, %v3275
    %v3277 = vpop.f32.mrb[0].mxu0
    %3278 = vmatprep.mubr.f32.mxu0 0.0
    %3279 = vmatmul.mubr.f32.gmra.mrb[0].mxu0 %v3166
    %v3280 = vpop.f32.mrb[0].mxu0
    %v3281 = vadd.f32 0.0, %v3280
    %v3282 = vpop.f32.mrb[0].mxu0
    %3283 = vmatprep.mubr.f32.mxu0 0.0
    %3284 = vmatmul.mubr.f32.gmra.mrb[0].mxu0 %v3167
    %v3285 = vpop.f32.mrb[0].mxu0
    %v3286 = vadd.f32 0.0, %v3285
    %v3287 = vpop.f32.mrb[0].mxu0
    %3288 = vmatprep.mubr.f32.mxu0 0.0
    %3289 = vmatmul.mubr.f32.gmra.mrb[0].mxu0 %v3168
    %v3290 = vpop.f32.mrb[0].mxu0
    %v3291 = vadd.f32 0.0, %v3290
    %v3292 = vpop.f32.mrb[0].mxu0
    %3293 = vmatprep.mubr.f32.mxu0 0.0
    %3294 = vmatmul.mubr.f32.gmra.mrb[0].mxu0 %v3169
    %v3295 = vpop.f32.mrb[0].mxu0
    %v3296 = vadd.f32 0.0, %v3295
    %v3297 = vpop.f32.mrb[0].mxu0
    %3298 = vmatprep.mubr.f32.mxu0 0.0
    %3299 = vmatmul.mubr.f32.gmra.mrb[0].mxu0 %v3170
    %v3300 = vpop.f32.mrb[0].mxu0
    %v3301 = vadd.f32 0.0, %v3300
    %v3302 = vpop.f32.mrb[0].mxu0
    %3303 = vmatprep.mubr.f32.mxu0 0.0
    %3304 = vmatmul.mubr.f32.gmra.mrb[0].mxu0 %v3171
    %v3305 = vpop.f32.mrb[0].mxu0
    %v3306 = vadd.f32 0.0, %v3305
    %v3307 = vpop.f32.mrb[0].mxu0
    %3308 = vmatprep.mubr.f32.mxu0 0.0
    %3309 = vmatmul.mubr.f32.gmra.mrb[0].mxu0 %v3172
    %v3310 = vpop.f32.mrb[0].mxu0
    %v3311 = vadd.f32 0.0, %v3310
    %v3312 = vpop.f32.mrb[0].mxu0
    %3313 = vmatprep.mubr.f32.mxu0 0.0
    %3314 = vmatmul.mubr.f32.gmra.mrb[0].mxu0 %v3173
    %v3315 = vpop.f32.mrb[0].mxu0
    %v3316 = vadd.f32 0.0, %v3315
    %v3317 = vpop.f32.mrb[0].mxu0
    %3318 = vmatprep.mubr.f32.mxu0 0.0
    %3319 = vmatmul.mubr.f32.gmra.mrb[0].mxu0 %v3174
    %v3320 = vpop.f32.mrb[0].mxu0
    %v3321 = vadd.f32 0.0, %v3320
    %v3322 = vpop.f32.mrb[0].mxu0
    %3323 = vmatprep.mubr.f32.mxu0 0.0
    %3324 = vmatmul.mubr.f32.gmra.mrb[0].mxu0 %v3175
    %v3325 = vpop.f32.mrb[0].mxu0
    %v3326 = vadd.f32 0.0, %v3325
    %v3327 = vpop.f32.mrb[0].mxu0
    %3328 = vmatprep.mubr.f32.mxu0 0.0
    %3329 = vmatmul.mubr.f32.gmra.mrb[0].mxu0 %v3176
    %v3330 = vpop.f32.mrb[0].mxu0
    %v3331 = vadd.f32 0.0, %v3330
    %v3332 = vpop.f32.mrb[0].mxu0
    %3333 = vmatprep.mubr.f32.mxu0 0.0
    %3334 = vmatmul.mubr.f32.gmra.mrb[0].mxu0 %v3177
    %v3335 = vpop.f32.mrb[0].mxu0
    %v3336 = vadd.f32 0.0, %v3335
    %v3337 = vpop.f32.mrb[0].mxu0
    %3338 = vmatprep.mubr.f32.mxu0 0.0
    %3339 = vmatmul.mubr.f32.gmra.mrb[0].mxu0 %v3178
    %v3340 = vpop.f32.mrb[0].mxu0
    %v3341 = vadd.f32 0.0, %v3340
    %v3342 = vpop.f32.mrb[0].mxu0
    %3343 = vmatprep.mubr.f32.mxu0 0.0
    %3344 = vmatmul.mubr.f32.gmra.mrb[0].mxu0 %v3179
    %v3345 = vpop.f32.mrb[0].mxu0
    %v3346 = vadd.f32 0.0, %v3345
    %v3347 = vpop.f32.mrb[0].mxu0
    %3348 = vmatprep.mubr.f32.mxu0 0.0
    %3349 = vmatmul.mubr.f32.gmra.mrb[0].mxu0 %v3180
    %v3350 = vpop.f32.mrb[0].mxu0
    %v3351 = vadd.f32 0.0, %v3350
    %v3352 = vpop.f32.mrb[0].mxu0
    %3353 = vmatprep.mubr.f32.mxu0 0.0
    %3354 = vmatmul.mubr.f32.gmra.mrb[0].mxu0 %v3181
    %v3355 = vpop.f32.mrb[0].mxu0
    %v3356 = vadd.f32 0.0, %v3355
    %v3357 = vpop.f32.mrb[0].mxu0
    %3358 = vmatprep.mubr.f32.mxu0 0.0
    %3359 = vmatmul.mubr.f32.gmra.mrb[0].mxu0 %v3182
    %v3360 = vpop.f32.mrb[0].mxu0
    %v3361 = vadd.f32 0.0, %v3360
    %v3362 = vpop.f32.mrb[0].mxu0
    %3363 = vmatprep.mubr.f32.mxu0 0.0
    %3364 = vmatmul.mubr.f32.gmra.mrb[0].mxu0 %v3183
    %v3365 = vpop.f32.mrb[0].mxu0
    %v3366 = vadd.f32 0.0, %v3365
    %v3367 = vpop.f32.mrb[0].mxu0
    %3368 = vmatprep.mubr.f32.mxu0 0.0
    %3369 = vmatmul.mubr.f32.gmra.mrb[0].mxu0 %v3184
    %v3370 = vpop.f32.mrb[0].mxu0
    %v3371 = vadd.f32 0.0, %v3370
    %v3372 = vpop.f32.mrb[0].mxu0
    %3373 = vmatprep.mubr.f32.mxu0 0.0
    %3374 = vmatmul.mubr.f32.gmra.mrb[0].mxu0 %v3185
    %v3375 = vpop.f32.mrb[0].mxu0
    %v3376 = vadd.f32 0.0, %v3375
    %v3377 = vpop.f32.mrb[0].mxu0
    %3378 = vmatprep.mubr.f32.mxu0 0.0
    %3379 = vmatmul.mubr.f32.gmra.mrb[0].mxu0 %v3186
    %v3380 = vpop.f32.mrb[0].mxu0
    %v3381 = vadd.f32 0.0, %v3380
    %v3382 = vpop.f32.mrb[0].mxu0
    %3383 = vmatprep.mubr.f32.mxu0 0.0
    %3384 = vmatmul.mubr.f32.gmra.mrb[0].mxu0 %v3187
    %v3385 = vpop.f32.mrb[0].mxu0
    %v3386 = vadd.f32 0.0, %v3385
    %v3387 = vpop.f32.mrb[0].mxu0
    %3388 = vmatprep.mubr.f32.mxu0 0.0
    %3389 = vmatmul.mubr.f32.gmra.mrb[0].mxu0 %v3188
    %v3390 = vpop.f32.mrb[0].mxu0
    %v3391 = vadd.f32 0.0, %v3390
    %v3392 = vpop.f32.mrb[0].mxu0
    %3393 = vmatprep.mubr.f32.mxu0 0.0
    %3394 = vmatmul.mubr.f32.gmra.mrb[0].mxu0 %v3189
    %v3395 = vpop.f32.mrb[0].mxu0
    %v3396 = vadd.f32 0.0, %v3395
    %v3397 = vpop.f32.mrb[0].mxu0
    %3398 = vdwg.mxu0
    %v3400 = vlaneseq
    %v3401 = vshrl.u32 %v3400, 7
    %v3402 = vsub.s32 0, %v3401
    %v3403 = vrot.slane %v3208, %v3402
    %3405 = vmatprep.subr.mxu0 0.0
    %3406 = vmatpush1.msra.mxu0 %v3276
    %3407 = vmatprep.subr.mxu0 0.0
    %3408 = vmatpush1.msra.mxu0 %v3281
    %3409 = vmatprep.subr.mxu0 0.0
    %3410 = vmatpush1.msra.mxu0 %v3286
    %3411 = vmatprep.subr.mxu0 0.0
    %3412 = vmatpush1.msra.mxu0 %v3291
    %3413 = vmatprep.subr.mxu0 0.0
    %3414 = vmatpush1.msra.mxu0 %v3296
    %3415 = vmatprep.subr.mxu0 0.0
    %3416 = vmatpush1.msra.mxu0 %v3301
    %3417 = vmatprep.subr.mxu0 0.0
    %3418 = vmatpush1.msra.mxu0 %v3306
    %3419 = vmatprep.subr.mxu0 0.0
    %3420 = vmatpush1.msra.mxu0 %v3311
    %3421 = vmatprep.subr.mxu0 0.0
    %3422 = vmatpush1.msra.mxu0 %v3316
    %3423 = vmatprep.subr.mxu0 0.0
    %3424 = vmatpush1.msra.mxu0 %v3321
    %3425 = vmatprep.subr.mxu0 0.0
    %3426 = vmatpush1.msra.mxu0 %v3326
    %3427 = vmatprep.subr.mxu0 0.0
    %3428 = vmatpush1.msra.mxu0 %v3331
    %3429 = vmatprep.subr.mxu0 0.0
    %3430 = vmatpush1.msra.mxu0 %v3336
    %3431 = vmatprep.subr.mxu0 0.0
    %3432 = vmatpush1.msra.mxu0 %v3341
    %3433 = vmatprep.subr.mxu0 0.0
    %3434 = vmatpush1.msra.mxu0 %v3346
    %3435 = vmatprep.subr.mxu0 0.0
    %3436 = vmatpush1.msra.mxu0 %v3351
    %3437 = vmatprep.subr.mxu0 0.0
    %3438 = vmatpush1.msra.mxu0 %v3356
    %3439 = vmatprep.subr.mxu0 0.0
    %3440 = vmatpush1.msra.mxu0 %v3361
    %3441 = vmatprep.subr.mxu0 0.0
    %3442 = vmatpush1.msra.mxu0 %v3366
    %3443 = vmatprep.subr.mxu0 0.0
    %3444 = vmatpush1.msra.mxu0 %v3371
    %3445 = vmatprep.subr.mxu0 0.0
    %3446 = vmatpush1.msra.mxu0 %v3376
    %3447 = vmatprep.subr.mxu0 0.0
    %3448 = vmatpush1.msra.mxu0 %v3381
    %3449 = vmatprep.subr.mxu0 0.0
    %3450 = vmatpush1.msra.mxu0 %v3386
    %3451 = vmatprep.subr.mxu0 0.0
    %3452 = vmatpush1.msra.mxu0 %v3391
    %3453 = vmatprep.subr.mxu0 0.0
    %3454 = vmatpush1.msra.mxu0 %v3396
    %3455 = vmatprep.subr.mxu0 0.0
    %3456 = vmatpush1.msra.mxu0 0.0
    %3457 = vmatprep.subr.mxu0 0.0
    %3458 = vmatpush1.msra.mxu0 0.0
    %3459 = vmatprep.subr.mxu0 0.0
    %3460 = vmatpush1.msra.mxu0 0.0
    %3461 = vmatprep.subr.mxu0 0.0
    %3462 = vmatpush1.msra.mxu0 0.0
    %3463 = vmatprep.subr.mxu0 0.0
    %3464 = vmatpush1.msra.mxu0 0.0
    %3465 = vmatprep.subr.mxu0 0.0
    %3466 = vmatpush1.msra.mxu0 0.0
    %3467 = vmatprep.subr.mxu0 0.0
    %3468 = vmatpush1.msra.mxu0 0.0
    %3469 = vmatprep.mubr.f32.mxu0 %v125
    %3470 = vmatmul.mubr.f32.gmra.mrb[0].mxu0 %v31
    %v3471 = vpop.f32.mrb[0].mxu0
    %v3472 = vadd.f32 %v3403, %v3471
    %v3473 = vpop.f32.mrb[0].mxu0
    %3474 = vmatprep.mubr.f32.mxu0 %v128
    %3475 = vmatmul.mubr.f32.gmra.mrb[0].mxu0 %v33
    %v3476 = vpop.f32.mrb[0].mxu0
    %v3477 = vadd.f32 %v3403, %v3476
    %v3478 = vpop.f32.mrb[0].mxu0
    %3479 = vmatprep.mubr.f32.mxu0 %v131
    %3480 = vmatmul.mubr.f32.gmra.mrb[0].mxu0 %v35
    %v3481 = vpop.f32.mrb[0].mxu0
    %v3482 = vadd.f32 %v3403, %v3481
    %v3483 = vpop.f32.mrb[0].mxu0
    %3484 = vmatprep.mubr.f32.mxu0 %v134
    %3485 = vmatmul.mubr.f32.gmra.mrb[0].mxu0 %v37
    %v3486 = vpop.f32.mrb[0].mxu0
    %v3487 = vadd.f32 %v3403, %v3486
    %v3488 = vpop.f32.mrb[0].mxu0
    %3489 = vmatprep.mubr.f32.mxu0 %v137
    %3490 = vmatmul.mubr.f32.gmra.mrb[0].mxu0 %v39
    %v3491 = vpop.f32.mrb[0].mxu0
    %v3492 = vadd.f32 %v3403, %v3491
    %v3493 = vpop.f32.mrb[0].mxu0
    %3494 = vmatprep.mubr.f32.mxu0 %v140
    %3495 = vmatmul.mubr.f32.gmra.mrb[0].mxu0 %v41
    %v3496 = vpop.f32.mrb[0].mxu0
    %v3497 = vadd.f32 %v3403, %v3496
    %v3498 = vpop.f32.mrb[0].mxu0
    %3499 = vmatprep.mubr.f32.mxu0 %v143
    %3500 = vmatmul.mubr.f32.gmra.mrb[0].mxu0 %v43
    %v3501 = vpop.f32.mrb[0].mxu0
    %v3502 = vadd.f32 %v3403, %v3501
    %v3503 = vpop.f32.mrb[0].mxu0
    %3504 = vmatprep.mubr.f32.mxu0 %v146
    %3505 = vmatmul.mubr.f32.gmra.mrb[0].mxu0 %v45
    %v3506 = vpop.f32.mrb[0].mxu0
    %v3507 = vadd.f32 %v3403, %v3506
    %v3508 = vpop.f32.mrb[0].mxu0
    %3509 = vmatprep.mubr.f32.mxu0 %v149
    %3510 = vmatmul.mubr.f32.gmra.mrb[0].mxu0 %v47
    %v3511 = vpop.f32.mrb[0].mxu0
    %v3512 = vadd.f32 %v3403, %v3511
    %v3513 = vpop.f32.mrb[0].mxu0
    %3514 = vmatprep.mubr.f32.mxu0 %v152
    %3515 = vmatmul.mubr.f32.gmra.mrb[0].mxu0 %v49
    %v3516 = vpop.f32.mrb[0].mxu0
    %v3517 = vadd.f32 %v3403, %v3516
    %v3518 = vpop.f32.mrb[0].mxu0
    %3519 = vmatprep.mubr.f32.mxu0 %v155
    %3520 = vmatmul.mubr.f32.gmra.mrb[0].mxu0 %v51
    %v3521 = vpop.f32.mrb[0].mxu0
    %v3522 = vadd.f32 %v3403, %v3521
    %v3523 = vpop.f32.mrb[0].mxu0
    %3524 = vmatprep.mubr.f32.mxu0 %v158
    %3525 = vmatmul.mubr.f32.gmra.mrb[0].mxu0 %v53
    %v3526 = vpop.f32.mrb[0].mxu0
    %v3527 = vadd.f32 %v3403, %v3526
    %v3528 = vpop.f32.mrb[0].mxu0
    %3529 = vmatprep.mubr.f32.mxu0 %v161
    %3530 = vmatmul.mubr.f32.gmra.mrb[0].mxu0 %v55
    %v3531 = vpop.f32.mrb[0].mxu0
    %v3532 = vadd.f32 %v3403, %v3531
    %v3533 = vpop.f32.mrb[0].mxu0
    %3534 = vmatprep.mubr.f32.mxu0 %v164
    %3535 = vmatmul.mubr.f32.gmra.mrb[0].mxu0 %v57
    %v3536 = vpop.f32.mrb[0].mxu0
    %v3537 = vadd.f32 %v3403, %v3536
    %v3538 = vpop.f32.mrb[0].mxu0
    %3539 = vmatprep.mubr.f32.mxu0 %v167
    %3540 = vmatmul.mubr.f32.gmra.mrb[0].mxu0 %v59
    %v3541 = vpop.f32.mrb[0].mxu0
    %v3542 = vadd.f32 %v3403, %v3541
    %v3543 = vpop.f32.mrb[0].mxu0
    %3544 = vmatprep.mubr.f32.mxu0 %v170
    %3545 = vmatmul.mubr.f32.gmra.mrb[0].mxu0 %v61
    %v3546 = vpop.f32.mrb[0].mxu0
    %v3547 = vadd.f32 %v3403, %v3546
    %v3548 = vpop.f32.mrb[0].mxu0
    %3549 = vmatprep.mubr.f32.mxu0 %v173
    %3550 = vmatmul.mubr.f32.gmra.mrb[0].mxu0 %v63
    %v3551 = vpop.f32.mrb[0].mxu0
    %v3552 = vadd.f32 %v3403, %v3551
    %v3553 = vpop.f32.mrb[0].mxu0
    %3554 = vmatprep.mubr.f32.mxu0 %v176
    %3555 = vmatmul.mubr.f32.gmra.mrb[0].mxu0 %v65
    %v3556 = vpop.f32.mrb[0].mxu0
    %v3557 = vadd.f32 %v3403, %v3556
    %v3558 = vpop.f32.mrb[0].mxu0
    %3559 = vmatprep.mubr.f32.mxu0 %v179
    %3560 = vmatmul.mubr.f32.gmra.mrb[0].mxu0 %v67
    %v3561 = vpop.f32.mrb[0].mxu0
    %v3562 = vadd.f32 %v3403, %v3561
    %v3563 = vpop.f32.mrb[0].mxu0
    %3564 = vmatprep.mubr.f32.mxu0 %v182
    %3565 = vmatmul.mubr.f32.gmra.mrb[0].mxu0 %v69
    %v3566 = vpop.f32.mrb[0].mxu0
    %v3567 = vadd.f32 %v3403, %v3566
    %v3568 = vpop.f32.mrb[0].mxu0
    %3569 = vmatprep.mubr.f32.mxu0 %v185
    %3570 = vmatmul.mubr.f32.gmra.mrb[0].mxu0 %v71
    %v3571 = vpop.f32.mrb[0].mxu0
    %v3572 = vadd.f32 %v3403, %v3571
    %v3573 = vpop.f32.mrb[0].mxu0
    %3574 = vmatprep.mubr.f32.mxu0 %v188
    %3575 = vmatmul.mubr.f32.gmra.mrb[0].mxu0 %v73
    %v3576 = vpop.f32.mrb[0].mxu0
    %v3577 = vadd.f32 %v3403, %v3576
    %v3578 = vpop.f32.mrb[0].mxu0
    %3579 = vmatprep.mubr.f32.mxu0 %v191
    %3580 = vmatmul.mubr.f32.gmra.mrb[0].mxu0 %v75
    %v3581 = vpop.f32.mrb[0].mxu0
    %v3582 = vadd.f32 %v3403, %v3581
    %v3583 = vpop.f32.mrb[0].mxu0
    %3584 = vmatprep.mubr.f32.mxu0 %v194
    %3585 = vmatmul.mubr.f32.gmra.mrb[0].mxu0 %v77
    %v3586 = vpop.f32.mrb[0].mxu0
    %v3587 = vadd.f32 %v3403, %v3586
    %v3588 = vpop.f32.mrb[0].mxu0
    %3589 = vmatprep.mubr.f32.mxu0 %v197
    %3590 = vmatmul.mubr.f32.gmra.mrb[0].mxu0 %v79
    %v3591 = vpop.f32.mrb[0].mxu0
    %v3592 = vadd.f32 %v3403, %v3591
    %v3593 = vpop.f32.mrb[0].mxu0
    %3594 = vdwg.mxu0
    %v3595 = vlaneseq
    %v3596 = vand.u32 %v3595, 127
    %vm3597 = vcmp.lt.s32.totalorder %v3596, 7
    %v3598 = vsel %vm3597, %v3472, -inf
    %v3599 = vsel %vm3597, %v3477, -inf
    %v3600 = vsel %vm3597, %v3482, -inf
    %v3601 = vsel %vm3597, %v3487, -inf
    %v3602 = vsel %vm3597, %v3492, -inf
    %v3603 = vsel %vm3597, %v3497, -inf
    %v3604 = vsel %vm3597, %v3502, -inf
    %v3605 = vsel %vm3597, %v3507, -inf
    %v3606 = vsel %vm3597, %v3512, -inf
    %v3607 = vsel %vm3597, %v3517, -inf
    %v3608 = vsel %vm3597, %v3522, -inf
    %v3609 = vsel %vm3597, %v3527, -inf
    %v3610 = vsel %vm3597, %v3532, -inf
    %v3611 = vsel %vm3597, %v3537, -inf
    %v3612 = vsel %vm3597, %v3542, -inf
    %v3613 = vsel %vm3597, %v3547, -inf
    %v3614 = vsel %vm3597, %v3552, -inf
    %v3615 = vsel %vm3597, %v3557, -inf
    %v3616 = vsel %vm3597, %v3562, -inf
    %v3617 = vsel %vm3597, %v3567, -inf
    %v3618 = vsel %vm3597, %v3572, -inf
    %v3619 = vsel %vm3597, %v3577, -inf
    %v3620 = vsel %vm3597, %v3582, -inf
    %v3621 = vsel %vm3597, %v3587, -inf
    %v3622 = vsel %vm3597, %v3592, -inf
    %3623 = vmax.xlane.f32.xlu0 %v3598
    %v3624 = vpop.xlane.xlu0 %3623
    %3625 = vmax.xlane.f32.xlu0 %v3599
    %v3626 = vpop.xlane.xlu0 %3625
    %3627 = vmax.xlane.f32.xlu0 %v3600
    %v3628 = vpop.xlane.xlu0 %3627
    %3629 = vmax.xlane.f32.xlu0 %v3601
    %v3630 = vpop.xlane.xlu0 %3629
    %3631 = vmax.xlane.f32.xlu0 %v3602
    %v3632 = vpop.xlane.xlu0 %3631
    %3633 = vmax.xlane.f32.xlu0 %v3603
    %v3634 = vpop.xlane.xlu0 %3633
    %3635 = vmax.xlane.f32.xlu0 %v3604
    %v3636 = vpop.xlane.xlu0 %3635
    %3637 = vmax.xlane.f32.xlu0 %v3605
    %v3638 = vpop.xlane.xlu0 %3637
    %3639 = vmax.xlane.f32.xlu0 %v3606
    %v3640 = vpop.xlane.xlu0 %3639
    %3641 = vmax.xlane.f32.xlu0 %v3607
    %v3642 = vpop.xlane.xlu0 %3641
    %3643 = vmax.xlane.f32.xlu0 %v3608
    %v3644 = vpop.xlane.xlu0 %3643
    %3645 = vmax.xlane.f32.xlu0 %v3609
    %v3646 = vpop.xlane.xlu0 %3645
    %3647 = vmax.xlane.f32.xlu0 %v3610
    %v3648 = vpop.xlane.xlu0 %3647
    %3649 = vmax.xlane.f32.xlu0 %v3611
    %v3650 = vpop.xlane.xlu0 %3649
    %3651 = vmax.xlane.f32.xlu0 %v3612
    %v3652 = vpop.xlane.xlu0 %3651
    %3653 = vmax.xlane.f32.xlu0 %v3613
    %v3654 = vpop.xlane.xlu0 %3653
    %3655 = vmax.xlane.f32.xlu0 %v3614
    %v3656 = vpop.xlane.xlu0 %3655
    %3657 = vmax.xlane.f32.xlu0 %v3615
    %v3658 = vpop.xlane.xlu0 %3657
    %3659 = vmax.xlane.f32.xlu0 %v3616
    %v3660 = vpop.xlane.xlu0 %3659
    %3661 = vmax.xlane.f32.xlu0 %v3617
    %v3662 = vpop.xlane.xlu0 %3661
    %3663 = vmax.xlane.f32.xlu0 %v3618
    %v3664 = vpop.xlane.xlu0 %3663
    %3665 = vmax.xlane.f32.xlu0 %v3619
    %v3666 = vpop.xlane.xlu0 %3665
    %3667 = vmax.xlane.f32.xlu0 %v3620
    %v3668 = vpop.xlane.xlu0 %3667
    %3669 = vmax.xlane.f32.xlu0 %v3621
    %v3670 = vpop.xlane.xlu0 %3669
    %3671 = vmax.xlane.f32.xlu0 %v3622
    %v3672 = vpop.xlane.xlu0 %3671
    %v3673 = vsub.f32 %v3598, %v3624
    %v3674 = vsub.f32 %v3599, %v3626
    %v3675 = vsub.f32 %v3600, %v3628
    %v3676 = vsub.f32 %v3601, %v3630
    %v3677 = vsub.f32 %v3602, %v3632
    %v3678 = vsub.f32 %v3603, %v3634
    %v3679 = vsub.f32 %v3604, %v3636
    %v3680 = vsub.f32 %v3605, %v3638
    %v3681 = vsub.f32 %v3606, %v3640
    %v3682 = vsub.f32 %v3607, %v3642
    %v3683 = vsub.f32 %v3608, %v3644
    %v3684 = vsub.f32 %v3609, %v3646
    %v3685 = vsub.f32 %v3610, %v3648
    %v3686 = vsub.f32 %v3611, %v3650
    %v3687 = vsub.f32 %v3612, %v3652
    %v3688 = vsub.f32 %v3613, %v3654
    %v3689 = vsub.f32 %v3614, %v3656
    %v3690 = vsub.f32 %v3615, %v3658
    %v3691 = vsub.f32 %v3616, %v3660
    %v3692 = vsub.f32 %v3617, %v3662
    %v3693 = vsub.f32 %v3618, %v3664
    %v3694 = vsub.f32 %v3619, %v3666
    %v3695 = vsub.f32 %v3620, %v3668
    %v3696 = vsub.f32 %v3621, %v3670
    %v3697 = vsub.f32 %v3622, %v3672
    %v3698 = vmul.f32 %v3673, 1.442695
    %v3699 = vpow.pop %v3698
    %v3700 = vmul.f32 %v3674, 1.442695
    %v3701 = vpow.pop %v3700
    %v3702 = vmul.f32 %v3675, 1.442695
    %v3703 = vpow.pop %v3702
    %v3704 = vmul.f32 %v3676, 1.442695
    %v3705 = vpow.pop %v3704
    %v3706 = vmul.f32 %v3677, 1.442695
    %v3707 = vpow.pop %v3706
    %v3708 = vmul.f32 %v3678, 1.442695
    %v3709 = vpow.pop %v3708
    %v3710 = vmul.f32 %v3679, 1.442695
    %v3711 = vpow.pop %v3710
    %v3712 = vmul.f32 %v3680, 1.442695
    %v3713 = vpow.pop %v3712
    %v3714 = vmul.f32 %v3681, 1.442695
    %v3715 = vpow.pop %v3714
    %v3716 = vmul.f32 %v3682, 1.442695
    %v3717 = vpow.pop %v3716
    %v3718 = vmul.f32 %v3683, 1.442695
    %v3719 = vpow.pop %v3718
    %v3720 = vmul.f32 %v3684, 1.442695
    %v3721 = vpow.pop %v3720
    %v3722 = vmul.f32 %v3685, 1.442695
    %v3723 = vpow.pop %v3722
    %v3724 = vmul.f32 %v3686, 1.442695
    %v3725 = vpow.pop %v3724
    %v3726 = vmul.f32 %v3687, 1.442695
    %v3727 = vpow.pop %v3726
    %v3728 = vmul.f32 %v3688, 1.442695
    %v3729 = vpow.pop %v3728
    %v3730 = vmul.f32 %v3689, 1.442695
    %v3731 = vpow.pop %v3730
    %v3732 = vmul.f32 %v3690, 1.442695
    %v3733 = vpow.pop %v3732
    %v3734 = vmul.f32 %v3691, 1.442695
    %v3735 = vpow.pop %v3734
    %v3736 = vmul.f32 %v3692, 1.442695
    %v3737 = vpow.pop %v3736
    %v3738 = vmul.f32 %v3693, 1.442695
    %v3739 = vpow.pop %v3738
    %v3740 = vmul.f32 %v3694, 1.442695
    %v3741 = vpow.pop %v3740
    %v3742 = vmul.f32 %v3695, 1.442695
    %v3743 = vpow.pop %v3742
    %v3744 = vmul.f32 %v3696, 1.442695
    %v3745 = vpow.pop %v3744
    %v3746 = vmul.f32 %v3697, 1.442695
    %v3747 = vpow.pop %v3746
    %3748 = vadd.xlane.f32.xlu0 %v3699
    %v3749 = vpop.xlane.xlu0 %3748
    %3750 = vadd.xlane.f32.xlu0 %v3701
    %v3751 = vpop.xlane.xlu0 %3750
    %3752 = vadd.xlane.f32.xlu0 %v3703
    %v3753 = vpop.xlane.xlu0 %3752
    %3754 = vadd.xlane.f32.xlu0 %v3705
    %v3755 = vpop.xlane.xlu0 %3754
    %3756 = vadd.xlane.f32.xlu0 %v3707
    %v3757 = vpop.xlane.xlu0 %3756
    %3758 = vadd.xlane.f32.xlu0 %v3709
    %v3759 = vpop.xlane.xlu0 %3758
    %3760 = vadd.xlane.f32.xlu0 %v3711
    %v3761 = vpop.xlane.xlu0 %3760
    %3762 = vadd.xlane.f32.xlu0 %v3713
    %v3763 = vpop.xlane.xlu0 %3762
    %3764 = vadd.xlane.f32.xlu0 %v3715
    %v3765 = vpop.xlane.xlu0 %3764
    %3766 = vadd.xlane.f32.xlu0 %v3717
    %v3767 = vpop.xlane.xlu0 %3766
    %3768 = vadd.xlane.f32.xlu0 %v3719
    %v3769 = vpop.xlane.xlu0 %3768
    %3770 = vadd.xlane.f32.xlu0 %v3721
    %v3771 = vpop.xlane.xlu0 %3770
    %3772 = vadd.xlane.f32.xlu0 %v3723
    %v3773 = vpop.xlane.xlu0 %3772
    %3774 = vadd.xlane.f32.xlu0 %v3725
    %v3775 = vpop.xlane.xlu0 %3774
    %3776 = vadd.xlane.f32.xlu0 %v3727
    %v3777 = vpop.xlane.xlu0 %3776
    %3778 = vadd.xlane.f32.xlu0 %v3729
    %v3779 = vpop.xlane.xlu0 %3778
    %3780 = vadd.xlane.f32.xlu0 %v3731
    %v3781 = vpop.xlane.xlu0 %3780
    %3782 = vadd.xlane.f32.xlu0 %v3733
    %v3783 = vpop.xlane.xlu0 %3782
    %3784 = vadd.xlane.f32.xlu0 %v3735
    %v3785 = vpop.xlane.xlu0 %3784
    %3786 = vadd.xlane.f32.xlu0 %v3737
    %v3787 = vpop.xlane.xlu0 %3786
    %3788 = vadd.xlane.f32.xlu0 %v3739
    %v3789 = vpop.xlane.xlu0 %3788
    %3790 = vadd.xlane.f32.xlu0 %v3741
    %v3791 = vpop.xlane.xlu0 %3790
    %3792 = vadd.xlane.f32.xlu0 %v3743
    %v3793 = vpop.xlane.xlu0 %3792
    %3794 = vadd.xlane.f32.xlu0 %v3745
    %v3795 = vpop.xlane.xlu0 %3794
    %3796 = vadd.xlane.f32.xlu0 %v3747
    %v3797 = vpop.xlane.xlu0 %3796
    %v3798 = vlog2.pop %v3749
    %v3799 = vmul.f32 %v3798, 0.6931472
    %v3800 = vlog2.pop %v3751
    %v3801 = vmul.f32 %v3800, 0.6931472
    %v3802 = vlog2.pop %v3753
    %v3803 = vmul.f32 %v3802, 0.6931472
    %v3804 = vlog2.pop %v3755
    %v3805 = vmul.f32 %v3804, 0.6931472
    %v3806 = vlog2.pop %v3757
    %v3807 = vmul.f32 %v3806, 0.6931472
    %v3808 = vlog2.pop %v3759
    %v3809 = vmul.f32 %v3808, 0.6931472
    %v3810 = vlog2.pop %v3761
    %v3811 = vmul.f32 %v3810, 0.6931472
    %v3812 = vlog2.pop %v3763
    %v3813 = vmul.f32 %v3812, 0.6931472
    %v3814 = vlog2.pop %v3765
    %v3815 = vmul.f32 %v3814, 0.6931472
    %v3816 = vlog2.pop %v3767
    %v3817 = vmul.f32 %v3816, 0.6931472
    %v3818 = vlog2.pop %v3769
    %v3819 = vmul.f32 %v3818, 0.6931472
    %v3820 = vlog2.pop %v3771
    %v3821 = vmul.f32 %v3820, 0.6931472
    %v3822 = vlog2.pop %v3773
    %v3823 = vmul.f32 %v3822, 0.6931472
    %v3824 = vlog2.pop %v3775
    %v3825 = vmul.f32 %v3824, 0.6931472
    %v3826 = vlog2.pop %v3777
    %v3827 = vmul.f32 %v3826, 0.6931472
    %v3828 = vlog2.pop %v3779
    %v3829 = vmul.f32 %v3828, 0.6931472
    %v3830 = vlog2.pop %v3781
    %v3831 = vmul.f32 %v3830, 0.6931472
    %v3832 = vlog2.pop %v3783
    %v3833 = vmul.f32 %v3832, 0.6931472
    %v3834 = vlog2.pop %v3785
    %v3835 = vmul.f32 %v3834, 0.6931472
    %v3836 = vlog2.pop %v3787
    %v3837 = vmul.f32 %v3836, 0.6931472
    %v3838 = vlog2.pop %v3789
    %v3839 = vmul.f32 %v3838, 0.6931472
    %v3840 = vlog2.pop %v3791
    %v3841 = vmul.f32 %v3840, 0.6931472
    %v3842 = vlog2.pop %v3793
    %v3843 = vmul.f32 %v3842, 0.6931472
    %v3844 = vlog2.pop %v3795
    %v3845 = vmul.f32 %v3844, 0.6931472
    %v3846 = vlog2.pop %v3797
    %v3847 = vmul.f32 %v3846, 0.6931472
    %v3848 = vsub.f32 %v3673, %v3799
    %v3849 = vsub.f32 %v3674, %v3801
    %v3850 = vsub.f32 %v3675, %v3803
    %v3851 = vsub.f32 %v3676, %v3805
    %v3852 = vsub.f32 %v3677, %v3807
    %v3853 = vsub.f32 %v3678, %v3809
    %v3854 = vsub.f32 %v3679, %v3811
    %v3855 = vsub.f32 %v3680, %v3813
    %v3856 = vsub.f32 %v3681, %v3815
    %v3857 = vsub.f32 %v3682, %v3817
    %v3858 = vsub.f32 %v3683, %v3819
    %v3859 = vsub.f32 %v3684, %v3821
    %v3860 = vsub.f32 %v3685, %v3823
    %v3861 = vsub.f32 %v3686, %v3825
    %v3862 = vsub.f32 %v3687, %v3827
    %v3863 = vsub.f32 %v3688, %v3829
    %v3864 = vsub.f32 %v3689, %v3831
    %v3865 = vsub.f32 %v3690, %v3833
    %v3866 = vsub.f32 %v3691, %v3835
    %v3867 = vsub.f32 %v3692, %v3837
    %v3868 = vsub.f32 %v3693, %v3839
    %v3869 = vsub.f32 %v3694, %v3841
    %v3870 = vsub.f32 %v3695, %v3843
    %v3871 = vsub.f32 %v3696, %v3845
    %v3872 = vsub.f32 %v3697, %v3847
    %v3873 = vsel %vm3597, %v3848, 0.0
    %v3874 = vsel %vm3597, %v3849, 0.0
    %v3875 = vsel %vm3597, %v3850, 0.0
    %v3876 = vsel %vm3597, %v3851, 0.0
    %v3877 = vsel %vm3597, %v3852, 0.0
    %v3878 = vsel %vm3597, %v3853, 0.0
    %v3879 = vsel %vm3597, %v3854, 0.0
    %v3880 = vsel %vm3597, %v3855, 0.0
    %v3881 = vsel %vm3597, %v3856, 0.0
    %v3882 = vsel %vm3597, %v3857, 0.0
    %v3883 = vsel %vm3597, %v3858, 0.0
    %v3884 = vsel %vm3597, %v3859, 0.0
    %v3885 = vsel %vm3597, %v3860, 0.0
    %v3886 = vsel %vm3597, %v3861, 0.0
    %v3887 = vsel %vm3597, %v3862, 0.0
    %v3888 = vsel %vm3597, %v3863, 0.0
    %v3889 = vsel %vm3597, %v3864, 0.0
    %v3890 = vsel %vm3597, %v3865, 0.0
    %v3891 = vsel %vm3597, %v3866, 0.0
    %v3892 = vsel %vm3597, %v3867, 0.0
    %v3893 = vsel %vm3597, %v3868, 0.0
    %v3894 = vsel %vm3597, %v3869, 0.0
    %v3895 = vsel %vm3597, %v3870, 0.0
    %v3896 = vsel %vm3597, %v3871, 0.0
    %v3897 = vsel %vm3597, %v3872, 0.0
    %3898 = vst [vmem:[%s4] sm:$0xff] %v3873
    %3899 = vst [vmem:[%s4 + $0x8] sm:$0xff] %v3874
    %3900 = vst [vmem:[%s4 + $0x10] sm:$0xff] %v3875
    %3901 = vst [vmem:[%s4 + $0x18] sm:$0xff] %v3876
    %3902 = vst [vmem:[%s4 + $0x20] sm:$0xff] %v3877
    %3903 = vst [vmem:[%s4 + $0x28] sm:$0xff] %v3878
    %3904 = vst [vmem:[%s4 + $0x30] sm:$0xff] %v3879
    %3905 = vst [vmem:[%s4 + $0x38] sm:$0xff] %v3880
    %3906 = vst [vmem:[%s4 + $0x40] sm:$0xff] %v3881
    %3907 = vst [vmem:[%s4 + $0x48] sm:$0xff] %v3882
    %3908 = vst [vmem:[%s4 + $0x50] sm:$0xff] %v3883
    %3909 = vst [vmem:[%s4 + $0x58] sm:$0xff] %v3884
    %3910 = vst [vmem:[%s4 + $0x60] sm:$0xff] %v3885
    %3911 = vst [vmem:[%s4 + $0x68] sm:$0xff] %v3886
    %3912 = vst [vmem:[%s4 + $0x70] sm:$0xff] %v3887
    %3913 = vst [vmem:[%s4 + $0x78] sm:$0xff] %v3888
    %3914 = vst [vmem:[%s4 + $0x80] sm:$0xff] %v3889
    %3915 = vst [vmem:[%s4 + $0x88] sm:$0xff] %v3890
    %3916 = vst [vmem:[%s4 + $0x90] sm:$0xff] %v3891
    %3917 = vst [vmem:[%s4 + $0x98] sm:$0xff] %v3892
    %3918 = vst [vmem:[%s4 + $0xa0] sm:$0xff] %v3893
    %3919 = vst [vmem:[%s4 + $0xa8] sm:$0xff] %v3894
    %3920 = vst [vmem:[%s4 + $0xb0] sm:$0xff] %v3895
    %3921 = vst [vmem:[%s4 + $0xb8] sm:$0xff] %v3896
    %3922 = vst [vmem:[%s4 + $0xc0] sm:$0xff] %v3897
    // Predicated region
    $region22: #{gnn_forward_fused.1} parent=1 // pred_check
      _
    $region23: #{gnn_forward_fused.1} parent=1 // pred_check_branch
      %3924 = sbr.rel (0) target = $region25
    $region24: #{gnn_forward_fused.1} parent=1 // pred_region
      _
    $region25: #{gnn_forward_fused.1} parent=1 // pred_fallthru
      _
    // Predicated region
    $region26: #{gnn_forward_fused.1} parent=1 // pred_check
      _
    $region27: #{gnn_forward_fused.1} parent=1 // pred_check_branch
      %3926 = sbr.rel (0) target = $region29
    $region28: #{gnn_forward_fused.1} parent=1 // pred_region
      _
    $region29: #{gnn_forward_fused.1} parent=1 // pred_fallthru
      _
    %3927 = vsyncpa [#allocation3], 1

</llo_original>
